<compile_context>
chip_gen: v7x
topology: tpu7x:2x2x1
jax: 0.10.0
libtpu: 0.0.40
codegen_flags: <defaults>
</compile_context>

<pallas_src>
import functools

import jax
import jax.numpy as jnp
from jax.experimental import pallas as pl
from jax.experimental.pallas import tpu as pltpu

MM_DTYPE = jnp.bfloat16    # MXU operand dtype (accumulation stays f32 everywhere)
ACT_DTYPE = jnp.bfloat16   # activations crossing HBM between the 3 fused kernels
LN_EPS = 1e-5              # PyTorch LayerNorm default


def _tpu_vmem_bytes():
    try:
        return int(pltpu.get_tpu_info().vmem_capacity_bytes)
    except Exception:
        return 64 << 20    # conservative fallback (v7x per-TC VMEM)


_VMEM_CAP = _tpu_vmem_bytes()
_ROW_TILE_CAP = 512 if _VMEM_CAP > (64 << 20) else 256        # v5e/v6e: 512, v7x: 256
_VMEM_LIMIT = int(min(96 << 20, (_VMEM_CAP * 3) // 4))        # leave headroom below physical


def _pick_tile(n, cap):
    """Largest preferred tile <= cap that divides n; fall back to the full dimension."""
    for t in (512, 256, 128, 64, 32, 16, 8):
        if t <= cap and t <= n and n % t == 0:
            return t
    return n


# ---------------------------------------------------------------------------
# In-kernel helpers
# ---------------------------------------------------------------------------

def _layernorm(z, g, b):
    # One-pass stats: mean and mean-of-squares.
    mu = jnp.mean(z, axis=-1, keepdims=True)
    ms = jnp.mean(z * z, axis=-1, keepdims=True)
    var = ms - mu * mu
    return (z - mu) * jax.lax.rsqrt(var + LN_EPS) * g + b


def _mha(q, k, v, num_heads):
    # q: (L, E) f32, already pre-scaled (1/sqrt(hd) folded into Wq/bq); k, v: (S, E) f32.
    # Per-head slices are cast straight to bf16 for the MXU; per-head results are concatenated
    # in vregs so the caller performs a single lane-dense (L, E) store.
    # TODO(synk): with many heads, move heads onto an fori_loop/grid axis to bound vreg live set.
    E = q.shape[1]
    hd = E // num_heads
    dn = (((1,), (1,)), ((), ()))  # contract last dims of both operands (no explicit k.T)
    outs = []
    for h in range(num_heads):
        sl = slice(h * hd, (h + 1) * hd)
        qh = q[:, sl].astype(MM_DTYPE)
        kh = k[:, sl].astype(MM_DTYPE)
        vh = v[:, sl].astype(MM_DTYPE)
        s = jax.lax.dot_general(qh, kh, dn, preferred_element_type=jnp.float32)   # (L, S)
        m = jnp.max(s, axis=-1, keepdims=True)
        p = jnp.exp(s - m)
        p = p * pl.reciprocal(jnp.sum(p, axis=-1, keepdims=True), approx=True)
        outs.append(jnp.dot(p.astype(MM_DTYPE), vh, preferred_element_type=jnp.float32))
    return jnp.concatenate(outs, axis=-1)   # (L, E) f32


# ---------------------------------------------------------------------------
# Kernels
# ---------------------------------------------------------------------------

def _self_attn_block_kernel(x_ref, wqkv_ref, bqkv_ref, wo_ref, bo_ref, g_ref, beta_ref,
                            o_ref, *, num_heads, e):
    # o = LayerNorm(x + OutProj(MHA(QKVProj(x))))   -- one batch element per grid step.
    x = x_ref[...]                                                       # (L, E)
    qkv = jnp.dot(x.astype(MM_DTYPE), wqkv_ref[...],
                  preferred_element_type=jnp.float32) + bqkv_ref[...]    # (L, 3E) f32
    attn = _mha(qkv[:, :e], qkv[:, e:2 * e], qkv[:, 2 * e:], num_heads)  # (L, E) f32
    y = jnp.dot(attn.astype(MM_DTYPE), wo_ref[...],
                preferred_element_type=jnp.float32) + bo_ref[...]
    z = y + x.astype(jnp.float32)
    o_ref[...] = _layernorm(z, g_ref[...], beta_ref[...]).astype(o_ref.dtype)


def _cross_attn_block_kernel(x_ref, enc_ref, wq_ref, bq_ref, wkv_ref, bkv_ref,
                             wo_ref, bo_ref, g_ref, beta_ref, o_ref, *, num_heads, e):
    # o = LayerNorm(x + OutProj(MHA(QProj(x), KVProj(enc))))   -- one batch element per grid step.
    x = x_ref[...]                                                       # (L, E)
    enc = enc_ref[...]                                                   # (S, E)
    q = jnp.dot(x.astype(MM_DTYPE), wq_ref[...],
                preferred_element_type=jnp.float32) + bq_ref[...]        # (L, E) f32
    kv = jnp.dot(enc.astype(MM_DTYPE), wkv_ref[...],
                 preferred_element_type=jnp.float32) + bkv_ref[...]      # (S, 2E) f32
    attn = _mha(q, kv[:, :e], kv[:, e:], num_heads)
    y = jnp.dot(attn.astype(MM_DTYPE), wo_ref[...],
                preferred_element_type=jnp.float32) + bo_ref[...]
    z = y + x.astype(jnp.float32)
    o_ref[...] = _layernorm(z, g_ref[...], beta_ref[...]).astype(o_ref.dtype)


def _ffn_add_ln_kernel(x_ref, w1_ref, b1_ref, w2_ref, b2_ref, g_ref, beta_ref,
                       o_ref, acc_ref):
    # o = LayerNorm(x + relu(x @ w1 + b1) @ w2 + b2); hidden (F) axis tiled on grid axis 1.
    fi = pl.program_id(1)

    @pl.when(fi == 0)
    def _():
        acc_ref[...] = jnp.zeros_like(acc_ref)

    x = x_ref[...]
    h = jnp.dot(x.astype(MM_DTYPE), w1_ref[...],
                preferred_element_type=jnp.float32) + b1_ref[...]
    h = jnp.maximum(h, 0.0)
    acc_ref[...] += jnp.dot(h.astype(MM_DTYPE), w2_ref[...],
                            preferred_element_type=jnp.float32)

    @pl.when(fi == pl.num_programs(1) - 1)
    def _():
        z = acc_ref[...] + b2_ref[...] + x.astype(jnp.float32)
        o_ref[...] = _layernorm(z, g_ref[...], beta_ref[...]).astype(o_ref.dtype)


# ---------------------------------------------------------------------------
# pallas_call wrappers
# ---------------------------------------------------------------------------

def self_attn_block(xb, p, num_heads, n_batch, seq_len):
    # xb: (N*L, E) batch-major rows -> LayerNorm'd block output (N*L, E) in ACT_DTYPE.
    e = xb.shape[1]
    kern = functools.partial(_self_attn_block_kernel, num_heads=num_heads, e=e)
    return pl.pallas_call(
        kern,
        out_shape=jax.ShapeDtypeStruct((n_batch * seq_len, e), ACT_DTYPE),
        grid=(n_batch,),
        in_specs=[pl.BlockSpec((seq_len, e), lambda n: (n, 0)),
                  pl.BlockSpec((e, 3 * e), lambda n: (0, 0)),
                  pl.BlockSpec((1, 3 * e), lambda n: (0, 0)),
                  pl.BlockSpec((e, e), lambda n: (0, 0)),
                  pl.BlockSpec((1, e), lambda n: (0, 0)),
                  pl.BlockSpec((1, e), lambda n: (0, 0)),
                  pl.BlockSpec((1, e), lambda n: (0, 0))],
        out_specs=pl.BlockSpec((seq_len, e), lambda n: (n, 0)),
        compiler_params=pltpu.CompilerParams(
            dimension_semantics=("parallel",), vmem_limit_bytes=_VMEM_LIMIT),
    )(xb, p["sa_wqkv"], p["sa_bqkv"], p["sa_wo"], p["sa_bo"], p["ln1_g"], p["ln1_b"])


def cross_attn_block(xb, eb, p, num_heads, n_batch, q_len, kv_len):
    # xb: (N*L, E), eb: (N*S, E) batch-major rows -> (N*L, E) in ACT_DTYPE.
    e = xb.shape[1]
    kern = functools.partial(_cross_attn_block_kernel, num_heads=num_heads, e=e)
    return pl.pallas_call(
        kern,
        out_shape=jax.ShapeDtypeStruct((n_batch * q_len, e), ACT_DTYPE),
        grid=(n_batch,),
        in_specs=[pl.BlockSpec((q_len, e), lambda n: (n, 0)),
                  pl.BlockSpec((kv_len, e), lambda n: (n, 0)),
                  pl.BlockSpec((e, e), lambda n: (0, 0)),
                  pl.BlockSpec((1, e), lambda n: (0, 0)),
                  pl.BlockSpec((e, 2 * e), lambda n: (0, 0)),
                  pl.BlockSpec((1, 2 * e), lambda n: (0, 0)),
                  pl.BlockSpec((e, e), lambda n: (0, 0)),
                  pl.BlockSpec((1, e), lambda n: (0, 0)),
                  pl.BlockSpec((1, e), lambda n: (0, 0)),
                  pl.BlockSpec((1, e), lambda n: (0, 0))],
        out_specs=pl.BlockSpec((q_len, e), lambda n: (n, 0)),
        compiler_params=pltpu.CompilerParams(
            dimension_semantics=("parallel",), vmem_limit_bytes=_VMEM_LIMIT),
    )(xb, eb, p["ca_wq"], p["ca_bq"], p["ca_wkv"], p["ca_bkv"],
      p["ca_wo"], p["ca_bo"], p["ln2_g"], p["ln2_b"])


def ffn_add_layernorm(x, w1, b1, w2, b2, gamma, beta, out_dtype):
    # LayerNorm(x + relu(x @ w1 + b1) @ w2 + b2): w1 (E, F) bf16, w2 (F, E) bf16.
    M, E = x.shape
    F = w1.shape[1]
    tm = _pick_tile(M, _ROW_TILE_CAP)
    tf = _pick_tile(F, 512)   # F-axis tiling keeps weight tiles + double buffers bounded
    return pl.pallas_call(
        _ffn_add_ln_kernel,
        out_shape=jax.ShapeDtypeStruct((M, E), out_dtype),
        grid=(M // tm, F // tf),
        in_specs=[pl.BlockSpec((tm, E), lambda i, f: (i, 0)),
                  pl.BlockSpec((E, tf), lambda i, f: (0, f)),
                  pl.BlockSpec((1, tf), lambda i, f: (0, f)),
                  pl.BlockSpec((tf, E), lambda i, f: (f, 0)),
                  pl.BlockSpec((1, E), lambda i, f: (0, 0)),
                  pl.BlockSpec((1, E), lambda i, f: (0, 0)),
                  pl.BlockSpec((1, E), lambda i, f: (0, 0))],
        out_specs=pl.BlockSpec((tm, E), lambda i, f: (i, 0)),
        scratch_shapes=[pltpu.VMEM((tm, E), jnp.float32)],
        compiler_params=pltpu.CompilerParams(
            dimension_semantics=("parallel", "arbitrary"),
            vmem_limit_bytes=_VMEM_LIMIT),
    )(x, w1, b1, w2, b2, gamma, beta)


# ---------------------------------------------------------------------------
# DecoderLayer forward
# ---------------------------------------------------------------------------

def decoder_layer(params, x, encoder_output, num_heads):
    L, N, E = x.shape
    S = encoder_output.shape[0]

    # One layout change in, one out: batch-major rows (row = n*L + l) so every grid step
    # sees a contiguous (L, E)/(S, E) tile.  NOTE: L and S must be multiples of 8.
    xb = x.transpose(1, 0, 2).reshape(N * L, E)
    eb = encoder_output.transpose(1, 0, 2).reshape(N * S, E)

    # --- self-attention block: QKV proj + MHA + out-proj + residual + LN, one kernel ---
    x1 = self_attn_block(xb, params, num_heads, N, L)                     # (N*L, E) bf16

    # --- cross-attention block: Q/KV proj + MHA + out-proj + residual + LN, one kernel ---
    x2 = cross_attn_block(x1, eb, params, num_heads, N, L, S)             # (N*L, E) bf16

    # --- feed-forward block: matmul + relu + matmul + residual + LN, one kernel ---
    x3 = ffn_add_layernorm(x2, params["ff_w1t"], params["ff_b1"],
                           params["ff_w2t"], params["ff_b2"],
                           params["ln3_g"], params["ln3_b"], out_dtype=x.dtype)

    return x3.reshape(N, L, E).transpose(1, 0, 2)


# ---------------------------------------------------------------------------
# Parameters
# ---------------------------------------------------------------------------

def init_torch_params(key, d_model, num_heads, ff_dim):
    # PyTorch-layout parameters (nn.MultiheadAttention / nn.Linear conventions).
    ks = jax.random.split(key, 12)
    s = 0.02
    return {
        "sa_in_w": jax.random.normal(ks[0], (3 * d_model, d_model), jnp.float32) * s,
        "sa_in_b": jax.random.normal(ks[1], (3 * d_model,), jnp.float32) * s,
        "sa_out_w": jax.random.normal(ks[2], (d_model, d_model), jnp.float32) * s,
        "sa_out_b": jax.random.normal(ks[3], (d_model,), jnp.float32) * s,
        "ca_in_w": jax.random.normal(ks[4], (3 * d_model, d_model), jnp.float32) * s,
        "ca_in_b": jax.random.normal(ks[5], (3 * d_model,), jnp.float32) * s,
        "ca_out_w": jax.random.normal(ks[6], (d_model, d_model), jnp.float32) * s,
        "ca_out_b": jax.random.normal(ks[7], (d_model,), jnp.float32) * s,
        "ff_w1": jax.random.normal(ks[8], (ff_dim, d_model), jnp.float32) * s,
        "ff_b1": jax.random.normal(ks[9], (ff_dim,), jnp.float32) * s,
        "ff_w2": jax.random.normal(ks[10], (d_model, ff_dim), jnp.float32) * s,
        "ff_b2": jax.random.normal(ks[11], (d_model,), jnp.float32) * s,
        "ln1_g": jnp.ones((d_model,), jnp.float32),
        "ln1_b": jnp.zeros((d_model,), jnp.float32),
        "ln2_g": jnp.ones((d_model,), jnp.float32),
        "ln2_b": jnp.zeros((d_model,), jnp.float32),
        "ln3_g": jnp.ones((d_model,), jnp.float32),
        "ln3_b": jnp.zeros((d_model,), jnp.float32),
    }


def prepare_params(raw, d_model, num_heads):
    # One-time host-side prep: transpose weights to (in, out), fuse QKV, fold the
    # 1/sqrt(head_dim) attention scale into Wq / bq, and pre-cast weight matrices to bf16.
    E = d_model
    assert E % num_heads == 0
    scale = 1.0 / float(E // num_heads) ** 0.5
    p = {}

    w, b = raw["sa_in_w"], raw["sa_in_b"]                 # (3E, E) rows = [Wq; Wk; Wv]
    w = jnp.concatenate([w[:E] * scale, w[E:]], axis=0)
    b = jnp.concatenate([b[:E] * scale, b[E:]])
    p["sa_wqkv"] = w.T.astype(MM_DTYPE)                   # (E, 3E) bf16
    p["sa_bqkv"] = b.reshape(1, 3 * E)
    p["sa_wo"] = raw["sa_out_w"].T.astype(MM_DTYPE)       # (E, E) bf16
    p["sa_bo"] = raw["sa_out_b"].reshape(1, E)

    w, b = raw["ca_in_w"], raw["ca_in_b"]
    p["ca_wq"] = (w[:E] * scale).T.astype(MM_DTYPE)       # (E, E) bf16
    p["ca_bq"] = (b[:E] * scale).reshape(1, E)
    p["ca_wkv"] = w[E:].T.astype(MM_DTYPE)                # (E, 2E) bf16
    p["ca_bkv"] = b[E:].reshape(1, 2 * E)
    p["ca_wo"] = raw["ca_out_w"].T.astype(MM_DTYPE)
    p["ca_bo"] = raw["ca_out_b"].reshape(1, E)

    p["ff_w1t"] = raw["ff_w1"].T.astype(MM_DTYPE)         # (E, F) bf16
    p["ff_b1"] = raw["ff_b1"].reshape(1, -1)
    p["ff_w2t"] = raw["ff_w2"].T.astype(MM_DTYPE)         # (F, E) bf16
    p["ff_b2"] = raw["ff_b2"].reshape(1, E)

    for k in ("ln1_g", "ln1_b", "ln2_g", "ln2_b", "ln3_g", "ln3_b"):
        p[k] = raw[k].reshape(1, E)
    return p


if __name__ == "__main__":
    d_model, num_heads, ff_dim = 32, 4, 64
    tgt_seq, src_seq, batch = 8, 8, 2

    key = jax.random.PRNGKey(0)
    kx, kenc, kp = jax.random.split(key, 3)
    x = jax.random.normal(kx, (tgt_seq, batch, d_model), jnp.float32)
    encoder_output = jax.random.normal(kenc, (src_seq, batch, d_model), jnp.float32)
    params = prepare_params(init_torch_params(kp, d_model, num_heads, ff_dim),
                            d_model, num_heads)

    fwd = jax.jit(functools.partial(decoder_layer, num_heads=num_heads))
    out = fwd(params, x, encoder_output)
    jax.block_until_ready(out)

    assert out.shape == (tgt_seq, batch, d_model)
    assert bool(jnp.all(jnp.isfinite(out)))
    print("KERNEL_OK")
</pallas_src>

<mosaic_0001>
module attributes {stable_mosaic.version = 11 : i64} {
  func.func @_cross_attn_block_kernel(%arg0: i32, %arg1: memref<8x32xbf16, #tpu.memory_space<vmem>>, %arg2: memref<8x32xf32, #tpu.memory_space<vmem>>, %arg3: memref<32x32xbf16, #tpu.memory_space<vmem>>, %arg4: memref<1x32xf32, #tpu.memory_space<vmem>>, %arg5: memref<32x64xbf16, #tpu.memory_space<vmem>>, %arg6: memref<1x64xf32, #tpu.memory_space<vmem>>, %arg7: memref<32x32xbf16, #tpu.memory_space<vmem>>, %arg8: memref<1x32xf32, #tpu.memory_space<vmem>>, %arg9: memref<1x32xf32, #tpu.memory_space<vmem>>, %arg10: memref<1x32xf32, #tpu.memory_space<vmem>>, %arg11: memref<8x32xbf16, #tpu.memory_space<vmem>>) attributes {dimension_semantics = [#tpu.dimension_semantics<parallel>], iteration_bounds = array<i64: 2>, scalar_prefetch = 0 : i64, scratch_operands = 0 : i64, tpu.core_type = #tpu.core_type<tc>, window_params = [{transform_indices = @transform_0, window_bounds = array<i64: 8, 32>}, {transform_indices = @transform_1, window_bounds = array<i64: 8, 32>}, {pipeline_mode = #tpu.pipeline_mode<synchronous>, transform_indices = @transform_2, window_bounds = array<i64: 32, 32>}, {pipeline_mode = #tpu.pipeline_mode<synchronous>, transform_indices = @transform_3, window_bounds = array<i64: 1, 32>}, {pipeline_mode = #tpu.pipeline_mode<synchronous>, transform_indices = @transform_4, window_bounds = array<i64: 32, 64>}, {pipeline_mode = #tpu.pipeline_mode<synchronous>, transform_indices = @transform_5, window_bounds = array<i64: 1, 64>}, {pipeline_mode = #tpu.pipeline_mode<synchronous>, transform_indices = @transform_6, window_bounds = array<i64: 32, 32>}, {pipeline_mode = #tpu.pipeline_mode<synchronous>, transform_indices = @transform_7, window_bounds = array<i64: 1, 32>}, {pipeline_mode = #tpu.pipeline_mode<synchronous>, transform_indices = @transform_8, window_bounds = array<i64: 1, 32>}, {pipeline_mode = #tpu.pipeline_mode<synchronous>, transform_indices = @transform_9, window_bounds = array<i64: 1, 32>}, {transform_indices = @transform_10, window_bounds = array<i64: 8, 32>}]} {
    %c0 = arith.constant 0 : index
    %c0_0 = arith.constant 0 : index
    %0 = vector.load %arg1[%c0, %c0_0] : memref<8x32xbf16, #tpu.memory_space<vmem>>, vector<8x32xbf16>
    %c0_1 = arith.constant 0 : index
    %c0_2 = arith.constant 0 : index
    %1 = vector.load %arg2[%c0_1, %c0_2] : memref<8x32xf32, #tpu.memory_space<vmem>>, vector<8x32xf32>
    %c0_3 = arith.constant 0 : index
    %c0_4 = arith.constant 0 : index
    %2 = vector.load %arg3[%c0_3, %c0_4] : memref<32x32xbf16, #tpu.memory_space<vmem>>, vector<32x32xbf16>
    %cst = arith.constant dense<0.000000e+00> : vector<8x32xf32>
    %3 = tpu.matmul %0, %2, %cst {dimension_numbers = #tpu.dot_dimension_numbers<[1], [0], [0], [1], [0, 0, 1, 1], [], []>} : vector<8x32xbf16>, vector<32x32xbf16>, vector<8x32xf32> -> vector<8x32xf32>
    %c0_5 = arith.constant 0 : index
    %c0_6 = arith.constant 0 : index
    %4 = vector.load %arg4[%c0_5, %c0_6] : memref<1x32xf32, #tpu.memory_space<vmem>>, vector<1x32xf32>
    %5 = vector.broadcast %4 : vector<1x32xf32> to vector<8x32xf32>
    %6 = arith.addf %3, %5 : vector<8x32xf32>
    %7 = arith.truncf %1 : vector<8x32xf32> to vector<8x32xbf16>
    %c0_7 = arith.constant 0 : index
    %c0_8 = arith.constant 0 : index
    %8 = vector.load %arg5[%c0_7, %c0_8] : memref<32x64xbf16, #tpu.memory_space<vmem>>, vector<32x64xbf16>
    %cst_9 = arith.constant dense<0.000000e+00> : vector<8x64xf32>
    %9 = tpu.matmul %7, %8, %cst_9 {dimension_numbers = #tpu.dot_dimension_numbers<[1], [0], [0], [1], [0, 0, 1, 1], [], []>} : vector<8x32xbf16>, vector<32x64xbf16>, vector<8x64xf32> -> vector<8x64xf32>
    %c0_10 = arith.constant 0 : index
    %c0_11 = arith.constant 0 : index
    %10 = vector.load %arg6[%c0_10, %c0_11] : memref<1x64xf32, #tpu.memory_space<vmem>>, vector<1x64xf32>
    %11 = vector.broadcast %10 : vector<1x64xf32> to vector<8x64xf32>
    %12 = arith.addf %9, %11 : vector<8x64xf32>
    %13 = vector.extract_strided_slice %12 {offsets = [0, 0], sizes = [8, 32], strides = [1, 1]} : vector<8x64xf32> to vector<8x32xf32>
    %14 = vector.extract_strided_slice %12 {offsets = [0, 32], sizes = [8, 32], strides = [1, 1]} : vector<8x64xf32> to vector<8x32xf32>
    %15 = vector.extract_strided_slice %6 {offsets = [0, 0], sizes = [8, 8], strides = [1, 1]} : vector<8x32xf32> to vector<8x8xf32>
    %16 = arith.truncf %15 : vector<8x8xf32> to vector<8x8xbf16>
    %17 = vector.extract_strided_slice %13 {offsets = [0, 0], sizes = [8, 8], strides = [1, 1]} : vector<8x32xf32> to vector<8x8xf32>
    %18 = arith.truncf %17 : vector<8x8xf32> to vector<8x8xbf16>
    %19 = vector.extract_strided_slice %14 {offsets = [0, 0], sizes = [8, 8], strides = [1, 1]} : vector<8x32xf32> to vector<8x8xf32>
    %20 = arith.truncf %19 : vector<8x8xf32> to vector<8x8xbf16>
    %cst_12 = arith.constant dense<0.000000e+00> : vector<8x8xf32>
    %21 = tpu.matmul %16, %18, %cst_12 {dimension_numbers = #tpu.dot_dimension_numbers<[1], [1], [0], [0], [0, 0, 1, 0], [], []>} : vector<8x8xbf16>, vector<8x8xbf16>, vector<8x8xf32> -> vector<8x8xf32>
    %cst_13 = arith.constant dense<0xFF800000> : vector<8xf32>
    %22 = vector.multi_reduction <maximumf>, %21, %cst_13 [1] : vector<8x8xf32> to vector<8xf32>
    %23 = vector.shape_cast %22 : vector<8xf32> to vector<8x1xf32>
    %24 = vector.broadcast %23 : vector<8x1xf32> to vector<8x8xf32>
    %25 = arith.subf %21, %24 : vector<8x8xf32>
    %26 = math.exp %25 : vector<8x8xf32>
    %cst_14 = arith.constant dense<0.000000e+00> : vector<8xf32>
    %27 = vector.multi_reduction <add>, %26, %cst_14 [1] : vector<8x8xf32> to vector<8xf32>
    %28 = vector.shape_cast %27 : vector<8xf32> to vector<8x1xf32>
    %29 = tpu.reciprocal %28 {approx = true} : vector<8x1xf32> -> vector<8x1xf32>
    %30 = vector.broadcast %29 : vector<8x1xf32> to vector<8x8xf32>
    %31 = arith.mulf %26, %30 : vector<8x8xf32>
    %32 = arith.truncf %31 : vector<8x8xf32> to vector<8x8xbf16>
    %cst_15 = arith.constant dense<0.000000e+00> : vector<8x8xf32>
    %33 = tpu.matmul %32, %20, %cst_15 {dimension_numbers = #tpu.dot_dimension_numbers<[1], [0], [0], [1], [0, 0, 1, 1], [], []>} : vector<8x8xbf16>, vector<8x8xbf16>, vector<8x8xf32> -> vector<8x8xf32>
    %34 = vector.extract_strided_slice %6 {offsets = [0, 8], sizes = [8, 8], strides = [1, 1]} : vector<8x32xf32> to vector<8x8xf32>
    %35 = arith.truncf %34 : vector<8x8xf32> to vector<8x8xbf16>
    %36 = vector.extract_strided_slice %13 {offsets = [0, 8], sizes = [8, 8], strides = [1, 1]} : vector<8x32xf32> to vector<8x8xf32>
    %37 = arith.truncf %36 : vector<8x8xf32> to vector<8x8xbf16>
    %38 = vector.extract_strided_slice %14 {offsets = [0, 8], sizes = [8, 8], strides = [1, 1]} : vector<8x32xf32> to vector<8x8xf32>
    %39 = arith.truncf %38 : vector<8x8xf32> to vector<8x8xbf16>
    %cst_16 = arith.constant dense<0.000000e+00> : vector<8x8xf32>
    %40 = tpu.matmul %35, %37, %cst_16 {dimension_numbers = #tpu.dot_dimension_numbers<[1], [1], [0], [0], [0, 0, 1, 0], [], []>} : vector<8x8xbf16>, vector<8x8xbf16>, vector<8x8xf32> -> vector<8x8xf32>
    %cst_17 = arith.constant dense<0xFF800000> : vector<8xf32>
    %41 = vector.multi_reduction <maximumf>, %40, %cst_17 [1] : vector<8x8xf32> to vector<8xf32>
    %42 = vector.shape_cast %41 : vector<8xf32> to vector<8x1xf32>
    %43 = vector.broadcast %42 : vector<8x1xf32> to vector<8x8xf32>
    %44 = arith.subf %40, %43 : vector<8x8xf32>
    %45 = math.exp %44 : vector<8x8xf32>
    %cst_18 = arith.constant dense<0.000000e+00> : vector<8xf32>
    %46 = vector.multi_reduction <add>, %45, %cst_18 [1] : vector<8x8xf32> to vector<8xf32>
    %47 = vector.shape_cast %46 : vector<8xf32> to vector<8x1xf32>
    %48 = tpu.reciprocal %47 {approx = true} : vector<8x1xf32> -> vector<8x1xf32>
    %49 = vector.broadcast %48 : vector<8x1xf32> to vector<8x8xf32>
    %50 = arith.mulf %45, %49 : vector<8x8xf32>
    %51 = arith.truncf %50 : vector<8x8xf32> to vector<8x8xbf16>
    %cst_19 = arith.constant dense<0.000000e+00> : vector<8x8xf32>
    %52 = tpu.matmul %51, %39, %cst_19 {dimension_numbers = #tpu.dot_dimension_numbers<[1], [0], [0], [1], [0, 0, 1, 1], [], []>} : vector<8x8xbf16>, vector<8x8xbf16>, vector<8x8xf32> -> vector<8x8xf32>
    %53 = vector.extract_strided_slice %6 {offsets = [0, 16], sizes = [8, 8], strides = [1, 1]} : vector<8x32xf32> to vector<8x8xf32>
    %54 = arith.truncf %53 : vector<8x8xf32> to vector<8x8xbf16>
    %55 = vector.extract_strided_slice %13 {offsets = [0, 16], sizes = [8, 8], strides = [1, 1]} : vector<8x32xf32> to vector<8x8xf32>
    %56 = arith.truncf %55 : vector<8x8xf32> to vector<8x8xbf16>
    %57 = vector.extract_strided_slice %14 {offsets = [0, 16], sizes = [8, 8], strides = [1, 1]} : vector<8x32xf32> to vector<8x8xf32>
    %58 = arith.truncf %57 : vector<8x8xf32> to vector<8x8xbf16>
    %cst_20 = arith.constant dense<0.000000e+00> : vector<8x8xf32>
    %59 = tpu.matmul %54, %56, %cst_20 {dimension_numbers = #tpu.dot_dimension_numbers<[1], [1], [0], [0], [0, 0, 1, 0], [], []>} : vector<8x8xbf16>, vector<8x8xbf16>, vector<8x8xf32> -> vector<8x8xf32>
    %cst_21 = arith.constant dense<0xFF800000> : vector<8xf32>
    %60 = vector.multi_reduction <maximumf>, %59, %cst_21 [1] : vector<8x8xf32> to vector<8xf32>
    %61 = vector.shape_cast %60 : vector<8xf32> to vector<8x1xf32>
    %62 = vector.broadcast %61 : vector<8x1xf32> to vector<8x8xf32>
    %63 = arith.subf %59, %62 : vector<8x8xf32>
    %64 = math.exp %63 : vector<8x8xf32>
    %cst_22 = arith.constant dense<0.000000e+00> : vector<8xf32>
    %65 = vector.multi_reduction <add>, %64, %cst_22 [1] : vector<8x8xf32> to vector<8xf32>
    %66 = vector.shape_cast %65 : vector<8xf32> to vector<8x1xf32>
    %67 = tpu.reciprocal %66 {approx = true} : vector<8x1xf32> -> vector<8x1xf32>
    %68 = vector.broadcast %67 : vector<8x1xf32> to vector<8x8xf32>
    %69 = arith.mulf %64, %68 : vector<8x8xf32>
    %70 = arith.truncf %69 : vector<8x8xf32> to vector<8x8xbf16>
    %cst_23 = arith.constant dense<0.000000e+00> : vector<8x8xf32>
    %71 = tpu.matmul %70, %58, %cst_23 {dimension_numbers = #tpu.dot_dimension_numbers<[1], [0], [0], [1], [0, 0, 1, 1], [], []>} : vector<8x8xbf16>, vector<8x8xbf16>, vector<8x8xf32> -> vector<8x8xf32>
    %72 = vector.extract_strided_slice %6 {offsets = [0, 24], sizes = [8, 8], strides = [1, 1]} : vector<8x32xf32> to vector<8x8xf32>
    %73 = arith.truncf %72 : vector<8x8xf32> to vector<8x8xbf16>
    %74 = vector.extract_strided_slice %13 {offsets = [0, 24], sizes = [8, 8], strides = [1, 1]} : vector<8x32xf32> to vector<8x8xf32>
    %75 = arith.truncf %74 : vector<8x8xf32> to vector<8x8xbf16>
    %76 = vector.extract_strided_slice %14 {offsets = [0, 24], sizes = [8, 8], strides = [1, 1]} : vector<8x32xf32> to vector<8x8xf32>
    %77 = arith.truncf %76 : vector<8x8xf32> to vector<8x8xbf16>
    %cst_24 = arith.constant dense<0.000000e+00> : vector<8x8xf32>
    %78 = tpu.matmul %73, %75, %cst_24 {dimension_numbers = #tpu.dot_dimension_numbers<[1], [1], [0], [0], [0, 0, 1, 0], [], []>} : vector<8x8xbf16>, vector<8x8xbf16>, vector<8x8xf32> -> vector<8x8xf32>
    %cst_25 = arith.constant dense<0xFF800000> : vector<8xf32>
    %79 = vector.multi_reduction <maximumf>, %78, %cst_25 [1] : vector<8x8xf32> to vector<8xf32>
    %80 = vector.shape_cast %79 : vector<8xf32> to vector<8x1xf32>
    %81 = vector.broadcast %80 : vector<8x1xf32> to vector<8x8xf32>
    %82 = arith.subf %78, %81 : vector<8x8xf32>
    %83 = math.exp %82 : vector<8x8xf32>
    %cst_26 = arith.constant dense<0.000000e+00> : vector<8xf32>
    %84 = vector.multi_reduction <add>, %83, %cst_26 [1] : vector<8x8xf32> to vector<8xf32>
    %85 = vector.shape_cast %84 : vector<8xf32> to vector<8x1xf32>
    %86 = tpu.reciprocal %85 {approx = true} : vector<8x1xf32> -> vector<8x1xf32>
    %87 = vector.broadcast %86 : vector<8x1xf32> to vector<8x8xf32>
    %88 = arith.mulf %83, %87 : vector<8x8xf32>
    %89 = arith.truncf %88 : vector<8x8xf32> to vector<8x8xbf16>
    %cst_27 = arith.constant dense<0.000000e+00> : vector<8x8xf32>
    %90 = tpu.matmul %89, %77, %cst_27 {dimension_numbers = #tpu.dot_dimension_numbers<[1], [0], [0], [1], [0, 0, 1, 1], [], []>} : vector<8x8xbf16>, vector<8x8xbf16>, vector<8x8xf32> -> vector<8x8xf32>
    %91 = tpu.concatenate %33, %52, %71, %90 in 1 : vector<8x8xf32>, vector<8x8xf32>, vector<8x8xf32>, vector<8x8xf32> -> vector<8x32xf32>
    %92 = arith.truncf %91 : vector<8x32xf32> to vector<8x32xbf16>
    %c0_28 = arith.constant 0 : index
    %c0_29 = arith.constant 0 : index
    %93 = vector.load %arg7[%c0_28, %c0_29] : memref<32x32xbf16, #tpu.memory_space<vmem>>, vector<32x32xbf16>
    %cst_30 = arith.constant dense<0.000000e+00> : vector<8x32xf32>
    %94 = tpu.matmul %92, %93, %cst_30 {dimension_numbers = #tpu.dot_dimension_numbers<[1], [0], [0], [1], [0, 0, 1, 1], [], []>} : vector<8x32xbf16>, vector<32x32xbf16>, vector<8x32xf32> -> vector<8x32xf32>
    %c0_31 = arith.constant 0 : index
    %c0_32 = arith.constant 0 : index
    %95 = vector.load %arg8[%c0_31, %c0_32] : memref<1x32xf32, #tpu.memory_space<vmem>>, vector<1x32xf32>
    %96 = vector.broadcast %95 : vector<1x32xf32> to vector<8x32xf32>
    %97 = arith.addf %94, %96 : vector<8x32xf32>
    %98 = arith.extf %0 : vector<8x32xbf16> to vector<8x32xf32>
    %99 = arith.addf %97, %98 : vector<8x32xf32>
    %c0_33 = arith.constant 0 : index
    %c0_34 = arith.constant 0 : index
    %100 = vector.load %arg9[%c0_33, %c0_34] : memref<1x32xf32, #tpu.memory_space<vmem>>, vector<1x32xf32>
    %c0_35 = arith.constant 0 : index
    %c0_36 = arith.constant 0 : index
    %101 = vector.load %arg10[%c0_35, %c0_36] : memref<1x32xf32, #tpu.memory_space<vmem>>, vector<1x32xf32>
    %cst_37 = arith.constant dense<0.000000e+00> : vector<8xf32>
    %102 = vector.multi_reduction <add>, %99, %cst_37 [1] : vector<8x32xf32> to vector<8xf32>
    %103 = vector.shape_cast %102 : vector<8xf32> to vector<8x1xf32>
    %cst_38 = arith.constant 3.200000e+01 : f32
    %104 = vector.broadcast %cst_38 : f32 to vector<8x1xf32>
    %105 = arith.divf %103, %104 : vector<8x1xf32>
    %106 = arith.mulf %99, %99 : vector<8x32xf32>
    %cst_39 = arith.constant dense<0.000000e+00> : vector<8xf32>
    %107 = vector.multi_reduction <add>, %106, %cst_39 [1] : vector<8x32xf32> to vector<8xf32>
    %108 = vector.shape_cast %107 : vector<8xf32> to vector<8x1xf32>
    %cst_40 = arith.constant 3.200000e+01 : f32
    %109 = vector.broadcast %cst_40 : f32 to vector<8x1xf32>
    %110 = arith.divf %108, %109 : vector<8x1xf32>
    %111 = arith.mulf %105, %105 : vector<8x1xf32>
    %112 = arith.subf %110, %111 : vector<8x1xf32>
    %113 = vector.broadcast %105 : vector<8x1xf32> to vector<8x32xf32>
    %114 = arith.subf %99, %113 : vector<8x32xf32>
    %cst_41 = arith.constant 9.99999974E-6 : f32
    %115 = vector.broadcast %cst_41 : f32 to vector<8x1xf32>
    %116 = arith.addf %112, %115 : vector<8x1xf32>
    %117 = math.rsqrt %116 : vector<8x1xf32>
    %118 = vector.broadcast %117 : vector<8x1xf32> to vector<8x32xf32>
    %119 = arith.mulf %114, %118 : vector<8x32xf32>
    %120 = vector.broadcast %100 : vector<1x32xf32> to vector<8x32xf32>
    %121 = arith.mulf %119, %120 : vector<8x32xf32>
    %122 = vector.broadcast %101 : vector<1x32xf32> to vector<8x32xf32>
    %123 = arith.addf %121, %122 : vector<8x32xf32>
    %124 = arith.truncf %123 : vector<8x32xf32> to vector<8x32xbf16>
    %c0_42 = arith.constant 0 : index
    %c0_43 = arith.constant 0 : index
    %125 = vector.load %arg11[%c0_42, %c0_43] : memref<8x32xbf16, #tpu.memory_space<vmem>>, vector<8x32xbf16>
    tpu.vector_store %arg11[%c0_42, %c0_43], %124 {strides = array<i32>} : memref<8x32xbf16, #tpu.memory_space<vmem>>, vector<8x32xbf16>,
    return
  }
  func.func @transform_0(%arg0: i32) -> (i32, i32) {
    %c0_i32 = arith.constant 0 : i32
    %c0_i32_0 = arith.constant 0 : i32
    return %arg0, %c0_i32 : i32, i32
  }
  func.func @transform_1(%arg0: i32) -> (i32, i32) {
    %c0_i32 = arith.constant 0 : i32
    %c0_i32_0 = arith.constant 0 : i32
    return %arg0, %c0_i32 : i32, i32
  }
  func.func @transform_2(%arg0: i32) -> (i32, i32) {
    %c0_i32 = arith.constant 0 : i32
    %c0_i32_0 = arith.constant 0 : i32
    %c0_i32_1 = arith.constant 0 : i32
    return %c0_i32, %c0_i32_0 : i32, i32
  }
  func.func @transform_3(%arg0: i32) -> (i32, i32) {
    %c0_i32 = arith.constant 0 : i32
    %c0_i32_0 = arith.constant 0 : i32
    %c0_i32_1 = arith.constant 0 : i32
    return %c0_i32, %c0_i32_0 : i32, i32
  }
  func.func @transform_4(%arg0: i32) -> (i32, i32) {
    %c0_i32 = arith.constant 0 : i32
    %c0_i32_0 = arith.constant 0 : i32
    %c0_i32_1 = arith.constant 0 : i32
    return %c0_i32, %c0_i32_0 : i32, i32
  }
  func.func @transform_5(%arg0: i32) -> (i32, i32) {
    %c0_i32 = arith.constant 0 : i32
    %c0_i32_0 = arith.constant 0 : i32
    %c0_i32_1 = arith.constant 0 : i32
    return %c0_i32, %c0_i32_0 : i32, i32
  }
  func.func @transform_6(%arg0: i32) -> (i32, i32) {
    %c0_i32 = arith.constant 0 : i32
    %c0_i32_0 = arith.constant 0 : i32
    %c0_i32_1 = arith.constant 0 : i32
    return %c0_i32, %c0_i32_0 : i32, i32
  }
  func.func @transform_7(%arg0: i32) -> (i32, i32) {
    %c0_i32 = arith.constant 0 : i32
    %c0_i32_0 = arith.constant 0 : i32
    %c0_i32_1 = arith.constant 0 : i32
    return %c0_i32, %c0_i32_0 : i32, i32
  }
  func.func @transform_8(%arg0: i32) -> (i32, i32) {
    %c0_i32 = arith.constant 0 : i32
    %c0_i32_0 = arith.constant 0 : i32
    %c0_i32_1 = arith.constant 0 : i32
    return %c0_i32, %c0_i32_0 : i32, i32
  }
  func.func @transform_9(%arg0: i32) -> (i32, i32) {
    %c0_i32 = arith.constant 0 : i32
    %c0_i32_0 = arith.constant 0 : i32
    %c0_i32_1 = arith.constant 0 : i32
    return %c0_i32, %c0_i32_0 : i32, i32
  }
  func.func @transform_10(%arg0: i32) -> (i32, i32) {
    %c0_i32 = arith.constant 0 : i32
    %c0_i32_0 = arith.constant 0 : i32
    return %arg0, %c0_i32 : i32, i32
  }
}

module attributes {stable_mosaic.version = 11 : i64} {
  func.func @_self_attn_block_kernel(%arg0: i32, %arg1: memref<8x32xf32, #tpu.memory_space<vmem>>, %arg2: memref<32x96xbf16, #tpu.memory_space<vmem>>, %arg3: memref<1x96xf32, #tpu.memory_space<vmem>>, %arg4: memref<32x32xbf16, #tpu.memory_space<vmem>>, %arg5: memref<1x32xf32, #tpu.memory_space<vmem>>, %arg6: memref<1x32xf32, #tpu.memory_space<vmem>>, %arg7: memref<1x32xf32, #tpu.memory_space<vmem>>, %arg8: memref<8x32xbf16, #tpu.memory_space<vmem>>) attributes {dimension_semantics = [#tpu.dimension_semantics<parallel>], iteration_bounds = array<i64: 2>, scalar_prefetch = 0 : i64, scratch_operands = 0 : i64, tpu.core_type = #tpu.core_type<tc>, window_params = [{transform_indices = @transform_0, window_bounds = array<i64: 8, 32>}, {pipeline_mode = #tpu.pipeline_mode<synchronous>, transform_indices = @transform_1, window_bounds = array<i64: 32, 96>}, {pipeline_mode = #tpu.pipeline_mode<synchronous>, transform_indices = @transform_2, window_bounds = array<i64: 1, 96>}, {pipeline_mode = #tpu.pipeline_mode<synchronous>, transform_indices = @transform_3, window_bounds = array<i64: 32, 32>}, {pipeline_mode = #tpu.pipeline_mode<synchronous>, transform_indices = @transform_4, window_bounds = array<i64: 1, 32>}, {pipeline_mode = #tpu.pipeline_mode<synchronous>, transform_indices = @transform_5, window_bounds = array<i64: 1, 32>}, {pipeline_mode = #tpu.pipeline_mode<synchronous>, transform_indices = @transform_6, window_bounds = array<i64: 1, 32>}, {transform_indices = @transform_7, window_bounds = array<i64: 8, 32>}]} {
    %c0 = arith.constant 0 : index
    %c0_0 = arith.constant 0 : index
    %0 = vector.load %arg1[%c0, %c0_0] : memref<8x32xf32, #tpu.memory_space<vmem>>, vector<8x32xf32>
    %1 = arith.truncf %0 : vector<8x32xf32> to vector<8x32xbf16>
    %c0_1 = arith.constant 0 : index
    %c0_2 = arith.constant 0 : index
    %2 = vector.load %arg2[%c0_1, %c0_2] : memref<32x96xbf16, #tpu.memory_space<vmem>>, vector<32x96xbf16>
    %cst = arith.constant dense<0.000000e+00> : vector<8x96xf32>
    %3 = tpu.matmul %1, %2, %cst {dimension_numbers = #tpu.dot_dimension_numbers<[1], [0], [0], [1], [0, 0, 1, 1], [], []>} : vector<8x32xbf16>, vector<32x96xbf16>, vector<8x96xf32> -> vector<8x96xf32>
    %c0_3 = arith.constant 0 : index
    %c0_4 = arith.constant 0 : index
    %4 = vector.load %arg3[%c0_3, %c0_4] : memref<1x96xf32, #tpu.memory_space<vmem>>, vector<1x96xf32>
    %5 = vector.broadcast %4 : vector<1x96xf32> to vector<8x96xf32>
    %6 = arith.addf %3, %5 : vector<8x96xf32>
    %7 = vector.extract_strided_slice %6 {offsets = [0, 0], sizes = [8, 32], strides = [1, 1]} : vector<8x96xf32> to vector<8x32xf32>
    %8 = vector.extract_strided_slice %6 {offsets = [0, 32], sizes = [8, 32], strides = [1, 1]} : vector<8x96xf32> to vector<8x32xf32>
    %9 = vector.extract_strided_slice %6 {offsets = [0, 64], sizes = [8, 32], strides = [1, 1]} : vector<8x96xf32> to vector<8x32xf32>
    %10 = vector.extract_strided_slice %7 {offsets = [0, 0], sizes = [8, 8], strides = [1, 1]} : vector<8x32xf32> to vector<8x8xf32>
    %11 = arith.truncf %10 : vector<8x8xf32> to vector<8x8xbf16>
    %12 = vector.extract_strided_slice %8 {offsets = [0, 0], sizes = [8, 8], strides = [1, 1]} : vector<8x32xf32> to vector<8x8xf32>
    %13 = arith.truncf %12 : vector<8x8xf32> to vector<8x8xbf16>
    %14 = vector.extract_strided_slice %9 {offsets = [0, 0], sizes = [8, 8], strides = [1, 1]} : vector<8x32xf32> to vector<8x8xf32>
    %15 = arith.truncf %14 : vector<8x8xf32> to vector<8x8xbf16>
    %cst_5 = arith.constant dense<0.000000e+00> : vector<8x8xf32>
    %16 = tpu.matmul %11, %13, %cst_5 {dimension_numbers = #tpu.dot_dimension_numbers<[1], [1], [0], [0], [0, 0, 1, 0], [], []>} : vector<8x8xbf16>, vector<8x8xbf16>, vector<8x8xf32> -> vector<8x8xf32>
    %cst_6 = arith.constant dense<0xFF800000> : vector<8xf32>
    %17 = vector.multi_reduction <maximumf>, %16, %cst_6 [1] : vector<8x8xf32> to vector<8xf32>
    %18 = vector.shape_cast %17 : vector<8xf32> to vector<8x1xf32>
    %19 = vector.broadcast %18 : vector<8x1xf32> to vector<8x8xf32>
    %20 = arith.subf %16, %19 : vector<8x8xf32>
    %21 = math.exp %20 : vector<8x8xf32>
    %cst_7 = arith.constant dense<0.000000e+00> : vector<8xf32>
    %22 = vector.multi_reduction <add>, %21, %cst_7 [1] : vector<8x8xf32> to vector<8xf32>
    %23 = vector.shape_cast %22 : vector<8xf32> to vector<8x1xf32>
    %24 = tpu.reciprocal %23 {approx = true} : vector<8x1xf32> -> vector<8x1xf32>
    %25 = vector.broadcast %24 : vector<8x1xf32> to vector<8x8xf32>
    %26 = arith.mulf %21, %25 : vector<8x8xf32>
    %27 = arith.truncf %26 : vector<8x8xf32> to vector<8x8xbf16>
    %cst_8 = arith.constant dense<0.000000e+00> : vector<8x8xf32>
    %28 = tpu.matmul %27, %15, %cst_8 {dimension_numbers = #tpu.dot_dimension_numbers<[1], [0], [0], [1], [0, 0, 1, 1], [], []>} : vector<8x8xbf16>, vector<8x8xbf16>, vector<8x8xf32> -> vector<8x8xf32>
    %29 = vector.extract_strided_slice %7 {offsets = [0, 8], sizes = [8, 8], strides = [1, 1]} : vector<8x32xf32> to vector<8x8xf32>
    %30 = arith.truncf %29 : vector<8x8xf32> to vector<8x8xbf16>
    %31 = vector.extract_strided_slice %8 {offsets = [0, 8], sizes = [8, 8], strides = [1, 1]} : vector<8x32xf32> to vector<8x8xf32>
    %32 = arith.truncf %31 : vector<8x8xf32> to vector<8x8xbf16>
    %33 = vector.extract_strided_slice %9 {offsets = [0, 8], sizes = [8, 8], strides = [1, 1]} : vector<8x32xf32> to vector<8x8xf32>
    %34 = arith.truncf %33 : vector<8x8xf32> to vector<8x8xbf16>
    %cst_9 = arith.constant dense<0.000000e+00> : vector<8x8xf32>
    %35 = tpu.matmul %30, %32, %cst_9 {dimension_numbers = #tpu.dot_dimension_numbers<[1], [1], [0], [0], [0, 0, 1, 0], [], []>} : vector<8x8xbf16>, vector<8x8xbf16>, vector<8x8xf32> -> vector<8x8xf32>
    %cst_10 = arith.constant dense<0xFF800000> : vector<8xf32>
    %36 = vector.multi_reduction <maximumf>, %35, %cst_10 [1] : vector<8x8xf32> to vector<8xf32>
    %37 = vector.shape_cast %36 : vector<8xf32> to vector<8x1xf32>
    %38 = vector.broadcast %37 : vector<8x1xf32> to vector<8x8xf32>
    %39 = arith.subf %35, %38 : vector<8x8xf32>
    %40 = math.exp %39 : vector<8x8xf32>
    %cst_11 = arith.constant dense<0.000000e+00> : vector<8xf32>
    %41 = vector.multi_reduction <add>, %40, %cst_11 [1] : vector<8x8xf32> to vector<8xf32>
    %42 = vector.shape_cast %41 : vector<8xf32> to vector<8x1xf32>
    %43 = tpu.reciprocal %42 {approx = true} : vector<8x1xf32> -> vector<8x1xf32>
    %44 = vector.broadcast %43 : vector<8x1xf32> to vector<8x8xf32>
    %45 = arith.mulf %40, %44 : vector<8x8xf32>
    %46 = arith.truncf %45 : vector<8x8xf32> to vector<8x8xbf16>
    %cst_12 = arith.constant dense<0.000000e+00> : vector<8x8xf32>
    %47 = tpu.matmul %46, %34, %cst_12 {dimension_numbers = #tpu.dot_dimension_numbers<[1], [0], [0], [1], [0, 0, 1, 1], [], []>} : vector<8x8xbf16>, vector<8x8xbf16>, vector<8x8xf32> -> vector<8x8xf32>
    %48 = vector.extract_strided_slice %7 {offsets = [0, 16], sizes = [8, 8], strides = [1, 1]} : vector<8x32xf32> to vector<8x8xf32>
    %49 = arith.truncf %48 : vector<8x8xf32> to vector<8x8xbf16>
    %50 = vector.extract_strided_slice %8 {offsets = [0, 16], sizes = [8, 8], strides = [1, 1]} : vector<8x32xf32> to vector<8x8xf32>
    %51 = arith.truncf %50 : vector<8x8xf32> to vector<8x8xbf16>
    %52 = vector.extract_strided_slice %9 {offsets = [0, 16], sizes = [8, 8], strides = [1, 1]} : vector<8x32xf32> to vector<8x8xf32>
    %53 = arith.truncf %52 : vector<8x8xf32> to vector<8x8xbf16>
    %cst_13 = arith.constant dense<0.000000e+00> : vector<8x8xf32>
    %54 = tpu.matmul %49, %51, %cst_13 {dimension_numbers = #tpu.dot_dimension_numbers<[1], [1], [0], [0], [0, 0, 1, 0], [], []>} : vector<8x8xbf16>, vector<8x8xbf16>, vector<8x8xf32> -> vector<8x8xf32>
    %cst_14 = arith.constant dense<0xFF800000> : vector<8xf32>
    %55 = vector.multi_reduction <maximumf>, %54, %cst_14 [1] : vector<8x8xf32> to vector<8xf32>
    %56 = vector.shape_cast %55 : vector<8xf32> to vector<8x1xf32>
    %57 = vector.broadcast %56 : vector<8x1xf32> to vector<8x8xf32>
    %58 = arith.subf %54, %57 : vector<8x8xf32>
    %59 = math.exp %58 : vector<8x8xf32>
    %cst_15 = arith.constant dense<0.000000e+00> : vector<8xf32>
    %60 = vector.multi_reduction <add>, %59, %cst_15 [1] : vector<8x8xf32> to vector<8xf32>
    %61 = vector.shape_cast %60 : vector<8xf32> to vector<8x1xf32>
    %62 = tpu.reciprocal %61 {approx = true} : vector<8x1xf32> -> vector<8x1xf32>
    %63 = vector.broadcast %62 : vector<8x1xf32> to vector<8x8xf32>
    %64 = arith.mulf %59, %63 : vector<8x8xf32>
    %65 = arith.truncf %64 : vector<8x8xf32> to vector<8x8xbf16>
    %cst_16 = arith.constant dense<0.000000e+00> : vector<8x8xf32>
    %66 = tpu.matmul %65, %53, %cst_16 {dimension_numbers = #tpu.dot_dimension_numbers<[1], [0], [0], [1], [0, 0, 1, 1], [], []>} : vector<8x8xbf16>, vector<8x8xbf16>, vector<8x8xf32> -> vector<8x8xf32>
    %67 = vector.extract_strided_slice %7 {offsets = [0, 24], sizes = [8, 8], strides = [1, 1]} : vector<8x32xf32> to vector<8x8xf32>
    %68 = arith.truncf %67 : vector<8x8xf32> to vector<8x8xbf16>
    %69 = vector.extract_strided_slice %8 {offsets = [0, 24], sizes = [8, 8], strides = [1, 1]} : vector<8x32xf32> to vector<8x8xf32>
    %70 = arith.truncf %69 : vector<8x8xf32> to vector<8x8xbf16>
    %71 = vector.extract_strided_slice %9 {offsets = [0, 24], sizes = [8, 8], strides = [1, 1]} : vector<8x32xf32> to vector<8x8xf32>
    %72 = arith.truncf %71 : vector<8x8xf32> to vector<8x8xbf16>
    %cst_17 = arith.constant dense<0.000000e+00> : vector<8x8xf32>
    %73 = tpu.matmul %68, %70, %cst_17 {dimension_numbers = #tpu.dot_dimension_numbers<[1], [1], [0], [0], [0, 0, 1, 0], [], []>} : vector<8x8xbf16>, vector<8x8xbf16>, vector<8x8xf32> -> vector<8x8xf32>
    %cst_18 = arith.constant dense<0xFF800000> : vector<8xf32>
    %74 = vector.multi_reduction <maximumf>, %73, %cst_18 [1] : vector<8x8xf32> to vector<8xf32>
    %75 = vector.shape_cast %74 : vector<8xf32> to vector<8x1xf32>
    %76 = vector.broadcast %75 : vector<8x1xf32> to vector<8x8xf32>
    %77 = arith.subf %73, %76 : vector<8x8xf32>
    %78 = math.exp %77 : vector<8x8xf32>
    %cst_19 = arith.constant dense<0.000000e+00> : vector<8xf32>
    %79 = vector.multi_reduction <add>, %78, %cst_19 [1] : vector<8x8xf32> to vector<8xf32>
    %80 = vector.shape_cast %79 : vector<8xf32> to vector<8x1xf32>
    %81 = tpu.reciprocal %80 {approx = true} : vector<8x1xf32> -> vector<8x1xf32>
    %82 = vector.broadcast %81 : vector<8x1xf32> to vector<8x8xf32>
    %83 = arith.mulf %78, %82 : vector<8x8xf32>
    %84 = arith.truncf %83 : vector<8x8xf32> to vector<8x8xbf16>
    %cst_20 = arith.constant dense<0.000000e+00> : vector<8x8xf32>
    %85 = tpu.matmul %84, %72, %cst_20 {dimension_numbers = #tpu.dot_dimension_numbers<[1], [0], [0], [1], [0, 0, 1, 1], [], []>} : vector<8x8xbf16>, vector<8x8xbf16>, vector<8x8xf32> -> vector<8x8xf32>
    %86 = tpu.concatenate %28, %47, %66, %85 in 1 : vector<8x8xf32>, vector<8x8xf32>, vector<8x8xf32>, vector<8x8xf32> -> vector<8x32xf32>
    %87 = arith.truncf %86 : vector<8x32xf32> to vector<8x32xbf16>
    %c0_21 = arith.constant 0 : index
    %c0_22 = arith.constant 0 : index
    %88 = vector.load %arg4[%c0_21, %c0_22] : memref<32x32xbf16, #tpu.memory_space<vmem>>, vector<32x32xbf16>
    %cst_23 = arith.constant dense<0.000000e+00> : vector<8x32xf32>
    %89 = tpu.matmul %87, %88, %cst_23 {dimension_numbers = #tpu.dot_dimension_numbers<[1], [0], [0], [1], [0, 0, 1, 1], [], []>} : vector<8x32xbf16>, vector<32x32xbf16>, vector<8x32xf32> -> vector<8x32xf32>
    %c0_24 = arith.constant 0 : index
    %c0_25 = arith.constant 0 : index
    %90 = vector.load %arg5[%c0_24, %c0_25] : memref<1x32xf32, #tpu.memory_space<vmem>>, vector<1x32xf32>
    %91 = vector.broadcast %90 : vector<1x32xf32> to vector<8x32xf32>
    %92 = arith.addf %89, %91 : vector<8x32xf32>
    %93 = arith.addf %92, %0 : vector<8x32xf32>
    %c0_26 = arith.constant 0 : index
    %c0_27 = arith.constant 0 : index
    %94 = vector.load %arg6[%c0_26, %c0_27] : memref<1x32xf32, #tpu.memory_space<vmem>>, vector<1x32xf32>
    %c0_28 = arith.constant 0 : index
    %c0_29 = arith.constant 0 : index
    %95 = vector.load %arg7[%c0_28, %c0_29] : memref<1x32xf32, #tpu.memory_space<vmem>>, vector<1x32xf32>
    %cst_30 = arith.constant dense<0.000000e+00> : vector<8xf32>
    %96 = vector.multi_reduction <add>, %93, %cst_30 [1] : vector<8x32xf32> to vector<8xf32>
    %97 = vector.shape_cast %96 : vector<8xf32> to vector<8x1xf32>
    %cst_31 = arith.constant 3.200000e+01 : f32
    %98 = vector.broadcast %cst_31 : f32 to vector<8x1xf32>
    %99 = arith.divf %97, %98 : vector<8x1xf32>
    %100 = arith.mulf %93, %93 : vector<8x32xf32>
    %cst_32 = arith.constant dense<0.000000e+00> : vector<8xf32>
    %101 = vector.multi_reduction <add>, %100, %cst_32 [1] : vector<8x32xf32> to vector<8xf32>
    %102 = vector.shape_cast %101 : vector<8xf32> to vector<8x1xf32>
    %cst_33 = arith.constant 3.200000e+01 : f32
    %103 = vector.broadcast %cst_33 : f32 to vector<8x1xf32>
    %104 = arith.divf %102, %103 : vector<8x1xf32>
    %105 = arith.mulf %99, %99 : vector<8x1xf32>
    %106 = arith.subf %104, %105 : vector<8x1xf32>
    %107 = vector.broadcast %99 : vector<8x1xf32> to vector<8x32xf32>
    %108 = arith.subf %93, %107 : vector<8x32xf32>
    %cst_34 = arith.constant 9.99999974E-6 : f32
    %109 = vector.broadcast %cst_34 : f32 to vector<8x1xf32>
    %110 = arith.addf %106, %109 : vector<8x1xf32>
    %111 = math.rsqrt %110 : vector<8x1xf32>
    %112 = vector.broadcast %111 : vector<8x1xf32> to vector<8x32xf32>
    %113 = arith.mulf %108, %112 : vector<8x32xf32>
    %114 = vector.broadcast %94 : vector<1x32xf32> to vector<8x32xf32>
    %115 = arith.mulf %113, %114 : vector<8x32xf32>
    %116 = vector.broadcast %95 : vector<1x32xf32> to vector<8x32xf32>
    %117 = arith.addf %115, %116 : vector<8x32xf32>
    %118 = arith.truncf %117 : vector<8x32xf32> to vector<8x32xbf16>
    %c0_35 = arith.constant 0 : index
    %c0_36 = arith.constant 0 : index
    %119 = vector.load %arg8[%c0_35, %c0_36] : memref<8x32xbf16, #tpu.memory_space<vmem>>, vector<8x32xbf16>
    tpu.vector_store %arg8[%c0_35, %c0_36], %118 {strides = array<i32>} : memref<8x32xbf16, #tpu.memory_space<vmem>>, vector<8x32xbf16>,
    return
  }
  func.func @transform_0(%arg0: i32) -> (i32, i32) {
    %c0_i32 = arith.constant 0 : i32
    %c0_i32_0 = arith.constant 0 : i32
    return %arg0, %c0_i32 : i32, i32
  }
  func.func @transform_1(%arg0: i32) -> (i32, i32) {
    %c0_i32 = arith.constant 0 : i32
    %c0_i32_0 = arith.constant 0 : i32
    %c0_i32_1 = arith.constant 0 : i32
    return %c0_i32, %c0_i32_0 : i32, i32
  }
  func.func @transform_2(%arg0: i32) -> (i32, i32) {
    %c0_i32 = arith.constant 0 : i32
    %c0_i32_0 = arith.constant 0 : i32
    %c0_i32_1 = arith.constant 0 : i32
    return %c0_i32, %c0_i32_0 : i32, i32
  }
  func.func @transform_3(%arg0: i32) -> (i32, i32) {
    %c0_i32 = arith.constant 0 : i32
    %c0_i32_0 = arith.constant 0 : i32
    %c0_i32_1 = arith.constant 0 : i32
    return %c0_i32, %c0_i32_0 : i32, i32
  }
  func.func @transform_4(%arg0: i32) -> (i32, i32) {
    %c0_i32 = arith.constant 0 : i32
    %c0_i32_0 = arith.constant 0 : i32
    %c0_i32_1 = arith.constant 0 : i32
    return %c0_i32, %c0_i32_0 : i32, i32
  }
  func.func @transform_5(%arg0: i32) -> (i32, i32) {
    %c0_i32 = arith.constant 0 : i32
    %c0_i32_0 = arith.constant 0 : i32
    %c0_i32_1 = arith.constant 0 : i32
    return %c0_i32, %c0_i32_0 : i32, i32
  }
  func.func @transform_6(%arg0: i32) -> (i32, i32) {
    %c0_i32 = arith.constant 0 : i32
    %c0_i32_0 = arith.constant 0 : i32
    %c0_i32_1 = arith.constant 0 : i32
    return %c0_i32, %c0_i32_0 : i32, i32
  }
  func.func @transform_7(%arg0: i32) -> (i32, i32) {
    %c0_i32 = arith.constant 0 : i32
    %c0_i32_0 = arith.constant 0 : i32
    return %arg0, %c0_i32 : i32, i32
  }
}

module attributes {stable_mosaic.version = 11 : i64} {
  func.func @_ffn_add_ln_kernel(%arg0: i32, %arg1: i32, %arg2: memref<16x32xbf16, #tpu.memory_space<vmem>>, %arg3: memref<32x64xbf16, #tpu.memory_space<vmem>>, %arg4: memref<1x64xf32, #tpu.memory_space<vmem>>, %arg5: memref<64x32xbf16, #tpu.memory_space<vmem>>, %arg6: memref<1x32xf32, #tpu.memory_space<vmem>>, %arg7: memref<1x32xf32, #tpu.memory_space<vmem>>, %arg8: memref<1x32xf32, #tpu.memory_space<vmem>>, %arg9: memref<16x32xf32, #tpu.memory_space<vmem>>, %arg10: memref<16x32xf32, #tpu.memory_space<vmem>>) attributes {dimension_semantics = [#tpu.dimension_semantics<parallel>, #tpu.dimension_semantics<arbitrary>], iteration_bounds = array<i64: 1, 1>, scalar_prefetch = 0 : i64, scratch_operands = 1 : i64, tpu.core_type = #tpu.core_type<tc>, window_params = [{transform_indices = @transform_0, window_bounds = array<i64: 16, 32>}, {transform_indices = @transform_1, window_bounds = array<i64: 32, 64>}, {transform_indices = @transform_2, window_bounds = array<i64: 1, 64>}, {transform_indices = @transform_3, window_bounds = array<i64: 64, 32>}, {pipeline_mode = #tpu.pipeline_mode<synchronous>, transform_indices = @transform_4, window_bounds = array<i64: 1, 32>}, {pipeline_mode = #tpu.pipeline_mode<synchronous>, transform_indices = @transform_5, window_bounds = array<i64: 1, 32>}, {pipeline_mode = #tpu.pipeline_mode<synchronous>, transform_indices = @transform_6, window_bounds = array<i64: 1, 32>}, {transform_indices = @transform_7, window_bounds = array<i64: 16, 32>}]} {
    %c0_i32 = arith.constant 0 : i32
    %0 = arith.cmpi eq, %arg1, %c0_i32 : i32
    %1 = arith.extui %0 : i1 to i32
    %c0_i32_0 = arith.constant 0 : i32
    %2 = arith.cmpi ne, %1, %c0_i32_0 : i32
    scf.if %2 {
      %cst_16 = arith.constant 0.000000e+00 : f32
      %20 = vector.broadcast %cst_16 : f32 to vector<16x32xf32>
      %c0_17 = arith.constant 0 : index
      %c0_18 = arith.constant 0 : index
      %21 = vector.load %arg10[%c0_17, %c0_18] : memref<16x32xf32, #tpu.memory_space<vmem>>, vector<16x32xf32>
      tpu.vector_store %arg10[%c0_17, %c0_18], %20 {strides = array<i32>} : memref<16x32xf32, #tpu.memory_space<vmem>>, vector<16x32xf32>,
    } else {
    }
    %c0 = arith.constant 0 : index
    %c0_1 = arith.constant 0 : index
    %3 = vector.load %arg2[%c0, %c0_1] : memref<16x32xbf16, #tpu.memory_space<vmem>>, vector<16x32xbf16>
    %c0_2 = arith.constant 0 : index
    %c0_3 = arith.constant 0 : index
    %4 = vector.load %arg3[%c0_2, %c0_3] : memref<32x64xbf16, #tpu.memory_space<vmem>>, vector<32x64xbf16>
    %cst = arith.constant dense<0.000000e+00> : vector<16x64xf32>
    %5 = tpu.matmul %3, %4, %cst {dimension_numbers = #tpu.dot_dimension_numbers<[1], [0], [0], [1], [0, 0, 1, 1], [], []>} : vector<16x32xbf16>, vector<32x64xbf16>, vector<16x64xf32> -> vector<16x64xf32>
    %c0_4 = arith.constant 0 : index
    %c0_5 = arith.constant 0 : index
    %6 = vector.load %arg4[%c0_4, %c0_5] : memref<1x64xf32, #tpu.memory_space<vmem>>, vector<1x64xf32>
    %7 = vector.broadcast %6 : vector<1x64xf32> to vector<16x64xf32>
    %8 = arith.addf %5, %7 : vector<16x64xf32>
    %cst_6 = arith.constant 0.000000e+00 : f32
    %9 = vector.broadcast %cst_6 : f32 to vector<16x64xf32>
    %10 = arith.maximumf %8, %9 : vector<16x64xf32>
    %c0_7 = arith.constant 0 : index
    %c0_8 = arith.constant 0 : index
    %11 = vector.load %arg10[%c0_7, %c0_8] : memref<16x32xf32, #tpu.memory_space<vmem>>, vector<16x32xf32>
    %12 = arith.truncf %10 : vector<16x64xf32> to vector<16x64xbf16>
    %c0_9 = arith.constant 0 : index
    %c0_10 = arith.constant 0 : index
    %13 = vector.load %arg5[%c0_9, %c0_10] : memref<64x32xbf16, #tpu.memory_space<vmem>>, vector<64x32xbf16>
    %cst_11 = arith.constant dense<0.000000e+00> : vector<16x32xf32>
    %14 = tpu.matmul %12, %13, %cst_11 {dimension_numbers = #tpu.dot_dimension_numbers<[1], [0], [0], [1], [0, 0, 1, 1], [], []>} : vector<16x64xbf16>, vector<64x32xbf16>, vector<16x32xf32> -> vector<16x32xf32>
    %15 = arith.addf %11, %14 : vector<16x32xf32>
    %c0_12 = arith.constant 0 : index
    %c0_13 = arith.constant 0 : index
    %16 = vector.load %arg10[%c0_12, %c0_13] : memref<16x32xf32, #tpu.memory_space<vmem>>, vector<16x32xf32>
    tpu.vector_store %arg10[%c0_12, %c0_13], %15 {strides = array<i32>} : memref<16x32xf32, #tpu.memory_space<vmem>>, vector<16x32xf32>,
    %c0_i32_14 = arith.constant 0 : i32
    %17 = arith.cmpi eq, %arg1, %c0_i32_14 : i32
    %18 = arith.extui %17 : i1 to i32
    %c0_i32_15 = arith.constant 0 : i32
    %19 = arith.cmpi ne, %18, %c0_i32_15 : i32
    scf.if %19 {
      %c0_16 = arith.constant 0 : index
      %c0_17 = arith.constant 0 : index
      %20 = vector.load %arg10[%c0_16, %c0_17] : memref<16x32xf32, #tpu.memory_space<vmem>>, vector<16x32xf32>
      %c0_18 = arith.constant 0 : index
      %c0_19 = arith.constant 0 : index
      %21 = vector.load %arg6[%c0_18, %c0_19] : memref<1x32xf32, #tpu.memory_space<vmem>>, vector<1x32xf32>
      %22 = vector.broadcast %21 : vector<1x32xf32> to vector<16x32xf32>
      %23 = arith.addf %20, %22 : vector<16x32xf32>
      %24 = arith.extf %3 : vector<16x32xbf16> to vector<16x32xf32>
      %25 = arith.addf %23, %24 : vector<16x32xf32>
      %c0_20 = arith.constant 0 : index
      %c0_21 = arith.constant 0 : index
      %26 = vector.load %arg7[%c0_20, %c0_21] : memref<1x32xf32, #tpu.memory_space<vmem>>, vector<1x32xf32>
      %c0_22 = arith.constant 0 : index
      %c0_23 = arith.constant 0 : index
      %27 = vector.load %arg8[%c0_22, %c0_23] : memref<1x32xf32, #tpu.memory_space<vmem>>, vector<1x32xf32>
      %cst_24 = arith.constant dense<0.000000e+00> : vector<16xf32>
      %28 = vector.multi_reduction <add>, %25, %cst_24 [1] : vector<16x32xf32> to vector<16xf32>
      %29 = vector.shape_cast %28 : vector<16xf32> to vector<16x1xf32>
      %cst_25 = arith.constant 3.200000e+01 : f32
      %30 = vector.broadcast %cst_25 : f32 to vector<16x1xf32>
      %31 = arith.divf %29, %30 : vector<16x1xf32>
      %32 = arith.mulf %25, %25 : vector<16x32xf32>
      %cst_26 = arith.constant dense<0.000000e+00> : vector<16xf32>
      %33 = vector.multi_reduction <add>, %32, %cst_26 [1] : vector<16x32xf32> to vector<16xf32>
      %34 = vector.shape_cast %33 : vector<16xf32> to vector<16x1xf32>
      %cst_27 = arith.constant 3.200000e+01 : f32
      %35 = vector.broadcast %cst_27 : f32 to vector<16x1xf32>
      %36 = arith.divf %34, %35 : vector<16x1xf32>
      %37 = arith.mulf %31, %31 : vector<16x1xf32>
      %38 = arith.subf %36, %37 : vector<16x1xf32>
      %39 = vector.broadcast %31 : vector<16x1xf32> to vector<16x32xf32>
      %40 = arith.subf %25, %39 : vector<16x32xf32>
      %cst_28 = arith.constant 9.99999974E-6 : f32
      %41 = vector.broadcast %cst_28 : f32 to vector<16x1xf32>
      %42 = arith.addf %38, %41 : vector<16x1xf32>
      %43 = math.rsqrt %42 : vector<16x1xf32>
      %44 = vector.broadcast %43 : vector<16x1xf32> to vector<16x32xf32>
      %45 = arith.mulf %40, %44 : vector<16x32xf32>
      %46 = vector.broadcast %26 : vector<1x32xf32> to vector<16x32xf32>
      %47 = arith.mulf %45, %46 : vector<16x32xf32>
      %48 = vector.broadcast %27 : vector<1x32xf32> to vector<16x32xf32>
      %49 = arith.addf %47, %48 : vector<16x32xf32>
      %c0_29 = arith.constant 0 : index
      %c0_30 = arith.constant 0 : index
      %50 = vector.load %arg9[%c0_29, %c0_30] : memref<16x32xf32, #tpu.memory_space<vmem>>, vector<16x32xf32>
      tpu.vector_store %arg9[%c0_29, %c0_30], %49 {strides = array<i32>} : memref<16x32xf32, #tpu.memory_space<vmem>>, vector<16x32xf32>,
    } else {
    }
    return
  }
  func.func @transform_0(%arg0: i32, %arg1: i32) -> (i32, i32) {
    %c0_i32 = arith.constant 0 : i32
    %c0_i32_0 = arith.constant 0 : i32
    return %arg0, %c0_i32 : i32, i32
  }
  func.func @transform_1(%arg0: i32, %arg1: i32) -> (i32, i32) {
    %c0_i32 = arith.constant 0 : i32
    %c0_i32_0 = arith.constant 0 : i32
    return %c0_i32, %arg1 : i32, i32
  }
  func.func @transform_2(%arg0: i32, %arg1: i32) -> (i32, i32) {
    %c0_i32 = arith.constant 0 : i32
    %c0_i32_0 = arith.constant 0 : i32
    return %c0_i32, %arg1 : i32, i32
  }
  func.func @transform_3(%arg0: i32, %arg1: i32) -> (i32, i32) {
    %c0_i32 = arith.constant 0 : i32
    %c0_i32_0 = arith.constant 0 : i32
    return %arg1, %c0_i32 : i32, i32
  }
  func.func @transform_4(%arg0: i32, %arg1: i32) -> (i32, i32) {
    %c0_i32 = arith.constant 0 : i32
    %c0_i32_0 = arith.constant 0 : i32
    %c0_i32_1 = arith.constant 0 : i32
    return %c0_i32, %c0_i32_0 : i32, i32
  }
  func.func @transform_5(%arg0: i32, %arg1: i32) -> (i32, i32) {
    %c0_i32 = arith.constant 0 : i32
    %c0_i32_0 = arith.constant 0 : i32
    %c0_i32_1 = arith.constant 0 : i32
    return %c0_i32, %c0_i32_0 : i32, i32
  }
  func.func @transform_6(%arg0: i32, %arg1: i32) -> (i32, i32) {
    %c0_i32 = arith.constant 0 : i32
    %c0_i32_0 = arith.constant 0 : i32
    %c0_i32_1 = arith.constant 0 : i32
    return %c0_i32, %c0_i32_0 : i32, i32
  }
  func.func @transform_7(%arg0: i32, %arg1: i32) -> (i32, i32) {
    %c0_i32 = arith.constant 0 : i32
    %c0_i32_0 = arith.constant 0 : i32
    return %arg0, %c0_i32 : i32, i32
  }
}

</mosaic_0001>

<llo_original>
// kernel: decoder_layer.5
$region0: #{decoder_layer.5}
  #allocation0 [shape = 'u32[]', space=smem, size = 0x4, offset = 0x4, fixed_abs, tag = 'smem constant byte address 0x4 - core index']
  #allocation1 [shape = 'u32[144,128]{1,0:T(1,128)}', space=vmem, size = 0x12000, scoped, tag = 'internal scratch']
  #allocation2 [shape = 'f32[16,32]{1,0:T(8,128)}', space=vmem, size = 0x2000, scoped, tag = 'scratch operand']
  %s0 = inlined_call_operand.vmem [shape: bf16[16,32], index: 0, kind: input, shape index: {}]
  %s1 = inlined_call_operand.vmem [shape: bf16[32,64], index: 1, kind: input, shape index: {}]
  %s2 = inlined_call_operand.vmem [shape: f32[1,64], index: 2, kind: input, shape index: {}]
  %s3 = inlined_call_operand.vmem [shape: bf16[64,32], index: 3, kind: input, shape index: {}]
  %s4 = inlined_call_operand.vmem [shape: f32[1,32], index: 4, kind: input, shape index: {}]
  %s5 = inlined_call_operand.vmem [shape: f32[1,32], index: 5, kind: input, shape index: {}]
  %s6 = inlined_call_operand.vmem [shape: f32[1,32], index: 6, kind: input, shape index: {}]
  %s7 = inlined_call_operand.vmem [shape: f32[16,32], index: 7, kind: output, shape index: {}]
  %s8 = sld [smem:[#allocation0]]
  $region46: #{decoder_layer.5} parent=0
    _
  %s10 = ssub.s32 1, %s8
  %s11 = scalar_select 0, %s10, %s8
  // Predicated region
  $region2: #{decoder_layer.5} parent=0 // pred_check
    _
  $region3: #{decoder_layer.5} parent=0 // pred_check_branch
    %13 = sbr.rel (0) target = $region5
  $region4: #{decoder_layer.5} parent=0 // pred_region
    _
  $region5: #{decoder_layer.5} parent=0 // pred_fallthru
    _
  // Predicated region
  $region6: #{decoder_layer.5} parent=0 // pred_check
    _
  $region7: #{decoder_layer.5} parent=0 // pred_check_branch
    %15 = sbr.rel (0) target = $region9
  $region8: #{decoder_layer.5} parent=0 // pred_region
    _
  $region9: #{decoder_layer.5} parent=0 // pred_fallthru
    _
  // Predicated region
  $region10: #{decoder_layer.5} parent=0 // pred_check
    _
  $region11: #{decoder_layer.5} parent=0 // pred_check_branch
    %17 = sbr.rel (0) target = $region13
  $region12: #{decoder_layer.5} parent=0 // pred_region
    _
  $region13: #{decoder_layer.5} parent=0 // pred_fallthru
    _
  // Predicated region
  $region14: #{decoder_layer.5} parent=0 // pred_check
    _
  $region15: #{decoder_layer.5} parent=0 // pred_check_branch
    %19 = sbr.rel (0) target = $region17
  $region16: #{decoder_layer.5} parent=0 // pred_region
    _
  $region17: #{decoder_layer.5} parent=0 // pred_fallthru
    _
  // Predicated region
  $region18: #{decoder_layer.5} parent=0 // pred_check
    _
  $region19: #{decoder_layer.5} parent=0 // pred_check_branch
    %21 = sbr.rel (0) target = $region21
  $region20: #{decoder_layer.5} parent=0 // pred_region
    _
  $region21: #{decoder_layer.5} parent=0 // pred_fallthru
    _
  // Predicated region
  $region22: #{decoder_layer.5} parent=0 // pred_check
    _
  $region23: #{decoder_layer.5} parent=0 // pred_check_branch
    %23 = sbr.rel (0) target = $region25
  $region24: #{decoder_layer.5} parent=0 // pred_region
    _
  $region25: #{decoder_layer.5} parent=0 // pred_fallthru
    _
  // Predicated region
  $region26: #{decoder_layer.5} parent=0 // pred_check
    _
  $region27: #{decoder_layer.5} parent=0 // pred_check_branch
    %25 = sbr.rel (0) target = $region29
  $region28: #{decoder_layer.5} parent=0 // pred_region
    _
  $region29: #{decoder_layer.5} parent=0 // pred_fallthru
    _
  %p27 = scmp.eq.s32.totalorder 0, 0
  // Predicated region
  $region30: #{decoder_layer.5} parent=0 // pred_check
    %p28 = pneg %p27
  $region31: #{decoder_layer.5} parent=0 // pred_check_branch
    %30 = sbr.rel (%p28) target = $region33
  $region32: #{decoder_layer.5} parent=0 // pred_region
    %vm31 = vcmask 261120
    %32 = vst.msk [vmem:[#allocation2] sm:$0xff] %vm31, 0.0
    %33 = vst.msk [vmem:[#allocation2 + $0x8] sm:$0xff] %vm31, 0.0
  $region33: #{decoder_layer.5} parent=0 // pred_fallthru
    _
  %v34 = vld [vmem:[%s0] sm:$0xf]
  %v35 = vld [vmem:[%s0 + $0x4] sm:$0xf]
  %v36 = vld [vmem:[%s1] sm:$0xf]
  %v37 = vld [vmem:[%s1 + $0x4] sm:$0xf]
  %v38 = vld [vmem:[%s1 + $0x8] sm:$0xf]
  %v39 = vld [vmem:[%s1 + $0xc] sm:$0xf]
  %v40 = vld [vmem:[%s2] sm:$0x1]
  %v42 = vlaneseq
  %v43 = vshrl.u32 %v42, 7
  %v44 = vsub.s32 0, %v43
  %v45 = vrot.slane %v40, %v44
  %v49 = vunpack.c.l.b16 %v34
  %v50 = vunpack.c.l.b16 %v35
  %v51 = vpack.c.b16 %v50, %v49
  %v56 = vunpack.c.l.b16 %v36
  %v57 = vunpack.c.l.b16 %v37
  %v58 = vunpack.c.l.b16 %v38
  %v59 = vunpack.c.l.b16 %v39
  %v60 = vpack.c.b16 %v57, %v56
  %v61 = vpack.c.b16 %v59, %v58
  %vm64 = vcmask 261120
  %v66 = vsel %vm64, %v51, 0
  %68 = vmatprep.subr.bf16.mxu0 0
  %69 = vmatpush1.bf16.msra.mxu0 %v60
  %70 = vmatprep.subr.bf16.mxu0 0
  %71 = vmatpush1.bf16.msra.mxu0 %v61
  %72 = vmatprep.subr.bf16.mxu0 0
  %73 = vmatpush1.bf16.msra.mxu0 0
  %74 = vmatprep.subr.bf16.mxu0 0
  %75 = vmatpush1.bf16.msra.mxu0 0
  %76 = vmatprep.subr.bf16.mxu0 0
  %77 = vmatpush1.bf16.msra.mxu0 0
  %78 = vmatprep.subr.bf16.mxu0 0
  %79 = vmatpush1.bf16.msra.mxu0 0
  %80 = vmatprep.subr.bf16.mxu0 0
  %81 = vmatpush1.bf16.msra.mxu0 0
  %82 = vmatprep.subr.bf16.mxu0 0
  %83 = vmatpush1.bf16.msra.mxu0 0
  %84 = vmatprep.subr.bf16.mxu0 0
  %85 = vmatpush1.bf16.msra.mxu0 0
  %86 = vmatprep.subr.bf16.mxu0 0
  %87 = vmatpush1.bf16.msra.mxu0 0
  %88 = vmatprep.subr.bf16.mxu0 0
  %89 = vmatpush1.bf16.msra.mxu0 0
  %90 = vmatprep.subr.bf16.mxu0 0
  %91 = vmatpush1.bf16.msra.mxu0 0
  %92 = vmatprep.subr.bf16.mxu0 0
  %93 = vmatpush1.bf16.msra.mxu0 0
  %94 = vmatprep.subr.bf16.mxu0 0
  %95 = vmatpush1.bf16.msra.mxu0 0
  %96 = vmatprep.subr.bf16.mxu0 0
  %97 = vmatpush1.bf16.msra.mxu0 0
  %98 = vmatprep.subr.bf16.mxu0 0
  %99 = vmatpush1.bf16.msra.mxu0 0
  %100 = vmatprep.mubr.bf16.mxu0 0
  %101 = vmatmul.mubr.bf16.gmra.mrb[0].mxu0 %v66
  %v102 = vpop.f32.mrb[0].mxu0
  %v103 = vadd.f32 %v45, %v102
  %v104 = vpop.f32.mrb[0].mxu0
  %v105 = vpop.f32.mrb[0].mxu0
  %v106 = vadd.f32 %v45, %v105
  %v107 = vpop.f32.mrb[0].mxu0
  %108 = vdwg.mxu0
  %v109 = vmax.f32 %v103, 0.0
  %v110 = vmax.f32 %v106, 0.0
  %v111 = vld [vmem:[#allocation2] sm:$0xff]
  %v112 = vld [vmem:[#allocation2 + $0x8] sm:$0xff]
  %v113 = vpack.c.bf16 %v110, %v109
  %v114 = vld [vmem:[%s3] sm:$0xf]
  %v115 = vld [vmem:[%s3 + $0x4] sm:$0xf]
  %v116 = vld [vmem:[%s3 + $0x8] sm:$0xf]
  %v117 = vld [vmem:[%s3 + $0xc] sm:$0xf]
  %v118 = vld [vmem:[%s3 + $0x10] sm:$0xf]
  %v119 = vld [vmem:[%s3 + $0x14] sm:$0xf]
  %v120 = vld [vmem:[%s3 + $0x18] sm:$0xf]
  %v121 = vld [vmem:[%s3 + $0x1c] sm:$0xf]
  %v130 = vunpack.c.l.b16 %v114
  %v131 = vunpack.c.l.b16 %v115
  %v132 = vunpack.c.l.b16 %v116
  %v133 = vunpack.c.l.b16 %v117
  %v134 = vunpack.c.l.b16 %v118
  %v135 = vunpack.c.l.b16 %v119
  %v136 = vunpack.c.l.b16 %v120
  %v137 = vunpack.c.l.b16 %v121
  %v138 = vpack.c.b16 %v131, %v130
  %v139 = vpack.c.b16 %v133, %v132
  %v140 = vpack.c.b16 %v135, %v134
  %v141 = vpack.c.b16 %v137, %v136
  %vm146 = vcmask 523264
  %v148 = vsel %vm146, %v113, 0
  %150 = vmatprep.subr.bf16.mxu0 0
  %151 = vmatpush1.bf16.msra.mxu0 %v138
  %152 = vmatprep.subr.bf16.mxu0 0
  %153 = vmatpush1.bf16.msra.mxu0 %v139
  %154 = vmatprep.subr.bf16.mxu0 0
  %155 = vmatpush1.bf16.msra.mxu0 %v140
  %156 = vmatprep.subr.bf16.mxu0 0
  %157 = vmatpush1.bf16.msra.mxu0 %v141
  %158 = vmatprep.subr.bf16.mxu0 0
  %159 = vmatpush1.bf16.msra.mxu0 0
  %160 = vmatprep.subr.bf16.mxu0 0
  %161 = vmatpush1.bf16.msra.mxu0 0
  %162 = vmatprep.subr.bf16.mxu0 0
  %163 = vmatpush1.bf16.msra.mxu0 0
  %164 = vmatprep.subr.bf16.mxu0 0
  %165 = vmatpush1.bf16.msra.mxu0 0
  %166 = vmatprep.subr.bf16.mxu0 0
  %167 = vmatpush1.bf16.msra.mxu0 0
  %168 = vmatprep.subr.bf16.mxu0 0
  %169 = vmatpush1.bf16.msra.mxu0 0
  %170 = vmatprep.subr.bf16.mxu0 0
  %171 = vmatpush1.bf16.msra.mxu0 0
  %172 = vmatprep.subr.bf16.mxu0 0
  %173 = vmatpush1.bf16.msra.mxu0 0
  %174 = vmatprep.subr.bf16.mxu0 0
  %175 = vmatpush1.bf16.msra.mxu0 0
  %176 = vmatprep.subr.bf16.mxu0 0
  %177 = vmatpush1.bf16.msra.mxu0 0
  %178 = vmatprep.subr.bf16.mxu0 0
  %179 = vmatpush1.bf16.msra.mxu0 0
  %180 = vmatprep.subr.bf16.mxu0 0
  %181 = vmatpush1.bf16.msra.mxu0 0
  %182 = vmatprep.mubr.bf16.mxu0 0
  %183 = vmatmul.mubr.bf16.gmra.mrb[0].mxu0 %v148
  %v184 = vpop.f32.mrb[0].mxu0
  %v185 = vadd.f32 0.0, %v184
  %v186 = vpop.f32.mrb[0].mxu0
  %v187 = vpop.f32.mrb[0].mxu0
  %v188 = vadd.f32 0.0, %v187
  %v189 = vpop.f32.mrb[0].mxu0
  %190 = vdwg.mxu0
  %v191 = vadd.f32 %v111, %v185
  %v192 = vadd.f32 %v112, %v188
  %193 = vst.msk [vmem:[#allocation2] sm:$0xff] %vm64, %v191
  %194 = vst.msk [vmem:[#allocation2 + $0x8] sm:$0xff] %vm64, %v192
  // Predicated region
  $region34: #{decoder_layer.5} parent=0 // pred_check
    %p195 = pneg %p27
  $region35: #{decoder_layer.5} parent=0 // pred_check_branch
    %197 = sbr.rel (%p195) target = $region37
  $region36: #{decoder_layer.5} parent=0 // pred_region
    %v198 = vld [vmem:[#allocation2] sm:$0xff]
    %v199 = vld [vmem:[#allocation2 + $0x8] sm:$0xff]
    %v200 = vld [vmem:[%s4] sm:$0x1]
    %v202 = vlaneseq
    %v203 = vshrl.u32 %v202, 7
    %v204 = vsub.s32 0, %v203
    %v205 = vrot.slane %v200, %v204
    %v207 = vadd.f32 %v198, %v205
    %v208 = vadd.f32 %v199, %v205
    %v209 = vunpack.c.l.bf16 %v34
    %v210 = vunpack.c.l.bf16 %v35
    %v211 = vadd.f32 %v207, %v209
    %v212 = vadd.f32 %v208, %v210
    %v213 = vld [vmem:[%s5] sm:$0x1]
    %v214 = vld [vmem:[%s6] sm:$0x1]
    %v215 = vsel %vm64, %v211, 0.0
    %216 = vadd.xlane.f32.xlu0 %v215
    %v217 = vpop.xlane.xlu0 %216
    %v218 = vsel %vm64, %v212, 0.0
    %219 = vadd.xlane.f32.xlu0 %v218
    %v220 = vpop.xlane.xlu0 %219
    %v221 = vrcp.pop 32.0
    %v222 = vmul.f32 %v217, %v221
    %v223 = vmul.f32 %v220, %v221
    %v224 = vmul.f32 %v211, %v211
    %v225 = vmul.f32 %v212, %v212
    %v226 = vsel %vm64, %v224, 0.0
    %227 = vadd.xlane.f32.xlu0 %v226
    %v228 = vpop.xlane.xlu0 %227
    %v229 = vsel %vm64, %v225, 0.0
    %230 = vadd.xlane.f32.xlu0 %v229
    %v231 = vpop.xlane.xlu0 %230
    %v232 = vmul.f32 %v228, %v221
    %v233 = vmul.f32 %v231, %v221
    %v234 = vmul.f32 %v222, %v222
    %v235 = vmul.f32 %v223, %v223
    %v236 = vsub.f32 %v232, %v234
    %v237 = vsub.f32 %v233, %v235
    %v238 = vsub.f32 %v211, %v222
    %v239 = vsub.f32 %v212, %v223
    %v240 = vadd.f32 %v236, 1e-05
    %v241 = vadd.f32 %v237, 1e-05
    %v242 = vrsqrt.pop %v240
    %v243 = vrsqrt.pop %v241
    %v244 = vmul.f32 %v238, %v242
    %v245 = vmul.f32 %v239, %v243
    %v247 = vlaneseq
    %v248 = vshrl.u32 %v247, 7
    %v249 = vsub.s32 0, %v248
    %v250 = vrot.slane %v213, %v249
    %v252 = vmul.f32 %v244, %v250
    %v253 = vmul.f32 %v245, %v250
    %v255 = vlaneseq
    %v256 = vshrl.u32 %v255, 7
    %v257 = vsub.s32 0, %v256
    %v258 = vrot.slane %v214, %v257
    %v260 = vadd.f32 %v252, %v258
    %v261 = vadd.f32 %v253, %v258
    %262 = vst.msk [vmem:[%s7] sm:$0xff] %vm64, %v260
    %263 = vst.msk [vmem:[%s7 + $0x8] sm:$0xff] %vm64, %v261
  $region37: #{decoder_layer.5} parent=0 // pred_fallthru
    _
  // Predicated region
  $region38: #{decoder_layer.5} parent=0 // pred_check
    _
  $region39: #{decoder_layer.5} parent=0 // pred_check_branch
    %265 = sbr.rel (0) target = $region41
  $region40: #{decoder_layer.5} parent=0 // pred_region
    _
  $region41: #{decoder_layer.5} parent=0 // pred_fallthru
    _
  // Predicated region
  $region42: #{decoder_layer.5} parent=0 // pred_check
    _
  $region43: #{decoder_layer.5} parent=0 // pred_check_branch
    %267 = sbr.rel (0) target = $region45
  $region44: #{decoder_layer.5} parent=0 // pred_region
    _
  $region45: #{decoder_layer.5} parent=0 // pred_fallthru
    _

// kernel: decoder_layer.3
$region0: #{decoder_layer.3}
  #allocation0 [shape = 'u32[]', space=smem, size = 0x4, offset = 0x4, fixed_abs, tag = 'smem constant byte address 0x4 - core index']
  #allocation1 [shape = 'u32[144,128]{1,0:T(1,128)}', space=vmem, size = 0x12000, scoped, tag = 'internal scratch']
  %s0 = inlined_call_operand.vmem [shape: f32[16,32], index: 0, kind: input, shape index: {}]
  %s1 = inlined_call_operand.vmem [shape: bf16[32,96], index: 1, kind: input, shape index: {}]
  %s2 = inlined_call_operand.vmem [shape: f32[1,96], index: 2, kind: input, shape index: {}]
  %s3 = inlined_call_operand.vmem [shape: bf16[32,32], index: 3, kind: input, shape index: {}]
  %s4 = inlined_call_operand.vmem [shape: f32[1,32], index: 4, kind: input, shape index: {}]
  %s5 = inlined_call_operand.vmem [shape: f32[1,32], index: 5, kind: input, shape index: {}]
  %s6 = inlined_call_operand.vmem [shape: f32[1,32], index: 6, kind: input, shape index: {}]
  %s7 = inlined_call_operand.vmem [shape: bf16[16,32], index: 7, kind: output, shape index: {}]
  %s8 = sld [smem:[#allocation0]]
  $region61: #{decoder_layer.3} parent=0
    _
  %s10 = ssub.s32 1, %s8
  %s11 = scalar_select 0, %s10, %s8
  loop: start=0, step=1, limit=4
  $region2: #{decoder_layer.3} parent=0 // loop_pre_header
    _
  $region3: #{decoder_layer.3} parent=0 // loop_header
    %s13 = sphi 0, %s17
    %p14 = scmp.ge.s32.totalorder %s13, 4
    %s23 = sphi 0, %s25
    %s26 = sphi 0, %s23
    %s27 = sphi 0, %s26
    %s43 = sphi 0, %s27
    %s47 = sphi 0, %s47
    %s49 = sphi 0, %s47
    %s50 = sphi 0, %s49
    %s64 = sphi 0, %s50
    %s68 = sphi 0, %s68
    %s70 = sphi 0, %s68
    %s71 = sphi 0, %s70
    %s85 = sphi 0, %s71
    %s89 = sphi 0, %s89
    %s91 = sphi 0, %s89
    %s92 = sphi 0, %s91
    %s106 = sphi 0, %s92
    %s110 = sphi 0, %s110
    %s112 = sphi 0, %s110
    %s113 = sphi 0, %s112
    %s127 = sphi 0, %s113
    %s131 = sphi 0, %s131
    %s133 = sphi 0, %s131
    %s134 = sphi 0, %s133
    %s148 = sphi 0, %s134
    %s152 = sphi 0, %s152
    %s154 = sphi 0, %s152
    %s155 = sphi 0, %s154
    %s169 = sphi 0, %s155
    %s175 = sphi 0, %s177
    %s178 = sphi 0, %s175
    %s179 = sphi 0, %s178
    %s195 = sphi 0, %s179
  $region4: #{decoder_layer.3} parent=0 // loop_header_branch
    %16 = sbr.rel (%p14) target = $region8
  $region5: #{decoder_layer.3} parent=0 // loop_body
    %s18 = ssub.s32 %s13, 1
    %s19 = ssub.s32 %s13, 2
    %s20 = sadd.s32 %s13, 1
    %s21 = ssub.s32 %s13, %s20
    %p22 = scmp.eq.s32.totalorder %s21, 0
    %s24 = sadd.s32 %s23, 1
    %s25 = scalar_select %p22, %s23, %s24
    %p28 = pneg %p22
    %p29 = scmp.eq.s32.totalorder %s13, 1
    %p30 = por %p28, %p29
    %p31 = scmp.ne.s32.totalorder %s23, %s26
    %p32 = scmp.eq.s32.totalorder %s13, 0
    %p33 = por %p31, %p32
    %p34 = scmp.ne.s32.totalorder %s23, %s26
    %p35 = scmp.eq.s32.totalorder %s18, 1
    %p36 = por %p34, %p35
    %p37 = scmp.ne.s32.totalorder %s26, %s27
    %p38 = scmp.eq.s32.totalorder %s18, 0
    %p39 = por %p37, %p38
    %p40 = scmp.ne.s32.totalorder %s26, %s27
    %p41 = scmp.eq.s32.totalorder %s19, 1
    %p42 = por %p40, %p41
    %p44 = scmp.ne.s32.totalorder %s27, %s43
    %p45 = scmp.eq.s32.totalorder %s19, 0
    %p46 = por %p44, %p45
    %s48 = sadd.s32 %s47, 1
    %p51 = scmp.eq.s32.totalorder %s13, 1
    %p52 = scmp.ne.s32.totalorder %s47, %s49
    %p53 = scmp.eq.s32.totalorder %s13, 0
    %p54 = por %p52, %p53
    %p55 = scmp.ne.s32.totalorder %s47, %s49
    %p56 = scmp.eq.s32.totalorder %s18, 1
    %p57 = por %p55, %p56
    %p58 = scmp.ne.s32.totalorder %s49, %s50
    %p59 = scmp.eq.s32.totalorder %s18, 0
    %p60 = por %p58, %p59
    %p61 = scmp.ne.s32.totalorder %s49, %s50
    %p62 = scmp.eq.s32.totalorder %s19, 1
    %p63 = por %p61, %p62
    %p65 = scmp.ne.s32.totalorder %s50, %s64
    %p66 = scmp.eq.s32.totalorder %s19, 0
    %p67 = por %p65, %p66
    %s69 = sadd.s32 %s68, 1
    %p72 = scmp.eq.s32.totalorder %s13, 1
    %p73 = scmp.ne.s32.totalorder %s68, %s70
    %p74 = scmp.eq.s32.totalorder %s13, 0
    %p75 = por %p73, %p74
    %p76 = scmp.ne.s32.totalorder %s68, %s70
    %p77 = scmp.eq.s32.totalorder %s18, 1
    %p78 = por %p76, %p77
    %p79 = scmp.ne.s32.totalorder %s70, %s71
    %p80 = scmp.eq.s32.totalorder %s18, 0
    %p81 = por %p79, %p80
    %p82 = scmp.ne.s32.totalorder %s70, %s71
    %p83 = scmp.eq.s32.totalorder %s19, 1
    %p84 = por %p82, %p83
    %p86 = scmp.ne.s32.totalorder %s71, %s85
    %p87 = scmp.eq.s32.totalorder %s19, 0
    %p88 = por %p86, %p87
    %s90 = sadd.s32 %s89, 1
    %p93 = scmp.eq.s32.totalorder %s13, 1
    %p94 = scmp.ne.s32.totalorder %s89, %s91
    %p95 = scmp.eq.s32.totalorder %s13, 0
    %p96 = por %p94, %p95
    %p97 = scmp.ne.s32.totalorder %s89, %s91
    %p98 = scmp.eq.s32.totalorder %s18, 1
    %p99 = por %p97, %p98
    %p100 = scmp.ne.s32.totalorder %s91, %s92
    %p101 = scmp.eq.s32.totalorder %s18, 0
    %p102 = por %p100, %p101
    %p103 = scmp.ne.s32.totalorder %s91, %s92
    %p104 = scmp.eq.s32.totalorder %s19, 1
    %p105 = por %p103, %p104
    %p107 = scmp.ne.s32.totalorder %s92, %s106
    %p108 = scmp.eq.s32.totalorder %s19, 0
    %p109 = por %p107, %p108
    %s111 = sadd.s32 %s110, 1
    %p114 = scmp.eq.s32.totalorder %s13, 1
    %p115 = scmp.ne.s32.totalorder %s110, %s112
    %p116 = scmp.eq.s32.totalorder %s13, 0
    %p117 = por %p115, %p116
    %p118 = scmp.ne.s32.totalorder %s110, %s112
    %p119 = scmp.eq.s32.totalorder %s18, 1
    %p120 = por %p118, %p119
    %p121 = scmp.ne.s32.totalorder %s112, %s113
    %p122 = scmp.eq.s32.totalorder %s18, 0
    %p123 = por %p121, %p122
    %p124 = scmp.ne.s32.totalorder %s112, %s113
    %p125 = scmp.eq.s32.totalorder %s19, 1
    %p126 = por %p124, %p125
    %p128 = scmp.ne.s32.totalorder %s113, %s127
    %p129 = scmp.eq.s32.totalorder %s19, 0
    %p130 = por %p128, %p129
    %s132 = sadd.s32 %s131, 1
    %p135 = scmp.eq.s32.totalorder %s13, 1
    %p136 = scmp.ne.s32.totalorder %s131, %s133
    %p137 = scmp.eq.s32.totalorder %s13, 0
    %p138 = por %p136, %p137
    %p139 = scmp.ne.s32.totalorder %s131, %s133
    %p140 = scmp.eq.s32.totalorder %s18, 1
    %p141 = por %p139, %p140
    %p142 = scmp.ne.s32.totalorder %s133, %s134
    %p143 = scmp.eq.s32.totalorder %s18, 0
    %p144 = por %p142, %p143
    %p145 = scmp.ne.s32.totalorder %s133, %s134
    %p146 = scmp.eq.s32.totalorder %s19, 1
    %p147 = por %p145, %p146
    %p149 = scmp.ne.s32.totalorder %s134, %s148
    %p150 = scmp.eq.s32.totalorder %s19, 0
    %p151 = por %p149, %p150
    %s153 = sadd.s32 %s152, 1
    %p156 = scmp.eq.s32.totalorder %s13, 1
    %p157 = scmp.ne.s32.totalorder %s152, %s154
    %p158 = scmp.eq.s32.totalorder %s13, 0
    %p159 = por %p157, %p158
    %p160 = scmp.ne.s32.totalorder %s152, %s154
    %p161 = scmp.eq.s32.totalorder %s18, 1
    %p162 = por %p160, %p161
    %p163 = scmp.ne.s32.totalorder %s154, %s155
    %p164 = scmp.eq.s32.totalorder %s18, 0
    %p165 = por %p163, %p164
    %p166 = scmp.ne.s32.totalorder %s154, %s155
    %p167 = scmp.eq.s32.totalorder %s19, 1
    %p168 = por %p166, %p167
    %p170 = scmp.ne.s32.totalorder %s155, %s169
    %p171 = scmp.eq.s32.totalorder %s19, 0
    %p172 = por %p170, %p171
    %s173 = ssub.s32 %s13, %s20
    %p174 = scmp.eq.s32.totalorder %s173, 0
    %s176 = sadd.s32 %s175, 1
    %s177 = scalar_select %p174, %s175, %s176
    %p180 = pneg %p174
    %p181 = scmp.eq.s32.totalorder %s13, 1
    %p182 = por %p180, %p181
    %p183 = scmp.ne.s32.totalorder %s175, %s178
    %p184 = scmp.eq.s32.totalorder %s13, 0
    %p185 = por %p183, %p184
    %p186 = scmp.ne.s32.totalorder %s175, %s178
    %p187 = scmp.eq.s32.totalorder %s18, 1
    %p188 = por %p186, %p187
    %p189 = scmp.ne.s32.totalorder %s178, %s179
    %p190 = scmp.eq.s32.totalorder %s18, 0
    %p191 = por %p189, %p190
    %p192 = scmp.ne.s32.totalorder %s178, %s179
    %p193 = scmp.eq.s32.totalorder %s19, 1
    %p194 = por %p192, %p193
    %p196 = scmp.ne.s32.totalorder %s179, %s195
    %p197 = scmp.eq.s32.totalorder %s19, 0
    %p198 = por %p196, %p197
    %p199 = scmp.le.s32.totalorder 1, %s13
    %p200 = scmp.lt.s32.totalorder %s13, 3
    %p201 = pnand %p199, %p200
    %p202 = pneg %p201
    // Predicated region
    $region9: #{decoder_layer.3} parent=5 // pred_check
      _
    $region10: #{decoder_layer.3} parent=5 // pred_check_branch
      %204 = sbr.rel (%p201) target = $region12
    $region11: #{decoder_layer.3} parent=5 // pred_region
      %s205 = ssub.s32 %s13, 1
      // Predicated region
      $region13: #{decoder_layer.3} parent=11 // pred_check
        %p206 = pneg %p60
      $region14: #{decoder_layer.3} parent=11 // pred_check_branch
        %208 = sbr.rel (%p206) target = $region16
      $region15: #{decoder_layer.3} parent=11 // pred_region
        _
      $region16: #{decoder_layer.3} parent=11 // pred_fallthru
        _
      // Predicated region
      $region17: #{decoder_layer.3} parent=11 // pred_check
        %p209 = pneg %p81
      $region18: #{decoder_layer.3} parent=11 // pred_check_branch
        %211 = sbr.rel (%p209) target = $region20
      $region19: #{decoder_layer.3} parent=11 // pred_region
        _
      $region20: #{decoder_layer.3} parent=11 // pred_fallthru
        _
      // Predicated region
      $region21: #{decoder_layer.3} parent=11 // pred_check
        %p212 = pneg %p102
      $region22: #{decoder_layer.3} parent=11 // pred_check_branch
        %214 = sbr.rel (%p212) target = $region24
      $region23: #{decoder_layer.3} parent=11 // pred_region
        _
      $region24: #{decoder_layer.3} parent=11 // pred_fallthru
        _
      // Predicated region
      $region25: #{decoder_layer.3} parent=11 // pred_check
        %p215 = pneg %p123
      $region26: #{decoder_layer.3} parent=11 // pred_check_branch
        %217 = sbr.rel (%p215) target = $region28
      $region27: #{decoder_layer.3} parent=11 // pred_region
        _
      $region28: #{decoder_layer.3} parent=11 // pred_fallthru
        _
      // Predicated region
      $region29: #{decoder_layer.3} parent=11 // pred_check
        %p218 = pneg %p144
      $region30: #{decoder_layer.3} parent=11 // pred_check_branch
        %220 = sbr.rel (%p218) target = $region32
      $region31: #{decoder_layer.3} parent=11 // pred_region
        _
      $region32: #{decoder_layer.3} parent=11 // pred_fallthru
        _
      // Predicated region
      $region33: #{decoder_layer.3} parent=11 // pred_check
        %p221 = pneg %p165
      $region34: #{decoder_layer.3} parent=11 // pred_check_branch
        %223 = sbr.rel (%p221) target = $region36
      $region35: #{decoder_layer.3} parent=11 // pred_region
        _
      $region36: #{decoder_layer.3} parent=11 // pred_fallthru
        _
    $region12: #{decoder_layer.3} parent=5 // pred_fallthru
      _
    %p224 = scmp.lt.s32.totalorder %s13, 2
    // Predicated region
    $region37: #{decoder_layer.3} parent=5 // pred_check
      %p225 = pneg %p224
    $region38: #{decoder_layer.3} parent=5 // pred_check_branch
      %227 = sbr.rel (%p225) target = $region40
    $region39: #{decoder_layer.3} parent=5 // pred_region
      // Predicated region
      $region41: #{decoder_layer.3} parent=39 // pred_check
        %p228 = pneg %p33
      $region42: #{decoder_layer.3} parent=39 // pred_check_branch
        %230 = sbr.rel (%p228) target = $region44
      $region43: #{decoder_layer.3} parent=39 // pred_region
        %p231 = scmp.lt.s32.totalorder %s13, 1
        %s232 = scalar_select %p231, %s13, 1
        %s233 = smul.addr %s232, 8
        %s234 = scalar_lea.vmem %s0, %s233
      $region44: #{decoder_layer.3} parent=39 // pred_fallthru
        _
    $region40: #{decoder_layer.3} parent=5 // pred_fallthru
      _
    %p235 = scmp.le.s32.totalorder 1, %s13
    %p236 = scmp.lt.s32.totalorder %s13, 3
    %p237 = pnand %p235, %p236
    %p238 = pneg %p237
    // Predicated region
    $region45: #{decoder_layer.3} parent=5 // pred_check
      _
    $region46: #{decoder_layer.3} parent=5 // pred_check_branch
      %240 = sbr.rel (%p237) target = $region48
    $region47: #{decoder_layer.3} parent=5 // pred_region
      %s241 = ssub.s32 %s13, 1
      %p242 = scmp.lt.s32.totalorder %s18, 1
      %s243 = scalar_select %p242, %s18, 1
      %s244 = smul.addr %s243, 8
      %s245 = scalar_lea.vmem %s0, %s244
      %p246 = pneg %p39
      %p247 = pneg %p36
      %p248 = pneg %p60
      %p249 = pneg %p57
      %p250 = pneg %p81
      %p251 = pneg %p78
      %p252 = pneg %p102
      %p253 = pneg %p99
      %p254 = pneg %p123
      %p255 = pneg %p120
      %p256 = pneg %p144
      %p257 = pneg %p141
      %p258 = pneg %p165
      %p259 = pneg %p162
      %p260 = pneg %p191
      %p261 = pneg %p188
      %p262 = scmp.lt.s32.totalorder %s18, 1
      %s263 = scalar_select %p262, %s18, 1
      %s264 = smul.addr %s263, 4
      %s265 = scalar_lea.vmem %s7, %s264
      %p266 = scmp.lt.s32.totalorder %s18, 1
      %s267 = scalar_select %p266, %s18, 1
      %s268 = smul.addr %s267, 8
      %s269 = scalar_lea.vmem %s0, %s268
      %p270 = scmp.lt.s32.totalorder %s18, 1
      %s271 = scalar_select %p270, %s18, 1
      %s272 = smul.addr %s271, 4
      %s273 = scalar_lea.vmem %s7, %s272
      %v275 = vld [vmem:[%s269] sm:$0xff]
      %v276 = vpack.c.bf16 %v275, %v275
      %v277 = vld [vmem:[%s1] sm:$0xf]
      %v278 = vld [vmem:[%s1 + $0x4] sm:$0xf]
      %v279 = vld [vmem:[%s1 + $0x8] sm:$0xf]
      %v280 = vld [vmem:[%s1 + $0xc] sm:$0xf]
      %v281 = vld [vmem:[%s2] sm:$0x1]
      %v283 = vlaneseq
      %v284 = vshrl.u32 %v283, 7
      %v285 = vsub.s32 0, %v284
      %v286 = vrot.slane %v281, %v285
      %v292 = vunpack.c.l.b16 %v277
      %v293 = vunpack.c.l.b16 %v278
      %v294 = vunpack.c.l.b16 %v279
      %v295 = vunpack.c.l.b16 %v280
      %v296 = vpack.c.b16 %v293, %v292
      %v297 = vpack.c.b16 %v295, %v294
      %vm300 = vcmask 261120
      %v302 = vsel %vm300, %v276, 0
      %304 = vmatprep.subr.bf16.mxu0 0
      %305 = vmatpush1.bf16.msra.mxu0 %v296
      %306 = vmatprep.subr.bf16.mxu0 0
      %307 = vmatpush1.bf16.msra.mxu0 %v297
      %308 = vmatprep.subr.bf16.mxu0 0
      %309 = vmatpush1.bf16.msra.mxu0 0
      %310 = vmatprep.subr.bf16.mxu0 0
      %311 = vmatpush1.bf16.msra.mxu0 0
      %312 = vmatprep.subr.bf16.mxu0 0
      %313 = vmatpush1.bf16.msra.mxu0 0
      %314 = vmatprep.subr.bf16.mxu0 0
      %315 = vmatpush1.bf16.msra.mxu0 0
      %316 = vmatprep.subr.bf16.mxu0 0
      %317 = vmatpush1.bf16.msra.mxu0 0
      %318 = vmatprep.subr.bf16.mxu0 0
      %319 = vmatpush1.bf16.msra.mxu0 0
      %320 = vmatprep.subr.bf16.mxu0 0
      %321 = vmatpush1.bf16.msra.mxu0 0
      %322 = vmatprep.subr.bf16.mxu0 0
      %323 = vmatpush1.bf16.msra.mxu0 0
      %324 = vmatprep.subr.bf16.mxu0 0
      %325 = vmatpush1.bf16.msra.mxu0 0
      %326 = vmatprep.subr.bf16.mxu0 0
      %327 = vmatpush1.bf16.msra.mxu0 0
      %328 = vmatprep.subr.bf16.mxu0 0
      %329 = vmatpush1.bf16.msra.mxu0 0
      %330 = vmatprep.subr.bf16.mxu0 0
      %331 = vmatpush1.bf16.msra.mxu0 0
      %332 = vmatprep.subr.bf16.mxu0 0
      %333 = vmatpush1.bf16.msra.mxu0 0
      %334 = vmatprep.subr.bf16.mxu0 0
      %335 = vmatpush1.bf16.msra.mxu0 0
      %336 = vmatprep.mubr.bf16.mxu0 0
      %337 = vmatmul.mubr.bf16.gmra.mrb[0].mxu0 %v302
      %v338 = vpop.f32.mrb[0].mxu0
      %v339 = vadd.f32 %v286, %v338
      %v340 = vpop.f32.mrb[0].mxu0
      %v341 = vpop.f32.mrb[0].mxu0
      %v342 = vpop.f32.mrb[0].mxu0
      %343 = vdwg.mxu0
      %v344 = vpack.c.bf16 %v339, %v339
      %346 = vrot.lane.b32.xlu0 %v344, 96
      %v347 = vpop.permute.xlu0 %346
      %vm348 = vcmask 64512
      %v350 = vsel %vm348, %v344, 0
      %v353 = vsel %vm348, %v347, 0
      %355 = vmatprep.subr.bf16.mxu0 0
      %356 = vmatpush1.bf16.xpose.msra.mxu0 %v353
      %357 = vmatprep.subr.bf16.mxu0 0
      %358 = vmatpush1.bf16.xpose.msra.mxu0 0
      %359 = vmatprep.subr.bf16.mxu0 0
      %360 = vmatpush1.bf16.xpose.msra.mxu0 0
      %361 = vmatprep.subr.bf16.mxu0 0
      %362 = vmatpush1.bf16.xpose.msra.mxu0 0
      %363 = vmatprep.subr.bf16.mxu0 0
      %364 = vmatpush1.bf16.xpose.msra.mxu0 0
      %365 = vmatprep.subr.bf16.mxu0 0
      %366 = vmatpush1.bf16.xpose.msra.mxu0 0
      %367 = vmatprep.subr.bf16.mxu0 0
      %368 = vmatpush1.bf16.xpose.msra.mxu0 0
      %369 = vmatprep.subr.bf16.mxu0 0
      %370 = vmatpush1.bf16.xpose.msra.mxu0 0
      %371 = vmatprep.subr.bf16.mxu0 0
      %372 = vmatpush1.bf16.xpose.msra.mxu0 0
      %373 = vmatprep.subr.bf16.mxu0 0
      %374 = vmatpush1.bf16.xpose.msra.mxu0 0
      %375 = vmatprep.subr.bf16.mxu0 0
      %376 = vmatpush1.bf16.xpose.msra.mxu0 0
      %377 = vmatprep.subr.bf16.mxu0 0
      %378 = vmatpush1.bf16.xpose.msra.mxu0 0
      %379 = vmatprep.subr.bf16.mxu0 0
      %380 = vmatpush1.bf16.xpose.msra.mxu0 0
      %381 = vmatprep.subr.bf16.mxu0 0
      %382 = vmatpush1.bf16.xpose.msra.mxu0 0
      %383 = vmatprep.subr.bf16.mxu0 0
      %384 = vmatpush1.bf16.xpose.msra.mxu0 0
      %385 = vmatprep.subr.bf16.mxu0 0
      %386 = vmatpush1.bf16.xpose.msra.mxu0 0
      %387 = vmatprep.mubr.bf16.mxu0 0
      %388 = vmatmul.mubr.bf16.gmra.mrb[0].mxu0 %v350
      %v389 = vpop.f32.mrb[0].mxu0
      %v390 = vadd.f32 0.0, %v389
      %v391 = vpop.f32.mrb[0].mxu0
      %v392 = vpop.f32.mrb[0].mxu0
      %v393 = vpop.f32.mrb[0].mxu0
      %394 = vdwg.mxu0
      %v395 = vsel %vm348, %v390, -inf
      %396 = vmax.xlane.f32.xlu0 %v395
      %v397 = vpop.xlane.xlu0 %396
      %v398 = vsub.f32 %v390, %v397
      %v399 = vmul.f32 %v398, 1.442695
      %v400 = vpow.pop %v399
      %v401 = vsel %vm348, %v400, 0.0
      %402 = vadd.xlane.f32.xlu0 %v401
      %v403 = vpop.xlane.xlu0 %402
      %v404 = vrcp.pop %v403
      %v405 = vmul.f32 %v400, %v404
      %v406 = vpack.c.bf16 %v405, %v405
      %407 = vrot.lane.b32.xlu0 %v344, 64
      %v408 = vpop.permute.xlu0 %407
      %v410 = vsel %vm348, %v406, 0
      %vm412 = vcmask 1043456
      %v414 = vsel %vm412, %v408, 0
      %416 = vmatprep.subr.bf16.mxu0 0
      %417 = vmatpush1.bf16.msra.mxu0 %v414
      %418 = vmatprep.subr.bf16.mxu0 0
      %419 = vmatpush1.bf16.msra.mxu0 0
      %420 = vmatprep.subr.bf16.mxu0 0
      %421 = vmatpush1.bf16.msra.mxu0 0
      %422 = vmatprep.subr.bf16.mxu0 0
      %423 = vmatpush1.bf16.msra.mxu0 0
      %424 = vmatprep.subr.bf16.mxu0 0
      %425 = vmatpush1.bf16.msra.mxu0 0
      %426 = vmatprep.subr.bf16.mxu0 0
      %427 = vmatpush1.bf16.msra.mxu0 0
      %428 = vmatprep.subr.bf16.mxu0 0
      %429 = vmatpush1.bf16.msra.mxu0 0
      %430 = vmatprep.subr.bf16.mxu0 0
      %431 = vmatpush1.bf16.msra.mxu0 0
      %432 = vmatprep.subr.bf16.mxu0 0
      %433 = vmatpush1.bf16.msra.mxu0 0
      %434 = vmatprep.subr.bf16.mxu0 0
      %435 = vmatpush1.bf16.msra.mxu0 0
      %436 = vmatprep.subr.bf16.mxu0 0
      %437 = vmatpush1.bf16.msra.mxu0 0
      %438 = vmatprep.subr.bf16.mxu0 0
      %439 = vmatpush1.bf16.msra.mxu0 0
      %440 = vmatprep.subr.bf16.mxu0 0
      %441 = vmatpush1.bf16.msra.mxu0 0
      %442 = vmatprep.subr.bf16.mxu0 0
      %443 = vmatpush1.bf16.msra.mxu0 0
      %444 = vmatprep.subr.bf16.mxu0 0
      %445 = vmatpush1.bf16.msra.mxu0 0
      %446 = vmatprep.subr.bf16.mxu0 0
      %447 = vmatpush1.bf16.msra.mxu0 0
      %448 = vmatprep.mubr.bf16.mxu0 0
      %449 = vmatmul.mubr.bf16.gmra.mrb[0].mxu0 %v410
      %v450 = vpop.f32.mrb[0].mxu0
      %v451 = vadd.f32 0.0, %v450
      %v452 = vpop.f32.mrb[0].mxu0
      %v453 = vpop.f32.mrb[0].mxu0
      %v454 = vpop.f32.mrb[0].mxu0
      %455 = vdwg.mxu0
      %456 = vrot.lane.b32.xlu0 %v344, 120
      %v457 = vpop.permute.xlu0 %456
      %458 = vrot.lane.b32.xlu0 %v344, 88
      %v459 = vpop.permute.xlu0 %458
      %v461 = vsel %vm348, %v457, 0
      %v464 = vsel %vm348, %v459, 0
      %466 = vmatprep.subr.bf16.mxu0 0
      %467 = vmatpush1.bf16.xpose.msra.mxu0 %v464
      %468 = vmatprep.subr.bf16.mxu0 0
      %469 = vmatpush1.bf16.xpose.msra.mxu0 0
      %470 = vmatprep.subr.bf16.mxu0 0
      %471 = vmatpush1.bf16.xpose.msra.mxu0 0
      %472 = vmatprep.subr.bf16.mxu0 0
      %473 = vmatpush1.bf16.xpose.msra.mxu0 0
      %474 = vmatprep.subr.bf16.mxu0 0
      %475 = vmatpush1.bf16.xpose.msra.mxu0 0
      %476 = vmatprep.subr.bf16.mxu0 0
      %477 = vmatpush1.bf16.xpose.msra.mxu0 0
      %478 = vmatprep.subr.bf16.mxu0 0
      %479 = vmatpush1.bf16.xpose.msra.mxu0 0
      %480 = vmatprep.subr.bf16.mxu0 0
      %481 = vmatpush1.bf16.xpose.msra.mxu0 0
      %482 = vmatprep.subr.bf16.mxu0 0
      %483 = vmatpush1.bf16.xpose.msra.mxu0 0
      %484 = vmatprep.subr.bf16.mxu0 0
      %485 = vmatpush1.bf16.xpose.msra.mxu0 0
      %486 = vmatprep.subr.bf16.mxu0 0
      %487 = vmatpush1.bf16.xpose.msra.mxu0 0
      %488 = vmatprep.subr.bf16.mxu0 0
      %489 = vmatpush1.bf16.xpose.msra.mxu0 0
      %490 = vmatprep.subr.bf16.mxu0 0
      %491 = vmatpush1.bf16.xpose.msra.mxu0 0
      %492 = vmatprep.subr.bf16.mxu0 0
      %493 = vmatpush1.bf16.xpose.msra.mxu0 0
      %494 = vmatprep.subr.bf16.mxu0 0
      %495 = vmatpush1.bf16.xpose.msra.mxu0 0
      %496 = vmatprep.subr.bf16.mxu0 0
      %497 = vmatpush1.bf16.xpose.msra.mxu0 0
      %498 = vmatprep.mubr.bf16.mxu0 0
      %499 = vmatmul.mubr.bf16.gmra.mrb[0].mxu0 %v461
      %v500 = vpop.f32.mrb[0].mxu0
      %v501 = vadd.f32 0.0, %v500
      %v502 = vpop.f32.mrb[0].mxu0
      %v503 = vpop.f32.mrb[0].mxu0
      %v504 = vpop.f32.mrb[0].mxu0
      %505 = vdwg.mxu0
      %v506 = vsel %vm348, %v501, -inf
      %507 = vmax.xlane.f32.xlu0 %v506
      %v508 = vpop.xlane.xlu0 %507
      %v509 = vsub.f32 %v501, %v508
      %v510 = vmul.f32 %v509, 1.442695
      %v511 = vpow.pop %v510
      %v512 = vsel %vm348, %v511, 0.0
      %513 = vadd.xlane.f32.xlu0 %v512
      %v514 = vpop.xlane.xlu0 %513
      %v515 = vrcp.pop %v514
      %v516 = vmul.f32 %v511, %v515
      %v517 = vpack.c.bf16 %v516, %v516
      %518 = vrot.lane.b32.xlu0 %v344, 56
      %v519 = vpop.permute.xlu0 %518
      %v521 = vsel %vm348, %v517, 0
      %v524 = vsel %vm412, %v519, 0
      %526 = vmatprep.subr.bf16.mxu0 0
      %527 = vmatpush1.bf16.msra.mxu0 %v524
      %528 = vmatprep.subr.bf16.mxu0 0
      %529 = vmatpush1.bf16.msra.mxu0 0
      %530 = vmatprep.subr.bf16.mxu0 0
      %531 = vmatpush1.bf16.msra.mxu0 0
      %532 = vmatprep.subr.bf16.mxu0 0
      %533 = vmatpush1.bf16.msra.mxu0 0
      %534 = vmatprep.subr.bf16.mxu0 0
      %535 = vmatpush1.bf16.msra.mxu0 0
      %536 = vmatprep.subr.bf16.mxu0 0
      %537 = vmatpush1.bf16.msra.mxu0 0
      %538 = vmatprep.subr.bf16.mxu0 0
      %539 = vmatpush1.bf16.msra.mxu0 0
      %540 = vmatprep.subr.bf16.mxu0 0
      %541 = vmatpush1.bf16.msra.mxu0 0
      %542 = vmatprep.subr.bf16.mxu0 0
      %543 = vmatpush1.bf16.msra.mxu0 0
      %544 = vmatprep.subr.bf16.mxu0 0
      %545 = vmatpush1.bf16.msra.mxu0 0
      %546 = vmatprep.subr.bf16.mxu0 0
      %547 = vmatpush1.bf16.msra.mxu0 0
      %548 = vmatprep.subr.bf16.mxu0 0
      %549 = vmatpush1.bf16.msra.mxu0 0
      %550 = vmatprep.subr.bf16.mxu0 0
      %551 = vmatpush1.bf16.msra.mxu0 0
      %552 = vmatprep.subr.bf16.mxu0 0
      %553 = vmatpush1.bf16.msra.mxu0 0
      %554 = vmatprep.subr.bf16.mxu0 0
      %555 = vmatpush1.bf16.msra.mxu0 0
      %556 = vmatprep.subr.bf16.mxu0 0
      %557 = vmatpush1.bf16.msra.mxu0 0
      %558 = vmatprep.mubr.bf16.mxu0 0
      %559 = vmatmul.mubr.bf16.gmra.mrb[0].mxu0 %v521
      %v560 = vpop.f32.mrb[0].mxu0
      %v561 = vadd.f32 0.0, %v560
      %v562 = vpop.f32.mrb[0].mxu0
      %v563 = vpop.f32.mrb[0].mxu0
      %v564 = vpop.f32.mrb[0].mxu0
      %565 = vdwg.mxu0
      %566 = vrot.lane.b32.xlu0 %v344, 112
      %v567 = vpop.permute.xlu0 %566
      %568 = vrot.lane.b32.xlu0 %v344, 80
      %v569 = vpop.permute.xlu0 %568
      %v571 = vsel %vm348, %v567, 0
      %v574 = vsel %vm348, %v569, 0
      %576 = vmatprep.subr.bf16.mxu0 0
      %577 = vmatpush1.bf16.xpose.msra.mxu0 %v574
      %578 = vmatprep.subr.bf16.mxu0 0
      %579 = vmatpush1.bf16.xpose.msra.mxu0 0
      %580 = vmatprep.subr.bf16.mxu0 0
      %581 = vmatpush1.bf16.xpose.msra.mxu0 0
      %582 = vmatprep.subr.bf16.mxu0 0
      %583 = vmatpush1.bf16.xpose.msra.mxu0 0
      %584 = vmatprep.subr.bf16.mxu0 0
      %585 = vmatpush1.bf16.xpose.msra.mxu0 0
      %586 = vmatprep.subr.bf16.mxu0 0
      %587 = vmatpush1.bf16.xpose.msra.mxu0 0
      %588 = vmatprep.subr.bf16.mxu0 0
      %589 = vmatpush1.bf16.xpose.msra.mxu0 0
      %590 = vmatprep.subr.bf16.mxu0 0
      %591 = vmatpush1.bf16.xpose.msra.mxu0 0
      %592 = vmatprep.subr.bf16.mxu0 0
      %593 = vmatpush1.bf16.xpose.msra.mxu0 0
      %594 = vmatprep.subr.bf16.mxu0 0
      %595 = vmatpush1.bf16.xpose.msra.mxu0 0
      %596 = vmatprep.subr.bf16.mxu0 0
      %597 = vmatpush1.bf16.xpose.msra.mxu0 0
      %598 = vmatprep.subr.bf16.mxu0 0
      %599 = vmatpush1.bf16.xpose.msra.mxu0 0
      %600 = vmatprep.subr.bf16.mxu0 0
      %601 = vmatpush1.bf16.xpose.msra.mxu0 0
      %602 = vmatprep.subr.bf16.mxu0 0
      %603 = vmatpush1.bf16.xpose.msra.mxu0 0
      %604 = vmatprep.subr.bf16.mxu0 0
      %605 = vmatpush1.bf16.xpose.msra.mxu0 0
      %606 = vmatprep.subr.bf16.mxu0 0
      %607 = vmatpush1.bf16.xpose.msra.mxu0 0
      %608 = vmatprep.mubr.bf16.mxu0 0
      %609 = vmatmul.mubr.bf16.gmra.mrb[0].mxu0 %v571
      %v610 = vpop.f32.mrb[0].mxu0
      %v611 = vadd.f32 0.0, %v610
      %v612 = vpop.f32.mrb[0].mxu0
      %v613 = vpop.f32.mrb[0].mxu0
      %v614 = vpop.f32.mrb[0].mxu0
      %615 = vdwg.mxu0
      %v616 = vsel %vm348, %v611, -inf
      %617 = vmax.xlane.f32.xlu0 %v616
      %v618 = vpop.xlane.xlu0 %617
      %v619 = vsub.f32 %v611, %v618
      %v620 = vmul.f32 %v619, 1.442695
      %v621 = vpow.pop %v620
      %v622 = vsel %vm348, %v621, 0.0
      %623 = vadd.xlane.f32.xlu0 %v622
      %v624 = vpop.xlane.xlu0 %623
      %v625 = vrcp.pop %v624
      %v626 = vmul.f32 %v621, %v625
      %v627 = vpack.c.bf16 %v626, %v626
      %628 = vrot.lane.b32.xlu0 %v344, 48
      %v629 = vpop.permute.xlu0 %628
      %v631 = vsel %vm348, %v627, 0
      %v634 = vsel %vm412, %v629, 0
      %636 = vmatprep.subr.bf16.mxu0 0
      %637 = vmatpush1.bf16.msra.mxu0 %v634
      %638 = vmatprep.subr.bf16.mxu0 0
      %639 = vmatpush1.bf16.msra.mxu0 0
      %640 = vmatprep.subr.bf16.mxu0 0
      %641 = vmatpush1.bf16.msra.mxu0 0
      %642 = vmatprep.subr.bf16.mxu0 0
      %643 = vmatpush1.bf16.msra.mxu0 0
      %644 = vmatprep.subr.bf16.mxu0 0
      %645 = vmatpush1.bf16.msra.mxu0 0
      %646 = vmatprep.subr.bf16.mxu0 0
      %647 = vmatpush1.bf16.msra.mxu0 0
      %648 = vmatprep.subr.bf16.mxu0 0
      %649 = vmatpush1.bf16.msra.mxu0 0
      %650 = vmatprep.subr.bf16.mxu0 0
      %651 = vmatpush1.bf16.msra.mxu0 0
      %652 = vmatprep.subr.bf16.mxu0 0
      %653 = vmatpush1.bf16.msra.mxu0 0
      %654 = vmatprep.subr.bf16.mxu0 0
      %655 = vmatpush1.bf16.msra.mxu0 0
      %656 = vmatprep.subr.bf16.mxu0 0
      %657 = vmatpush1.bf16.msra.mxu0 0
      %658 = vmatprep.subr.bf16.mxu0 0
      %659 = vmatpush1.bf16.msra.mxu0 0
      %660 = vmatprep.subr.bf16.mxu0 0
      %661 = vmatpush1.bf16.msra.mxu0 0
      %662 = vmatprep.subr.bf16.mxu0 0
      %663 = vmatpush1.bf16.msra.mxu0 0
      %664 = vmatprep.subr.bf16.mxu0 0
      %665 = vmatpush1.bf16.msra.mxu0 0
      %666 = vmatprep.subr.bf16.mxu0 0
      %667 = vmatpush1.bf16.msra.mxu0 0
      %668 = vmatprep.mubr.bf16.mxu0 0
      %669 = vmatmul.mubr.bf16.gmra.mrb[0].mxu0 %v631
      %v670 = vpop.f32.mrb[0].mxu0
      %v671 = vadd.f32 0.0, %v670
      %v672 = vpop.f32.mrb[0].mxu0
      %v673 = vpop.f32.mrb[0].mxu0
      %v674 = vpop.f32.mrb[0].mxu0
      %675 = vdwg.mxu0
      %676 = vrot.lane.b32.xlu0 %v344, 104
      %v677 = vpop.permute.xlu0 %676
      %678 = vrot.lane.b32.xlu0 %v344, 72
      %v679 = vpop.permute.xlu0 %678
      %v681 = vsel %vm348, %v677, 0
      %v684 = vsel %vm348, %v679, 0
      %686 = vmatprep.subr.bf16.mxu0 0
      %687 = vmatpush1.bf16.xpose.msra.mxu0 %v684
      %688 = vmatprep.subr.bf16.mxu0 0
      %689 = vmatpush1.bf16.xpose.msra.mxu0 0
      %690 = vmatprep.subr.bf16.mxu0 0
      %691 = vmatpush1.bf16.xpose.msra.mxu0 0
      %692 = vmatprep.subr.bf16.mxu0 0
      %693 = vmatpush1.bf16.xpose.msra.mxu0 0
      %694 = vmatprep.subr.bf16.mxu0 0
      %695 = vmatpush1.bf16.xpose.msra.mxu0 0
      %696 = vmatprep.subr.bf16.mxu0 0
      %697 = vmatpush1.bf16.xpose.msra.mxu0 0
      %698 = vmatprep.subr.bf16.mxu0 0
      %699 = vmatpush1.bf16.xpose.msra.mxu0 0
      %700 = vmatprep.subr.bf16.mxu0 0
      %701 = vmatpush1.bf16.xpose.msra.mxu0 0
      %702 = vmatprep.subr.bf16.mxu0 0
      %703 = vmatpush1.bf16.xpose.msra.mxu0 0
      %704 = vmatprep.subr.bf16.mxu0 0
      %705 = vmatpush1.bf16.xpose.msra.mxu0 0
      %706 = vmatprep.subr.bf16.mxu0 0
      %707 = vmatpush1.bf16.xpose.msra.mxu0 0
      %708 = vmatprep.subr.bf16.mxu0 0
      %709 = vmatpush1.bf16.xpose.msra.mxu0 0
      %710 = vmatprep.subr.bf16.mxu0 0
      %711 = vmatpush1.bf16.xpose.msra.mxu0 0
      %712 = vmatprep.subr.bf16.mxu0 0
      %713 = vmatpush1.bf16.xpose.msra.mxu0 0
      %714 = vmatprep.subr.bf16.mxu0 0
      %715 = vmatpush1.bf16.xpose.msra.mxu0 0
      %716 = vmatprep.subr.bf16.mxu0 0
      %717 = vmatpush1.bf16.xpose.msra.mxu0 0
      %718 = vmatprep.mubr.bf16.mxu0 0
      %719 = vmatmul.mubr.bf16.gmra.mrb[0].mxu0 %v681
      %v720 = vpop.f32.mrb[0].mxu0
      %v721 = vadd.f32 0.0, %v720
      %v722 = vpop.f32.mrb[0].mxu0
      %v723 = vpop.f32.mrb[0].mxu0
      %v724 = vpop.f32.mrb[0].mxu0
      %725 = vdwg.mxu0
      %v726 = vsel %vm348, %v721, -inf
      %727 = vmax.xlane.f32.xlu0 %v726
      %v728 = vpop.xlane.xlu0 %727
      %v729 = vsub.f32 %v721, %v728
      %v730 = vmul.f32 %v729, 1.442695
      %v731 = vpow.pop %v730
      %v732 = vsel %vm348, %v731, 0.0
      %733 = vadd.xlane.f32.xlu0 %v732
      %v734 = vpop.xlane.xlu0 %733
      %v735 = vrcp.pop %v734
      %v736 = vmul.f32 %v731, %v735
      %v737 = vpack.c.bf16 %v736, %v736
      %738 = vrot.lane.b32.xlu0 %v344, 40
      %v739 = vpop.permute.xlu0 %738
      %v741 = vsel %vm348, %v737, 0
      %v744 = vsel %vm412, %v739, 0
      %746 = vmatprep.subr.bf16.mxu0 0
      %747 = vmatpush1.bf16.msra.mxu0 %v744
      %748 = vmatprep.subr.bf16.mxu0 0
      %749 = vmatpush1.bf16.msra.mxu0 0
      %750 = vmatprep.subr.bf16.mxu0 0
      %751 = vmatpush1.bf16.msra.mxu0 0
      %752 = vmatprep.subr.bf16.mxu0 0
      %753 = vmatpush1.bf16.msra.mxu0 0
      %754 = vmatprep.subr.bf16.mxu0 0
      %755 = vmatpush1.bf16.msra.mxu0 0
      %756 = vmatprep.subr.bf16.mxu0 0
      %757 = vmatpush1.bf16.msra.mxu0 0
      %758 = vmatprep.subr.bf16.mxu0 0
      %759 = vmatpush1.bf16.msra.mxu0 0
      %760 = vmatprep.subr.bf16.mxu0 0
      %761 = vmatpush1.bf16.msra.mxu0 0
      %762 = vmatprep.subr.bf16.mxu0 0
      %763 = vmatpush1.bf16.msra.mxu0 0
      %764 = vmatprep.subr.bf16.mxu0 0
      %765 = vmatpush1.bf16.msra.mxu0 0
      %766 = vmatprep.subr.bf16.mxu0 0
      %767 = vmatpush1.bf16.msra.mxu0 0
      %768 = vmatprep.subr.bf16.mxu0 0
      %769 = vmatpush1.bf16.msra.mxu0 0
      %770 = vmatprep.subr.bf16.mxu0 0
      %771 = vmatpush1.bf16.msra.mxu0 0
      %772 = vmatprep.subr.bf16.mxu0 0
      %773 = vmatpush1.bf16.msra.mxu0 0
      %774 = vmatprep.subr.bf16.mxu0 0
      %775 = vmatpush1.bf16.msra.mxu0 0
      %776 = vmatprep.subr.bf16.mxu0 0
      %777 = vmatpush1.bf16.msra.mxu0 0
      %778 = vmatprep.mubr.bf16.mxu0 0
      %779 = vmatmul.mubr.bf16.gmra.mrb[0].mxu0 %v741
      %v780 = vpop.f32.mrb[0].mxu0
      %v781 = vadd.f32 0.0, %v780
      %v782 = vpop.f32.mrb[0].mxu0
      %v783 = vpop.f32.mrb[0].mxu0
      %v784 = vpop.f32.mrb[0].mxu0
      %785 = vdwg.mxu0
      %787 = vrot.lane.b32.xlu0 %v561, 8
      %v788 = vpop.permute.xlu0 %787
      %791 = vrot.lane.b32.xlu0 %v671, 16
      %v792 = vpop.permute.xlu0 %791
      %795 = vrot.lane.b32.xlu0 %v781, 24
      %v796 = vpop.permute.xlu0 %795
      %v798 = vsel %vm348, %v451, %v788
      %vm799 = vcmask 130048
      %v800 = vsel %vm799, %v798, %v792
      %vm801 = vcmask 195584
      %v802 = vsel %vm801, %v800, %v796
      %v803 = vpack.c.bf16 %v802, %v802
      %v804 = vld [vmem:[%s3] sm:$0xf]
      %v805 = vld [vmem:[%s3 + $0x4] sm:$0xf]
      %v806 = vld [vmem:[%s3 + $0x8] sm:$0xf]
      %v807 = vld [vmem:[%s3 + $0xc] sm:$0xf]
      %v808 = vld [vmem:[%s4] sm:$0x1]
      %v810 = vlaneseq
      %v811 = vshrl.u32 %v810, 7
      %v812 = vsub.s32 0, %v811
      %v813 = vrot.slane %v808, %v812
      %v819 = vunpack.c.l.b16 %v804
      %v820 = vunpack.c.l.b16 %v805
      %v821 = vunpack.c.l.b16 %v806
      %v822 = vunpack.c.l.b16 %v807
      %v823 = vpack.c.b16 %v820, %v819
      %v824 = vpack.c.b16 %v822, %v821
      %v828 = vsel %vm300, %v803, 0
      %830 = vmatprep.subr.bf16.mxu0 0
      %831 = vmatpush1.bf16.msra.mxu0 %v823
      %832 = vmatprep.subr.bf16.mxu0 0
      %833 = vmatpush1.bf16.msra.mxu0 %v824
      %834 = vmatprep.subr.bf16.mxu0 0
      %835 = vmatpush1.bf16.msra.mxu0 0
      %836 = vmatprep.subr.bf16.mxu0 0
      %837 = vmatpush1.bf16.msra.mxu0 0
      %838 = vmatprep.subr.bf16.mxu0 0
      %839 = vmatpush1.bf16.msra.mxu0 0
      %840 = vmatprep.subr.bf16.mxu0 0
      %841 = vmatpush1.bf16.msra.mxu0 0
      %842 = vmatprep.subr.bf16.mxu0 0
      %843 = vmatpush1.bf16.msra.mxu0 0
      %844 = vmatprep.subr.bf16.mxu0 0
      %845 = vmatpush1.bf16.msra.mxu0 0
      %846 = vmatprep.subr.bf16.mxu0 0
      %847 = vmatpush1.bf16.msra.mxu0 0
      %848 = vmatprep.subr.bf16.mxu0 0
      %849 = vmatpush1.bf16.msra.mxu0 0
      %850 = vmatprep.subr.bf16.mxu0 0
      %851 = vmatpush1.bf16.msra.mxu0 0
      %852 = vmatprep.subr.bf16.mxu0 0
      %853 = vmatpush1.bf16.msra.mxu0 0
      %854 = vmatprep.subr.bf16.mxu0 0
      %855 = vmatpush1.bf16.msra.mxu0 0
      %856 = vmatprep.subr.bf16.mxu0 0
      %857 = vmatpush1.bf16.msra.mxu0 0
      %858 = vmatprep.subr.bf16.mxu0 0
      %859 = vmatpush1.bf16.msra.mxu0 0
      %860 = vmatprep.subr.bf16.mxu0 0
      %861 = vmatpush1.bf16.msra.mxu0 0
      %862 = vmatprep.mubr.bf16.mxu0 0
      %863 = vmatmul.mubr.bf16.gmra.mrb[0].mxu0 %v828
      %v864 = vpop.f32.mrb[0].mxu0
      %v865 = vadd.f32 %v813, %v864
      %v866 = vpop.f32.mrb[0].mxu0
      %v867 = vpop.f32.mrb[0].mxu0
      %v868 = vpop.f32.mrb[0].mxu0
      %869 = vdwg.mxu0
      %v870 = vadd.f32 %v865, %v275
      %v871 = vld [vmem:[%s5] sm:$0x1]
      %v872 = vld [vmem:[%s6] sm:$0x1]
      %v873 = vsel %vm300, %v870, 0.0
      %874 = vadd.xlane.f32.xlu0 %v873
      %v875 = vpop.xlane.xlu0 %874
      %v876 = vrcp.pop 32.0
      %v877 = vmul.f32 %v875, %v876
      %v878 = vmul.f32 %v870, %v870
      %v879 = vsel %vm300, %v878, 0.0
      %880 = vadd.xlane.f32.xlu0 %v879
      %v881 = vpop.xlane.xlu0 %880
      %v882 = vmul.f32 %v881, %v876
      %v883 = vmul.f32 %v877, %v877
      %v884 = vsub.f32 %v882, %v883
      %v885 = vsub.f32 %v870, %v877
      %v886 = vadd.f32 %v884, 1e-05
      %v887 = vrsqrt.pop %v886
      %v888 = vmul.f32 %v885, %v887
      %v890 = vlaneseq
      %v891 = vshrl.u32 %v890, 7
      %v892 = vsub.s32 0, %v891
      %v893 = vrot.slane %v871, %v892
      %v895 = vmul.f32 %v888, %v893
      %v897 = vlaneseq
      %v898 = vshrl.u32 %v897, 7
      %v899 = vsub.s32 0, %v898
      %v900 = vrot.slane %v872, %v899
      %v902 = vadd.f32 %v895, %v900
      %v903 = vpack.c.bf16 %v902, %v902
      %vm904 = vcmask 257024
      %905 = vst.msk [vmem:[%s273] sm:$0xf] %vm904, %v903
      %p906 = scmp.lt.s32.totalorder %s18, 1
      %s907 = scalar_select %p906, %s18, 1
      %s908 = smul.addr %s907, 4
      %s909 = scalar_lea.vmem %s7, %s908
      // Predicated region
      $region49: #{decoder_layer.3} parent=47 // pred_check
        %p910 = pneg %p188
      $region50: #{decoder_layer.3} parent=47 // pred_check_branch
        %912 = sbr.rel (%p910) target = $region52
      $region51: #{decoder_layer.3} parent=47 // pred_region
        _
      $region52: #{decoder_layer.3} parent=47 // pred_fallthru
        _
    $region48: #{decoder_layer.3} parent=5 // pred_fallthru
      _
    %p913 = scmp.le.s32.totalorder 2, %s13
    // Predicated region
    $region53: #{decoder_layer.3} parent=5 // pred_check
      %p914 = pneg %p913
    $region54: #{decoder_layer.3} parent=5 // pred_check_branch
      %916 = sbr.rel (%p914) target = $region56
    $region55: #{decoder_layer.3} parent=5 // pred_region
      %s917 = ssub.s32 %s13, 2
      // Predicated region
      $region57: #{decoder_layer.3} parent=55 // pred_check
        %p918 = pneg %p194
      $region58: #{decoder_layer.3} parent=55 // pred_check_branch
        %920 = sbr.rel (%p918) target = $region60
      $region59: #{decoder_layer.3} parent=55 // pred_region
        %p921 = scmp.lt.s32.totalorder %s19, 1
        %s922 = scalar_select %p921, %s19, 1
        %s923 = smul.addr %s922, 4
        %s924 = scalar_lea.vmem %s7, %s923
      $region60: #{decoder_layer.3} parent=55 // pred_fallthru
        _
    $region56: #{decoder_layer.3} parent=5 // pred_fallthru
      _
  $region6: #{decoder_layer.3} parent=0 // loop_footer
    %s17 = sadd.s32 1, %s13
  $region7: #{decoder_layer.3} parent=0 // loop_footer_branch
    %12 = sbr.rel target = $region3
  $region8: #{decoder_layer.3} parent=0 // loop_exit
    _

// kernel: decoder_layer.4
$region0: #{decoder_layer.4}
  #allocation0 [shape = 'u32[]', space=smem, size = 0x4, offset = 0x4, fixed_abs, tag = 'smem constant byte address 0x4 - core index']
  #allocation1 [shape = 'u32[144,128]{1,0:T(1,128)}', space=vmem, size = 0x12000, scoped, tag = 'internal scratch']
  %s0 = inlined_call_operand.vmem [shape: bf16[16,32], index: 0, kind: input, shape index: {}]
  %s1 = inlined_call_operand.vmem [shape: f32[16,32], index: 1, kind: input, shape index: {}]
  %s2 = inlined_call_operand.vmem [shape: bf16[32,32], index: 2, kind: input, shape index: {}]
  %s3 = inlined_call_operand.vmem [shape: f32[1,32], index: 3, kind: input, shape index: {}]
  %s4 = inlined_call_operand.vmem [shape: bf16[32,64], index: 4, kind: input, shape index: {}]
  %s5 = inlined_call_operand.vmem [shape: f32[1,64], index: 5, kind: input, shape index: {}]
  %s6 = inlined_call_operand.vmem [shape: bf16[32,32], index: 6, kind: input, shape index: {}]
  %s7 = inlined_call_operand.vmem [shape: f32[1,32], index: 7, kind: input, shape index: {}]
  %s8 = inlined_call_operand.vmem [shape: f32[1,32], index: 8, kind: input, shape index: {}]
  %s9 = inlined_call_operand.vmem [shape: f32[1,32], index: 9, kind: input, shape index: {}]
  %s10 = inlined_call_operand.vmem [shape: bf16[16,32], index: 10, kind: output, shape index: {}]
  %s11 = sld [smem:[#allocation0]]
  $region73: #{decoder_layer.4} parent=0
    _
  %s13 = ssub.s32 1, %s11
  %s14 = scalar_select 0, %s13, %s11
  loop: start=0, step=1, limit=4
  $region2: #{decoder_layer.4} parent=0 // loop_pre_header
    _
  $region3: #{decoder_layer.4} parent=0 // loop_header
    %s16 = sphi 0, %s20
    %p17 = scmp.ge.s32.totalorder %s16, 4
    %s26 = sphi 0, %s28
    %s29 = sphi 0, %s26
    %s30 = sphi 0, %s29
    %s46 = sphi 0, %s30
    %s52 = sphi 0, %s54
    %s55 = sphi 0, %s52
    %s56 = sphi 0, %s55
    %s72 = sphi 0, %s56
    %s76 = sphi 0, %s76
    %s78 = sphi 0, %s76
    %s79 = sphi 0, %s78
    %s93 = sphi 0, %s79
    %s97 = sphi 0, %s97
    %s99 = sphi 0, %s97
    %s100 = sphi 0, %s99
    %s114 = sphi 0, %s100
    %s118 = sphi 0, %s118
    %s120 = sphi 0, %s118
    %s121 = sphi 0, %s120
    %s135 = sphi 0, %s121
    %s139 = sphi 0, %s139
    %s141 = sphi 0, %s139
    %s142 = sphi 0, %s141
    %s156 = sphi 0, %s142
    %s160 = sphi 0, %s160
    %s162 = sphi 0, %s160
    %s163 = sphi 0, %s162
    %s177 = sphi 0, %s163
    %s181 = sphi 0, %s181
    %s183 = sphi 0, %s181
    %s184 = sphi 0, %s183
    %s198 = sphi 0, %s184
    %s202 = sphi 0, %s202
    %s204 = sphi 0, %s202
    %s205 = sphi 0, %s204
    %s219 = sphi 0, %s205
    %s223 = sphi 0, %s223
    %s225 = sphi 0, %s223
    %s226 = sphi 0, %s225
    %s240 = sphi 0, %s226
    %s246 = sphi 0, %s248
    %s249 = sphi 0, %s246
    %s250 = sphi 0, %s249
    %s266 = sphi 0, %s250
  $region4: #{decoder_layer.4} parent=0 // loop_header_branch
    %19 = sbr.rel (%p17) target = $region8
  $region5: #{decoder_layer.4} parent=0 // loop_body
    %s21 = ssub.s32 %s16, 1
    %s22 = ssub.s32 %s16, 2
    %s23 = sadd.s32 %s16, 1
    %s24 = ssub.s32 %s16, %s23
    %p25 = scmp.eq.s32.totalorder %s24, 0
    %s27 = sadd.s32 %s26, 1
    %s28 = scalar_select %p25, %s26, %s27
    %p31 = pneg %p25
    %p32 = scmp.eq.s32.totalorder %s16, 1
    %p33 = por %p31, %p32
    %p34 = scmp.ne.s32.totalorder %s26, %s29
    %p35 = scmp.eq.s32.totalorder %s16, 0
    %p36 = por %p34, %p35
    %p37 = scmp.ne.s32.totalorder %s26, %s29
    %p38 = scmp.eq.s32.totalorder %s21, 1
    %p39 = por %p37, %p38
    %p40 = scmp.ne.s32.totalorder %s29, %s30
    %p41 = scmp.eq.s32.totalorder %s21, 0
    %p42 = por %p40, %p41
    %p43 = scmp.ne.s32.totalorder %s29, %s30
    %p44 = scmp.eq.s32.totalorder %s22, 1
    %p45 = por %p43, %p44
    %p47 = scmp.ne.s32.totalorder %s30, %s46
    %p48 = scmp.eq.s32.totalorder %s22, 0
    %p49 = por %p47, %p48
    %s50 = ssub.s32 %s16, %s23
    %p51 = scmp.eq.s32.totalorder %s50, 0
    %s53 = sadd.s32 %s52, 1
    %s54 = scalar_select %p51, %s52, %s53
    %p57 = pneg %p51
    %p58 = scmp.eq.s32.totalorder %s16, 1
    %p59 = por %p57, %p58
    %p60 = scmp.ne.s32.totalorder %s52, %s55
    %p61 = scmp.eq.s32.totalorder %s16, 0
    %p62 = por %p60, %p61
    %p63 = scmp.ne.s32.totalorder %s52, %s55
    %p64 = scmp.eq.s32.totalorder %s21, 1
    %p65 = por %p63, %p64
    %p66 = scmp.ne.s32.totalorder %s55, %s56
    %p67 = scmp.eq.s32.totalorder %s21, 0
    %p68 = por %p66, %p67
    %p69 = scmp.ne.s32.totalorder %s55, %s56
    %p70 = scmp.eq.s32.totalorder %s22, 1
    %p71 = por %p69, %p70
    %p73 = scmp.ne.s32.totalorder %s56, %s72
    %p74 = scmp.eq.s32.totalorder %s22, 0
    %p75 = por %p73, %p74
    %s77 = sadd.s32 %s76, 1
    %p80 = scmp.eq.s32.totalorder %s16, 1
    %p81 = scmp.ne.s32.totalorder %s76, %s78
    %p82 = scmp.eq.s32.totalorder %s16, 0
    %p83 = por %p81, %p82
    %p84 = scmp.ne.s32.totalorder %s76, %s78
    %p85 = scmp.eq.s32.totalorder %s21, 1
    %p86 = por %p84, %p85
    %p87 = scmp.ne.s32.totalorder %s78, %s79
    %p88 = scmp.eq.s32.totalorder %s21, 0
    %p89 = por %p87, %p88
    %p90 = scmp.ne.s32.totalorder %s78, %s79
    %p91 = scmp.eq.s32.totalorder %s22, 1
    %p92 = por %p90, %p91
    %p94 = scmp.ne.s32.totalorder %s79, %s93
    %p95 = scmp.eq.s32.totalorder %s22, 0
    %p96 = por %p94, %p95
    %s98 = sadd.s32 %s97, 1
    %p101 = scmp.eq.s32.totalorder %s16, 1
    %p102 = scmp.ne.s32.totalorder %s97, %s99
    %p103 = scmp.eq.s32.totalorder %s16, 0
    %p104 = por %p102, %p103
    %p105 = scmp.ne.s32.totalorder %s97, %s99
    %p106 = scmp.eq.s32.totalorder %s21, 1
    %p107 = por %p105, %p106
    %p108 = scmp.ne.s32.totalorder %s99, %s100
    %p109 = scmp.eq.s32.totalorder %s21, 0
    %p110 = por %p108, %p109
    %p111 = scmp.ne.s32.totalorder %s99, %s100
    %p112 = scmp.eq.s32.totalorder %s22, 1
    %p113 = por %p111, %p112
    %p115 = scmp.ne.s32.totalorder %s100, %s114
    %p116 = scmp.eq.s32.totalorder %s22, 0
    %p117 = por %p115, %p116
    %s119 = sadd.s32 %s118, 1
    %p122 = scmp.eq.s32.totalorder %s16, 1
    %p123 = scmp.ne.s32.totalorder %s118, %s120
    %p124 = scmp.eq.s32.totalorder %s16, 0
    %p125 = por %p123, %p124
    %p126 = scmp.ne.s32.totalorder %s118, %s120
    %p127 = scmp.eq.s32.totalorder %s21, 1
    %p128 = por %p126, %p127
    %p129 = scmp.ne.s32.totalorder %s120, %s121
    %p130 = scmp.eq.s32.totalorder %s21, 0
    %p131 = por %p129, %p130
    %p132 = scmp.ne.s32.totalorder %s120, %s121
    %p133 = scmp.eq.s32.totalorder %s22, 1
    %p134 = por %p132, %p133
    %p136 = scmp.ne.s32.totalorder %s121, %s135
    %p137 = scmp.eq.s32.totalorder %s22, 0
    %p138 = por %p136, %p137
    %s140 = sadd.s32 %s139, 1
    %p143 = scmp.eq.s32.totalorder %s16, 1
    %p144 = scmp.ne.s32.totalorder %s139, %s141
    %p145 = scmp.eq.s32.totalorder %s16, 0
    %p146 = por %p144, %p145
    %p147 = scmp.ne.s32.totalorder %s139, %s141
    %p148 = scmp.eq.s32.totalorder %s21, 1
    %p149 = por %p147, %p148
    %p150 = scmp.ne.s32.totalorder %s141, %s142
    %p151 = scmp.eq.s32.totalorder %s21, 0
    %p152 = por %p150, %p151
    %p153 = scmp.ne.s32.totalorder %s141, %s142
    %p154 = scmp.eq.s32.totalorder %s22, 1
    %p155 = por %p153, %p154
    %p157 = scmp.ne.s32.totalorder %s142, %s156
    %p158 = scmp.eq.s32.totalorder %s22, 0
    %p159 = por %p157, %p158
    %s161 = sadd.s32 %s160, 1
    %p164 = scmp.eq.s32.totalorder %s16, 1
    %p165 = scmp.ne.s32.totalorder %s160, %s162
    %p166 = scmp.eq.s32.totalorder %s16, 0
    %p167 = por %p165, %p166
    %p168 = scmp.ne.s32.totalorder %s160, %s162
    %p169 = scmp.eq.s32.totalorder %s21, 1
    %p170 = por %p168, %p169
    %p171 = scmp.ne.s32.totalorder %s162, %s163
    %p172 = scmp.eq.s32.totalorder %s21, 0
    %p173 = por %p171, %p172
    %p174 = scmp.ne.s32.totalorder %s162, %s163
    %p175 = scmp.eq.s32.totalorder %s22, 1
    %p176 = por %p174, %p175
    %p178 = scmp.ne.s32.totalorder %s163, %s177
    %p179 = scmp.eq.s32.totalorder %s22, 0
    %p180 = por %p178, %p179
    %s182 = sadd.s32 %s181, 1
    %p185 = scmp.eq.s32.totalorder %s16, 1
    %p186 = scmp.ne.s32.totalorder %s181, %s183
    %p187 = scmp.eq.s32.totalorder %s16, 0
    %p188 = por %p186, %p187
    %p189 = scmp.ne.s32.totalorder %s181, %s183
    %p190 = scmp.eq.s32.totalorder %s21, 1
    %p191 = por %p189, %p190
    %p192 = scmp.ne.s32.totalorder %s183, %s184
    %p193 = scmp.eq.s32.totalorder %s21, 0
    %p194 = por %p192, %p193
    %p195 = scmp.ne.s32.totalorder %s183, %s184
    %p196 = scmp.eq.s32.totalorder %s22, 1
    %p197 = por %p195, %p196
    %p199 = scmp.ne.s32.totalorder %s184, %s198
    %p200 = scmp.eq.s32.totalorder %s22, 0
    %p201 = por %p199, %p200
    %s203 = sadd.s32 %s202, 1
    %p206 = scmp.eq.s32.totalorder %s16, 1
    %p207 = scmp.ne.s32.totalorder %s202, %s204
    %p208 = scmp.eq.s32.totalorder %s16, 0
    %p209 = por %p207, %p208
    %p210 = scmp.ne.s32.totalorder %s202, %s204
    %p211 = scmp.eq.s32.totalorder %s21, 1
    %p212 = por %p210, %p211
    %p213 = scmp.ne.s32.totalorder %s204, %s205
    %p214 = scmp.eq.s32.totalorder %s21, 0
    %p215 = por %p213, %p214
    %p216 = scmp.ne.s32.totalorder %s204, %s205
    %p217 = scmp.eq.s32.totalorder %s22, 1
    %p218 = por %p216, %p217
    %p220 = scmp.ne.s32.totalorder %s205, %s219
    %p221 = scmp.eq.s32.totalorder %s22, 0
    %p222 = por %p220, %p221
    %s224 = sadd.s32 %s223, 1
    %p227 = scmp.eq.s32.totalorder %s16, 1
    %p228 = scmp.ne.s32.totalorder %s223, %s225
    %p229 = scmp.eq.s32.totalorder %s16, 0
    %p230 = por %p228, %p229
    %p231 = scmp.ne.s32.totalorder %s223, %s225
    %p232 = scmp.eq.s32.totalorder %s21, 1
    %p233 = por %p231, %p232
    %p234 = scmp.ne.s32.totalorder %s225, %s226
    %p235 = scmp.eq.s32.totalorder %s21, 0
    %p236 = por %p234, %p235
    %p237 = scmp.ne.s32.totalorder %s225, %s226
    %p238 = scmp.eq.s32.totalorder %s22, 1
    %p239 = por %p237, %p238
    %p241 = scmp.ne.s32.totalorder %s226, %s240
    %p242 = scmp.eq.s32.totalorder %s22, 0
    %p243 = por %p241, %p242
    %s244 = ssub.s32 %s16, %s23
    %p245 = scmp.eq.s32.totalorder %s244, 0
    %s247 = sadd.s32 %s246, 1
    %s248 = scalar_select %p245, %s246, %s247
    %p251 = pneg %p245
    %p252 = scmp.eq.s32.totalorder %s16, 1
    %p253 = por %p251, %p252
    %p254 = scmp.ne.s32.totalorder %s246, %s249
    %p255 = scmp.eq.s32.totalorder %s16, 0
    %p256 = por %p254, %p255
    %p257 = scmp.ne.s32.totalorder %s246, %s249
    %p258 = scmp.eq.s32.totalorder %s21, 1
    %p259 = por %p257, %p258
    %p260 = scmp.ne.s32.totalorder %s249, %s250
    %p261 = scmp.eq.s32.totalorder %s21, 0
    %p262 = por %p260, %p261
    %p263 = scmp.ne.s32.totalorder %s249, %s250
    %p264 = scmp.eq.s32.totalorder %s22, 1
    %p265 = por %p263, %p264
    %p267 = scmp.ne.s32.totalorder %s250, %s266
    %p268 = scmp.eq.s32.totalorder %s22, 0
    %p269 = por %p267, %p268
    %p270 = scmp.le.s32.totalorder 1, %s16
    %p271 = scmp.lt.s32.totalorder %s16, 3
    %p272 = pnand %p270, %p271
    %p273 = pneg %p272
    // Predicated region
    $region9: #{decoder_layer.4} parent=5 // pred_check
      _
    $region10: #{decoder_layer.4} parent=5 // pred_check_branch
      %275 = sbr.rel (%p272) target = $region12
    $region11: #{decoder_layer.4} parent=5 // pred_region
      %s276 = ssub.s32 %s16, 1
      // Predicated region
      $region13: #{decoder_layer.4} parent=11 // pred_check
        %p277 = pneg %p89
      $region14: #{decoder_layer.4} parent=11 // pred_check_branch
        %279 = sbr.rel (%p277) target = $region16
      $region15: #{decoder_layer.4} parent=11 // pred_region
        _
      $region16: #{decoder_layer.4} parent=11 // pred_fallthru
        _
      // Predicated region
      $region17: #{decoder_layer.4} parent=11 // pred_check
        %p280 = pneg %p110
      $region18: #{decoder_layer.4} parent=11 // pred_check_branch
        %282 = sbr.rel (%p280) target = $region20
      $region19: #{decoder_layer.4} parent=11 // pred_region
        _
      $region20: #{decoder_layer.4} parent=11 // pred_fallthru
        _
      // Predicated region
      $region21: #{decoder_layer.4} parent=11 // pred_check
        %p283 = pneg %p131
      $region22: #{decoder_layer.4} parent=11 // pred_check_branch
        %285 = sbr.rel (%p283) target = $region24
      $region23: #{decoder_layer.4} parent=11 // pred_region
        _
      $region24: #{decoder_layer.4} parent=11 // pred_fallthru
        _
      // Predicated region
      $region25: #{decoder_layer.4} parent=11 // pred_check
        %p286 = pneg %p152
      $region26: #{decoder_layer.4} parent=11 // pred_check_branch
        %288 = sbr.rel (%p286) target = $region28
      $region27: #{decoder_layer.4} parent=11 // pred_region
        _
      $region28: #{decoder_layer.4} parent=11 // pred_fallthru
        _
      // Predicated region
      $region29: #{decoder_layer.4} parent=11 // pred_check
        %p289 = pneg %p173
      $region30: #{decoder_layer.4} parent=11 // pred_check_branch
        %291 = sbr.rel (%p289) target = $region32
      $region31: #{decoder_layer.4} parent=11 // pred_region
        _
      $region32: #{decoder_layer.4} parent=11 // pred_fallthru
        _
      // Predicated region
      $region33: #{decoder_layer.4} parent=11 // pred_check
        %p292 = pneg %p194
      $region34: #{decoder_layer.4} parent=11 // pred_check_branch
        %294 = sbr.rel (%p292) target = $region36
      $region35: #{decoder_layer.4} parent=11 // pred_region
        _
      $region36: #{decoder_layer.4} parent=11 // pred_fallthru
        _
      // Predicated region
      $region37: #{decoder_layer.4} parent=11 // pred_check
        %p295 = pneg %p215
      $region38: #{decoder_layer.4} parent=11 // pred_check_branch
        %297 = sbr.rel (%p295) target = $region40
      $region39: #{decoder_layer.4} parent=11 // pred_region
        _
      $region40: #{decoder_layer.4} parent=11 // pred_fallthru
        _
      // Predicated region
      $region41: #{decoder_layer.4} parent=11 // pred_check
        %p298 = pneg %p236
      $region42: #{decoder_layer.4} parent=11 // pred_check_branch
        %300 = sbr.rel (%p298) target = $region44
      $region43: #{decoder_layer.4} parent=11 // pred_region
        _
      $region44: #{decoder_layer.4} parent=11 // pred_fallthru
        _
    $region12: #{decoder_layer.4} parent=5 // pred_fallthru
      _
    %p301 = scmp.lt.s32.totalorder %s16, 2
    // Predicated region
    $region45: #{decoder_layer.4} parent=5 // pred_check
      %p302 = pneg %p301
    $region46: #{decoder_layer.4} parent=5 // pred_check_branch
      %304 = sbr.rel (%p302) target = $region48
    $region47: #{decoder_layer.4} parent=5 // pred_region
      // Predicated region
      $region49: #{decoder_layer.4} parent=47 // pred_check
        %p305 = pneg %p36
      $region50: #{decoder_layer.4} parent=47 // pred_check_branch
        %307 = sbr.rel (%p305) target = $region52
      $region51: #{decoder_layer.4} parent=47 // pred_region
        %p308 = scmp.lt.s32.totalorder %s16, 1
        %s309 = scalar_select %p308, %s16, 1
        %s310 = smul.addr %s309, 4
        %s311 = scalar_lea.vmem %s0, %s310
      $region52: #{decoder_layer.4} parent=47 // pred_fallthru
        _
      // Predicated region
      $region53: #{decoder_layer.4} parent=47 // pred_check
        %p312 = pneg %p62
      $region54: #{decoder_layer.4} parent=47 // pred_check_branch
        %314 = sbr.rel (%p312) target = $region56
      $region55: #{decoder_layer.4} parent=47 // pred_region
        %p315 = scmp.lt.s32.totalorder %s16, 1
        %s316 = scalar_select %p315, %s16, 1
        %s317 = smul.addr %s316, 8
        %s318 = scalar_lea.vmem %s1, %s317
      $region56: #{decoder_layer.4} parent=47 // pred_fallthru
        _
    $region48: #{decoder_layer.4} parent=5 // pred_fallthru
      _
    %p319 = scmp.le.s32.totalorder 1, %s16
    %p320 = scmp.lt.s32.totalorder %s16, 3
    %p321 = pnand %p319, %p320
    %p322 = pneg %p321
    // Predicated region
    $region57: #{decoder_layer.4} parent=5 // pred_check
      _
    $region58: #{decoder_layer.4} parent=5 // pred_check_branch
      %324 = sbr.rel (%p321) target = $region60
    $region59: #{decoder_layer.4} parent=5 // pred_region
      %s325 = ssub.s32 %s16, 1
      %p326 = scmp.lt.s32.totalorder %s21, 1
      %s327 = scalar_select %p326, %s21, 1
      %s328 = smul.addr %s327, 4
      %s329 = scalar_lea.vmem %s0, %s328
      %p330 = pneg %p42
      %p331 = pneg %p39
      %p332 = scmp.lt.s32.totalorder %s21, 1
      %s333 = scalar_select %p332, %s21, 1
      %s334 = smul.addr %s333, 8
      %s335 = scalar_lea.vmem %s1, %s334
      %p336 = pneg %p68
      %p337 = pneg %p65
      %p338 = pneg %p89
      %p339 = pneg %p86
      %p340 = pneg %p110
      %p341 = pneg %p107
      %p342 = pneg %p131
      %p343 = pneg %p128
      %p344 = pneg %p152
      %p345 = pneg %p149
      %p346 = pneg %p173
      %p347 = pneg %p170
      %p348 = pneg %p194
      %p349 = pneg %p191
      %p350 = pneg %p215
      %p351 = pneg %p212
      %p352 = pneg %p236
      %p353 = pneg %p233
      %p354 = pneg %p262
      %p355 = pneg %p259
      %p356 = scmp.lt.s32.totalorder %s21, 1
      %s357 = scalar_select %p356, %s21, 1
      %s358 = smul.addr %s357, 4
      %s359 = scalar_lea.vmem %s10, %s358
      %p360 = scmp.lt.s32.totalorder %s21, 1
      %s361 = scalar_select %p360, %s21, 1
      %s362 = smul.addr %s361, 4
      %s363 = scalar_lea.vmem %s0, %s362
      %p364 = scmp.lt.s32.totalorder %s21, 1
      %s365 = scalar_select %p364, %s21, 1
      %s366 = smul.addr %s365, 8
      %s367 = scalar_lea.vmem %s1, %s366
      %p368 = scmp.lt.s32.totalorder %s21, 1
      %s369 = scalar_select %p368, %s21, 1
      %s370 = smul.addr %s369, 4
      %s371 = scalar_lea.vmem %s10, %s370
      %v373 = vld [vmem:[%s363] sm:$0xf]
      %v374 = vld [vmem:[%s367] sm:$0xff]
      %v375 = vld [vmem:[%s2] sm:$0xf]
      %v376 = vld [vmem:[%s2 + $0x4] sm:$0xf]
      %v377 = vld [vmem:[%s2 + $0x8] sm:$0xf]
      %v378 = vld [vmem:[%s2 + $0xc] sm:$0xf]
      %v379 = vld [vmem:[%s3] sm:$0x1]
      %v381 = vlaneseq
      %v382 = vshrl.u32 %v381, 7
      %v383 = vsub.s32 0, %v382
      %v384 = vrot.slane %v379, %v383
      %v390 = vunpack.c.l.b16 %v375
      %v391 = vunpack.c.l.b16 %v376
      %v392 = vunpack.c.l.b16 %v377
      %v393 = vunpack.c.l.b16 %v378
      %v394 = vpack.c.b16 %v391, %v390
      %v395 = vpack.c.b16 %v393, %v392
      %vm398 = vcmask 261120
      %v400 = vsel %vm398, %v373, 0
      %402 = vmatprep.subr.bf16.mxu0 0
      %403 = vmatpush1.bf16.msra.mxu0 %v394
      %404 = vmatprep.subr.bf16.mxu0 0
      %405 = vmatpush1.bf16.msra.mxu0 %v395
      %406 = vmatprep.subr.bf16.mxu0 0
      %407 = vmatpush1.bf16.msra.mxu0 0
      %408 = vmatprep.subr.bf16.mxu0 0
      %409 = vmatpush1.bf16.msra.mxu0 0
      %410 = vmatprep.subr.bf16.mxu0 0
      %411 = vmatpush1.bf16.msra.mxu0 0
      %412 = vmatprep.subr.bf16.mxu0 0
      %413 = vmatpush1.bf16.msra.mxu0 0
      %414 = vmatprep.subr.bf16.mxu0 0
      %415 = vmatpush1.bf16.msra.mxu0 0
      %416 = vmatprep.subr.bf16.mxu0 0
      %417 = vmatpush1.bf16.msra.mxu0 0
      %418 = vmatprep.subr.bf16.mxu0 0
      %419 = vmatpush1.bf16.msra.mxu0 0
      %420 = vmatprep.subr.bf16.mxu0 0
      %421 = vmatpush1.bf16.msra.mxu0 0
      %422 = vmatprep.subr.bf16.mxu0 0
      %423 = vmatpush1.bf16.msra.mxu0 0
      %424 = vmatprep.subr.bf16.mxu0 0
      %425 = vmatpush1.bf16.msra.mxu0 0
      %426 = vmatprep.subr.bf16.mxu0 0
      %427 = vmatpush1.bf16.msra.mxu0 0
      %428 = vmatprep.subr.bf16.mxu0 0
      %429 = vmatpush1.bf16.msra.mxu0 0
      %430 = vmatprep.subr.bf16.mxu0 0
      %431 = vmatpush1.bf16.msra.mxu0 0
      %432 = vmatprep.subr.bf16.mxu0 0
      %433 = vmatpush1.bf16.msra.mxu0 0
      %434 = vmatprep.mubr.bf16.mxu0 0
      %435 = vmatmul.mubr.bf16.gmra.mrb[0].mxu0 %v400
      %v436 = vpop.f32.mrb[0].mxu0
      %v437 = vadd.f32 %v384, %v436
      %v438 = vpop.f32.mrb[0].mxu0
      %v439 = vpop.f32.mrb[0].mxu0
      %v440 = vpop.f32.mrb[0].mxu0
      %441 = vdwg.mxu0
      %v442 = vpack.c.bf16 %v374, %v374
      %v443 = vld [vmem:[%s4] sm:$0xf]
      %v444 = vld [vmem:[%s4 + $0x4] sm:$0xf]
      %v445 = vld [vmem:[%s4 + $0x8] sm:$0xf]
      %v446 = vld [vmem:[%s4 + $0xc] sm:$0xf]
      %v447 = vld [vmem:[%s5] sm:$0x1]
      %v449 = vlaneseq
      %v450 = vshrl.u32 %v449, 7
      %v451 = vsub.s32 0, %v450
      %v452 = vrot.slane %v447, %v451
      %v458 = vunpack.c.l.b16 %v443
      %v459 = vunpack.c.l.b16 %v444
      %v460 = vunpack.c.l.b16 %v445
      %v461 = vunpack.c.l.b16 %v446
      %v462 = vpack.c.b16 %v459, %v458
      %v463 = vpack.c.b16 %v461, %v460
      %v467 = vsel %vm398, %v442, 0
      %469 = vmatprep.subr.bf16.mxu0 0
      %470 = vmatpush1.bf16.msra.mxu0 %v462
      %471 = vmatprep.subr.bf16.mxu0 0
      %472 = vmatpush1.bf16.msra.mxu0 %v463
      %473 = vmatprep.subr.bf16.mxu0 0
      %474 = vmatpush1.bf16.msra.mxu0 0
      %475 = vmatprep.subr.bf16.mxu0 0
      %476 = vmatpush1.bf16.msra.mxu0 0
      %477 = vmatprep.subr.bf16.mxu0 0
      %478 = vmatpush1.bf16.msra.mxu0 0
      %479 = vmatprep.subr.bf16.mxu0 0
      %480 = vmatpush1.bf16.msra.mxu0 0
      %481 = vmatprep.subr.bf16.mxu0 0
      %482 = vmatpush1.bf16.msra.mxu0 0
      %483 = vmatprep.subr.bf16.mxu0 0
      %484 = vmatpush1.bf16.msra.mxu0 0
      %485 = vmatprep.subr.bf16.mxu0 0
      %486 = vmatpush1.bf16.msra.mxu0 0
      %487 = vmatprep.subr.bf16.mxu0 0
      %488 = vmatpush1.bf16.msra.mxu0 0
      %489 = vmatprep.subr.bf16.mxu0 0
      %490 = vmatpush1.bf16.msra.mxu0 0
      %491 = vmatprep.subr.bf16.mxu0 0
      %492 = vmatpush1.bf16.msra.mxu0 0
      %493 = vmatprep.subr.bf16.mxu0 0
      %494 = vmatpush1.bf16.msra.mxu0 0
      %495 = vmatprep.subr.bf16.mxu0 0
      %496 = vmatpush1.bf16.msra.mxu0 0
      %497 = vmatprep.subr.bf16.mxu0 0
      %498 = vmatpush1.bf16.msra.mxu0 0
      %499 = vmatprep.subr.bf16.mxu0 0
      %500 = vmatpush1.bf16.msra.mxu0 0
      %501 = vmatprep.mubr.bf16.mxu0 0
      %502 = vmatmul.mubr.bf16.gmra.mrb[0].mxu0 %v467
      %v503 = vpop.f32.mrb[0].mxu0
      %v504 = vadd.f32 %v452, %v503
      %v505 = vpop.f32.mrb[0].mxu0
      %v506 = vpop.f32.mrb[0].mxu0
      %v507 = vpop.f32.mrb[0].mxu0
      %508 = vdwg.mxu0
      %v509 = vpack.c.bf16 %v437, %v437
      %v510 = vpack.c.bf16 %v504, %v504
      %vm511 = vcmask 64512
      %v513 = vsel %vm511, %v509, 0
      %v516 = vsel %vm511, %v510, 0
      %518 = vmatprep.subr.bf16.mxu0 0
      %519 = vmatpush1.bf16.xpose.msra.mxu0 %v516
      %520 = vmatprep.subr.bf16.mxu0 0
      %521 = vmatpush1.bf16.xpose.msra.mxu0 0
      %522 = vmatprep.subr.bf16.mxu0 0
      %523 = vmatpush1.bf16.xpose.msra.mxu0 0
      %524 = vmatprep.subr.bf16.mxu0 0
      %525 = vmatpush1.bf16.xpose.msra.mxu0 0
      %526 = vmatprep.subr.bf16.mxu0 0
      %527 = vmatpush1.bf16.xpose.msra.mxu0 0
      %528 = vmatprep.subr.bf16.mxu0 0
      %529 = vmatpush1.bf16.xpose.msra.mxu0 0
      %530 = vmatprep.subr.bf16.mxu0 0
      %531 = vmatpush1.bf16.xpose.msra.mxu0 0
      %532 = vmatprep.subr.bf16.mxu0 0
      %533 = vmatpush1.bf16.xpose.msra.mxu0 0
      %534 = vmatprep.subr.bf16.mxu0 0
      %535 = vmatpush1.bf16.xpose.msra.mxu0 0
      %536 = vmatprep.subr.bf16.mxu0 0
      %537 = vmatpush1.bf16.xpose.msra.mxu0 0
      %538 = vmatprep.subr.bf16.mxu0 0
      %539 = vmatpush1.bf16.xpose.msra.mxu0 0
      %540 = vmatprep.subr.bf16.mxu0 0
      %541 = vmatpush1.bf16.xpose.msra.mxu0 0
      %542 = vmatprep.subr.bf16.mxu0 0
      %543 = vmatpush1.bf16.xpose.msra.mxu0 0
      %544 = vmatprep.subr.bf16.mxu0 0
      %545 = vmatpush1.bf16.xpose.msra.mxu0 0
      %546 = vmatprep.subr.bf16.mxu0 0
      %547 = vmatpush1.bf16.xpose.msra.mxu0 0
      %548 = vmatprep.subr.bf16.mxu0 0
      %549 = vmatpush1.bf16.xpose.msra.mxu0 0
      %550 = vmatprep.mubr.bf16.mxu0 0
      %551 = vmatmul.mubr.bf16.gmra.mrb[0].mxu0 %v513
      %v552 = vpop.f32.mrb[0].mxu0
      %v553 = vadd.f32 0.0, %v552
      %v554 = vpop.f32.mrb[0].mxu0
      %v555 = vpop.f32.mrb[0].mxu0
      %v556 = vpop.f32.mrb[0].mxu0
      %557 = vdwg.mxu0
      %v558 = vsel %vm511, %v553, -inf
      %559 = vmax.xlane.f32.xlu0 %v558
      %v560 = vpop.xlane.xlu0 %559
      %v561 = vsub.f32 %v553, %v560
      %v562 = vmul.f32 %v561, 1.442695
      %v563 = vpow.pop %v562
      %v564 = vsel %vm511, %v563, 0.0
      %565 = vadd.xlane.f32.xlu0 %v564
      %v566 = vpop.xlane.xlu0 %565
      %v567 = vrcp.pop %v566
      %v568 = vmul.f32 %v563, %v567
      %v569 = vpack.c.bf16 %v568, %v568
      %571 = vrot.lane.b32.xlu0 %v510, 96
      %v572 = vpop.permute.xlu0 %571
      %v574 = vsel %vm511, %v569, 0
      %vm576 = vcmask 1043456
      %v578 = vsel %vm576, %v572, 0
      %580 = vmatprep.subr.bf16.mxu0 0
      %581 = vmatpush1.bf16.msra.mxu0 %v578
      %582 = vmatprep.subr.bf16.mxu0 0
      %583 = vmatpush1.bf16.msra.mxu0 0
      %584 = vmatprep.subr.bf16.mxu0 0
      %585 = vmatpush1.bf16.msra.mxu0 0
      %586 = vmatprep.subr.bf16.mxu0 0
      %587 = vmatpush1.bf16.msra.mxu0 0
      %588 = vmatprep.subr.bf16.mxu0 0
      %589 = vmatpush1.bf16.msra.mxu0 0
      %590 = vmatprep.subr.bf16.mxu0 0
      %591 = vmatpush1.bf16.msra.mxu0 0
      %592 = vmatprep.subr.bf16.mxu0 0
      %593 = vmatpush1.bf16.msra.mxu0 0
      %594 = vmatprep.subr.bf16.mxu0 0
      %595 = vmatpush1.bf16.msra.mxu0 0
      %596 = vmatprep.subr.bf16.mxu0 0
      %597 = vmatpush1.bf16.msra.mxu0 0
      %598 = vmatprep.subr.bf16.mxu0 0
      %599 = vmatpush1.bf16.msra.mxu0 0
      %600 = vmatprep.subr.bf16.mxu0 0
      %601 = vmatpush1.bf16.msra.mxu0 0
      %602 = vmatprep.subr.bf16.mxu0 0
      %603 = vmatpush1.bf16.msra.mxu0 0
      %604 = vmatprep.subr.bf16.mxu0 0
      %605 = vmatpush1.bf16.msra.mxu0 0
      %606 = vmatprep.subr.bf16.mxu0 0
      %607 = vmatpush1.bf16.msra.mxu0 0
      %608 = vmatprep.subr.bf16.mxu0 0
      %609 = vmatpush1.bf16.msra.mxu0 0
      %610 = vmatprep.subr.bf16.mxu0 0
      %611 = vmatpush1.bf16.msra.mxu0 0
      %612 = vmatprep.mubr.bf16.mxu0 0
      %613 = vmatmul.mubr.bf16.gmra.mrb[0].mxu0 %v574
      %v614 = vpop.f32.mrb[0].mxu0
      %v615 = vadd.f32 0.0, %v614
      %v616 = vpop.f32.mrb[0].mxu0
      %v617 = vpop.f32.mrb[0].mxu0
      %v618 = vpop.f32.mrb[0].mxu0
      %619 = vdwg.mxu0
      %621 = vrot.lane.b32.xlu0 %v509, 120
      %v622 = vpop.permute.xlu0 %621
      %623 = vrot.lane.b32.xlu0 %v510, 120
      %v624 = vpop.permute.xlu0 %623
      %v626 = vsel %vm511, %v622, 0
      %v629 = vsel %vm511, %v624, 0
      %631 = vmatprep.subr.bf16.mxu0 0
      %632 = vmatpush1.bf16.xpose.msra.mxu0 %v629
      %633 = vmatprep.subr.bf16.mxu0 0
      %634 = vmatpush1.bf16.xpose.msra.mxu0 0
      %635 = vmatprep.subr.bf16.mxu0 0
      %636 = vmatpush1.bf16.xpose.msra.mxu0 0
      %637 = vmatprep.subr.bf16.mxu0 0
      %638 = vmatpush1.bf16.xpose.msra.mxu0 0
      %639 = vmatprep.subr.bf16.mxu0 0
      %640 = vmatpush1.bf16.xpose.msra.mxu0 0
      %641 = vmatprep.subr.bf16.mxu0 0
      %642 = vmatpush1.bf16.xpose.msra.mxu0 0
      %643 = vmatprep.subr.bf16.mxu0 0
      %644 = vmatpush1.bf16.xpose.msra.mxu0 0
      %645 = vmatprep.subr.bf16.mxu0 0
      %646 = vmatpush1.bf16.xpose.msra.mxu0 0
      %647 = vmatprep.subr.bf16.mxu0 0
      %648 = vmatpush1.bf16.xpose.msra.mxu0 0
      %649 = vmatprep.subr.bf16.mxu0 0
      %650 = vmatpush1.bf16.xpose.msra.mxu0 0
      %651 = vmatprep.subr.bf16.mxu0 0
      %652 = vmatpush1.bf16.xpose.msra.mxu0 0
      %653 = vmatprep.subr.bf16.mxu0 0
      %654 = vmatpush1.bf16.xpose.msra.mxu0 0
      %655 = vmatprep.subr.bf16.mxu0 0
      %656 = vmatpush1.bf16.xpose.msra.mxu0 0
      %657 = vmatprep.subr.bf16.mxu0 0
      %658 = vmatpush1.bf16.xpose.msra.mxu0 0
      %659 = vmatprep.subr.bf16.mxu0 0
      %660 = vmatpush1.bf16.xpose.msra.mxu0 0
      %661 = vmatprep.subr.bf16.mxu0 0
      %662 = vmatpush1.bf16.xpose.msra.mxu0 0
      %663 = vmatprep.mubr.bf16.mxu0 0
      %664 = vmatmul.mubr.bf16.gmra.mrb[0].mxu0 %v626
      %v665 = vpop.f32.mrb[0].mxu0
      %v666 = vadd.f32 0.0, %v665
      %v667 = vpop.f32.mrb[0].mxu0
      %v668 = vpop.f32.mrb[0].mxu0
      %v669 = vpop.f32.mrb[0].mxu0
      %670 = vdwg.mxu0
      %v671 = vsel %vm511, %v666, -inf
      %672 = vmax.xlane.f32.xlu0 %v671
      %v673 = vpop.xlane.xlu0 %672
      %v674 = vsub.f32 %v666, %v673
      %v675 = vmul.f32 %v674, 1.442695
      %v676 = vpow.pop %v675
      %v677 = vsel %vm511, %v676, 0.0
      %678 = vadd.xlane.f32.xlu0 %v677
      %v679 = vpop.xlane.xlu0 %678
      %v680 = vrcp.pop %v679
      %v681 = vmul.f32 %v676, %v680
      %v682 = vpack.c.bf16 %v681, %v681
      %683 = vrot.lane.b32.xlu0 %v510, 88
      %v684 = vpop.permute.xlu0 %683
      %v686 = vsel %vm511, %v682, 0
      %v689 = vsel %vm576, %v684, 0
      %691 = vmatprep.subr.bf16.mxu0 0
      %692 = vmatpush1.bf16.msra.mxu0 %v689
      %693 = vmatprep.subr.bf16.mxu0 0
      %694 = vmatpush1.bf16.msra.mxu0 0
      %695 = vmatprep.subr.bf16.mxu0 0
      %696 = vmatpush1.bf16.msra.mxu0 0
      %697 = vmatprep.subr.bf16.mxu0 0
      %698 = vmatpush1.bf16.msra.mxu0 0
      %699 = vmatprep.subr.bf16.mxu0 0
      %700 = vmatpush1.bf16.msra.mxu0 0
      %701 = vmatprep.subr.bf16.mxu0 0
      %702 = vmatpush1.bf16.msra.mxu0 0
      %703 = vmatprep.subr.bf16.mxu0 0
      %704 = vmatpush1.bf16.msra.mxu0 0
      %705 = vmatprep.subr.bf16.mxu0 0
      %706 = vmatpush1.bf16.msra.mxu0 0
      %707 = vmatprep.subr.bf16.mxu0 0
      %708 = vmatpush1.bf16.msra.mxu0 0
      %709 = vmatprep.subr.bf16.mxu0 0
      %710 = vmatpush1.bf16.msra.mxu0 0
      %711 = vmatprep.subr.bf16.mxu0 0
      %712 = vmatpush1.bf16.msra.mxu0 0
      %713 = vmatprep.subr.bf16.mxu0 0
      %714 = vmatpush1.bf16.msra.mxu0 0
      %715 = vmatprep.subr.bf16.mxu0 0
      %716 = vmatpush1.bf16.msra.mxu0 0
      %717 = vmatprep.subr.bf16.mxu0 0
      %718 = vmatpush1.bf16.msra.mxu0 0
      %719 = vmatprep.subr.bf16.mxu0 0
      %720 = vmatpush1.bf16.msra.mxu0 0
      %721 = vmatprep.subr.bf16.mxu0 0
      %722 = vmatpush1.bf16.msra.mxu0 0
      %723 = vmatprep.mubr.bf16.mxu0 0
      %724 = vmatmul.mubr.bf16.gmra.mrb[0].mxu0 %v686
      %v725 = vpop.f32.mrb[0].mxu0
      %v726 = vadd.f32 0.0, %v725
      %v727 = vpop.f32.mrb[0].mxu0
      %v728 = vpop.f32.mrb[0].mxu0
      %v729 = vpop.f32.mrb[0].mxu0
      %730 = vdwg.mxu0
      %731 = vrot.lane.b32.xlu0 %v509, 112
      %v732 = vpop.permute.xlu0 %731
      %733 = vrot.lane.b32.xlu0 %v510, 112
      %v734 = vpop.permute.xlu0 %733
      %v736 = vsel %vm511, %v732, 0
      %v739 = vsel %vm511, %v734, 0
      %741 = vmatprep.subr.bf16.mxu0 0
      %742 = vmatpush1.bf16.xpose.msra.mxu0 %v739
      %743 = vmatprep.subr.bf16.mxu0 0
      %744 = vmatpush1.bf16.xpose.msra.mxu0 0
      %745 = vmatprep.subr.bf16.mxu0 0
      %746 = vmatpush1.bf16.xpose.msra.mxu0 0
      %747 = vmatprep.subr.bf16.mxu0 0
      %748 = vmatpush1.bf16.xpose.msra.mxu0 0
      %749 = vmatprep.subr.bf16.mxu0 0
      %750 = vmatpush1.bf16.xpose.msra.mxu0 0
      %751 = vmatprep.subr.bf16.mxu0 0
      %752 = vmatpush1.bf16.xpose.msra.mxu0 0
      %753 = vmatprep.subr.bf16.mxu0 0
      %754 = vmatpush1.bf16.xpose.msra.mxu0 0
      %755 = vmatprep.subr.bf16.mxu0 0
      %756 = vmatpush1.bf16.xpose.msra.mxu0 0
      %757 = vmatprep.subr.bf16.mxu0 0
      %758 = vmatpush1.bf16.xpose.msra.mxu0 0
      %759 = vmatprep.subr.bf16.mxu0 0
      %760 = vmatpush1.bf16.xpose.msra.mxu0 0
      %761 = vmatprep.subr.bf16.mxu0 0
      %762 = vmatpush1.bf16.xpose.msra.mxu0 0
      %763 = vmatprep.subr.bf16.mxu0 0
      %764 = vmatpush1.bf16.xpose.msra.mxu0 0
      %765 = vmatprep.subr.bf16.mxu0 0
      %766 = vmatpush1.bf16.xpose.msra.mxu0 0
      %767 = vmatprep.subr.bf16.mxu0 0
      %768 = vmatpush1.bf16.xpose.msra.mxu0 0
      %769 = vmatprep.subr.bf16.mxu0 0
      %770 = vmatpush1.bf16.xpose.msra.mxu0 0
      %771 = vmatprep.subr.bf16.mxu0 0
      %772 = vmatpush1.bf16.xpose.msra.mxu0 0
      %773 = vmatprep.mubr.bf16.mxu0 0
      %774 = vmatmul.mubr.bf16.gmra.mrb[0].mxu0 %v736
      %v775 = vpop.f32.mrb[0].mxu0
      %v776 = vadd.f32 0.0, %v775
      %v777 = vpop.f32.mrb[0].mxu0
      %v778 = vpop.f32.mrb[0].mxu0
      %v779 = vpop.f32.mrb[0].mxu0
      %780 = vdwg.mxu0
      %v781 = vsel %vm511, %v776, -inf
      %782 = vmax.xlane.f32.xlu0 %v781
      %v783 = vpop.xlane.xlu0 %782
      %v784 = vsub.f32 %v776, %v783
      %v785 = vmul.f32 %v784, 1.442695
      %v786 = vpow.pop %v785
      %v787 = vsel %vm511, %v786, 0.0
      %788 = vadd.xlane.f32.xlu0 %v787
      %v789 = vpop.xlane.xlu0 %788
      %v790 = vrcp.pop %v789
      %v791 = vmul.f32 %v786, %v790
      %v792 = vpack.c.bf16 %v791, %v791
      %793 = vrot.lane.b32.xlu0 %v510, 80
      %v794 = vpop.permute.xlu0 %793
      %v796 = vsel %vm511, %v792, 0
      %v799 = vsel %vm576, %v794, 0
      %801 = vmatprep.subr.bf16.mxu0 0
      %802 = vmatpush1.bf16.msra.mxu0 %v799
      %803 = vmatprep.subr.bf16.mxu0 0
      %804 = vmatpush1.bf16.msra.mxu0 0
      %805 = vmatprep.subr.bf16.mxu0 0
      %806 = vmatpush1.bf16.msra.mxu0 0
      %807 = vmatprep.subr.bf16.mxu0 0
      %808 = vmatpush1.bf16.msra.mxu0 0
      %809 = vmatprep.subr.bf16.mxu0 0
      %810 = vmatpush1.bf16.msra.mxu0 0
      %811 = vmatprep.subr.bf16.mxu0 0
      %812 = vmatpush1.bf16.msra.mxu0 0
      %813 = vmatprep.subr.bf16.mxu0 0
      %814 = vmatpush1.bf16.msra.mxu0 0
      %815 = vmatprep.subr.bf16.mxu0 0
      %816 = vmatpush1.bf16.msra.mxu0 0
      %817 = vmatprep.subr.bf16.mxu0 0
      %818 = vmatpush1.bf16.msra.mxu0 0
      %819 = vmatprep.subr.bf16.mxu0 0
      %820 = vmatpush1.bf16.msra.mxu0 0
      %821 = vmatprep.subr.bf16.mxu0 0
      %822 = vmatpush1.bf16.msra.mxu0 0
      %823 = vmatprep.subr.bf16.mxu0 0
      %824 = vmatpush1.bf16.msra.mxu0 0
      %825 = vmatprep.subr.bf16.mxu0 0
      %826 = vmatpush1.bf16.msra.mxu0 0
      %827 = vmatprep.subr.bf16.mxu0 0
      %828 = vmatpush1.bf16.msra.mxu0 0
      %829 = vmatprep.subr.bf16.mxu0 0
      %830 = vmatpush1.bf16.msra.mxu0 0
      %831 = vmatprep.subr.bf16.mxu0 0
      %832 = vmatpush1.bf16.msra.mxu0 0
      %833 = vmatprep.mubr.bf16.mxu0 0
      %834 = vmatmul.mubr.bf16.gmra.mrb[0].mxu0 %v796
      %v835 = vpop.f32.mrb[0].mxu0
      %v836 = vadd.f32 0.0, %v835
      %v837 = vpop.f32.mrb[0].mxu0
      %v838 = vpop.f32.mrb[0].mxu0
      %v839 = vpop.f32.mrb[0].mxu0
      %840 = vdwg.mxu0
      %841 = vrot.lane.b32.xlu0 %v509, 104
      %v842 = vpop.permute.xlu0 %841
      %843 = vrot.lane.b32.xlu0 %v510, 104
      %v844 = vpop.permute.xlu0 %843
      %v846 = vsel %vm511, %v842, 0
      %v849 = vsel %vm511, %v844, 0
      %851 = vmatprep.subr.bf16.mxu0 0
      %852 = vmatpush1.bf16.xpose.msra.mxu0 %v849
      %853 = vmatprep.subr.bf16.mxu0 0
      %854 = vmatpush1.bf16.xpose.msra.mxu0 0
      %855 = vmatprep.subr.bf16.mxu0 0
      %856 = vmatpush1.bf16.xpose.msra.mxu0 0
      %857 = vmatprep.subr.bf16.mxu0 0
      %858 = vmatpush1.bf16.xpose.msra.mxu0 0
      %859 = vmatprep.subr.bf16.mxu0 0
      %860 = vmatpush1.bf16.xpose.msra.mxu0 0
      %861 = vmatprep.subr.bf16.mxu0 0
      %862 = vmatpush1.bf16.xpose.msra.mxu0 0
      %863 = vmatprep.subr.bf16.mxu0 0
      %864 = vmatpush1.bf16.xpose.msra.mxu0 0
      %865 = vmatprep.subr.bf16.mxu0 0
      %866 = vmatpush1.bf16.xpose.msra.mxu0 0
      %867 = vmatprep.subr.bf16.mxu0 0
      %868 = vmatpush1.bf16.xpose.msra.mxu0 0
      %869 = vmatprep.subr.bf16.mxu0 0
      %870 = vmatpush1.bf16.xpose.msra.mxu0 0
      %871 = vmatprep.subr.bf16.mxu0 0
      %872 = vmatpush1.bf16.xpose.msra.mxu0 0
      %873 = vmatprep.subr.bf16.mxu0 0
      %874 = vmatpush1.bf16.xpose.msra.mxu0 0
      %875 = vmatprep.subr.bf16.mxu0 0
      %876 = vmatpush1.bf16.xpose.msra.mxu0 0
      %877 = vmatprep.subr.bf16.mxu0 0
      %878 = vmatpush1.bf16.xpose.msra.mxu0 0
      %879 = vmatprep.subr.bf16.mxu0 0
      %880 = vmatpush1.bf16.xpose.msra.mxu0 0
      %881 = vmatprep.subr.bf16.mxu0 0
      %882 = vmatpush1.bf16.xpose.msra.mxu0 0
      %883 = vmatprep.mubr.bf16.mxu0 0
      %884 = vmatmul.mubr.bf16.gmra.mrb[0].mxu0 %v846
      %v885 = vpop.f32.mrb[0].mxu0
      %v886 = vadd.f32 0.0, %v885
      %v887 = vpop.f32.mrb[0].mxu0
      %v888 = vpop.f32.mrb[0].mxu0
      %v889 = vpop.f32.mrb[0].mxu0
      %890 = vdwg.mxu0
      %v891 = vsel %vm511, %v886, -inf
      %892 = vmax.xlane.f32.xlu0 %v891
      %v893 = vpop.xlane.xlu0 %892
      %v894 = vsub.f32 %v886, %v893
      %v895 = vmul.f32 %v894, 1.442695
      %v896 = vpow.pop %v895
      %v897 = vsel %vm511, %v896, 0.0
      %898 = vadd.xlane.f32.xlu0 %v897
      %v899 = vpop.xlane.xlu0 %898
      %v900 = vrcp.pop %v899
      %v901 = vmul.f32 %v896, %v900
      %v902 = vpack.c.bf16 %v901, %v901
      %903 = vrot.lane.b32.xlu0 %v510, 72
      %v904 = vpop.permute.xlu0 %903
      %v906 = vsel %vm511, %v902, 0
      %v909 = vsel %vm576, %v904, 0
      %911 = vmatprep.subr.bf16.mxu0 0
      %912 = vmatpush1.bf16.msra.mxu0 %v909
      %913 = vmatprep.subr.bf16.mxu0 0
      %914 = vmatpush1.bf16.msra.mxu0 0
      %915 = vmatprep.subr.bf16.mxu0 0
      %916 = vmatpush1.bf16.msra.mxu0 0
      %917 = vmatprep.subr.bf16.mxu0 0
      %918 = vmatpush1.bf16.msra.mxu0 0
      %919 = vmatprep.subr.bf16.mxu0 0
      %920 = vmatpush1.bf16.msra.mxu0 0
      %921 = vmatprep.subr.bf16.mxu0 0
      %922 = vmatpush1.bf16.msra.mxu0 0
      %923 = vmatprep.subr.bf16.mxu0 0
      %924 = vmatpush1.bf16.msra.mxu0 0
      %925 = vmatprep.subr.bf16.mxu0 0
      %926 = vmatpush1.bf16.msra.mxu0 0
      %927 = vmatprep.subr.bf16.mxu0 0
      %928 = vmatpush1.bf16.msra.mxu0 0
      %929 = vmatprep.subr.bf16.mxu0 0
      %930 = vmatpush1.bf16.msra.mxu0 0
      %931 = vmatprep.subr.bf16.mxu0 0
      %932 = vmatpush1.bf16.msra.mxu0 0
      %933 = vmatprep.subr.bf16.mxu0 0
      %934 = vmatpush1.bf16.msra.mxu0 0
      %935 = vmatprep.subr.bf16.mxu0 0
      %936 = vmatpush1.bf16.msra.mxu0 0
      %937 = vmatprep.subr.bf16.mxu0 0
      %938 = vmatpush1.bf16.msra.mxu0 0
      %939 = vmatprep.subr.bf16.mxu0 0
      %940 = vmatpush1.bf16.msra.mxu0 0
      %941 = vmatprep.subr.bf16.mxu0 0
      %942 = vmatpush1.bf16.msra.mxu0 0
      %943 = vmatprep.mubr.bf16.mxu0 0
      %944 = vmatmul.mubr.bf16.gmra.mrb[0].mxu0 %v906
      %v945 = vpop.f32.mrb[0].mxu0
      %v946 = vadd.f32 0.0, %v945
      %v947 = vpop.f32.mrb[0].mxu0
      %v948 = vpop.f32.mrb[0].mxu0
      %v949 = vpop.f32.mrb[0].mxu0
      %950 = vdwg.mxu0
      %952 = vrot.lane.b32.xlu0 %v726, 8
      %v953 = vpop.permute.xlu0 %952
      %956 = vrot.lane.b32.xlu0 %v836, 16
      %v957 = vpop.permute.xlu0 %956
      %960 = vrot.lane.b32.xlu0 %v946, 24
      %v961 = vpop.permute.xlu0 %960
      %v963 = vsel %vm511, %v615, %v953
      %vm964 = vcmask 130048
      %v965 = vsel %vm964, %v963, %v957
      %vm966 = vcmask 195584
      %v967 = vsel %vm966, %v965, %v961
      %v968 = vpack.c.bf16 %v967, %v967
      %v969 = vld [vmem:[%s6] sm:$0xf]
      %v970 = vld [vmem:[%s6 + $0x4] sm:$0xf]
      %v971 = vld [vmem:[%s6 + $0x8] sm:$0xf]
      %v972 = vld [vmem:[%s6 + $0xc] sm:$0xf]
      %v973 = vld [vmem:[%s7] sm:$0x1]
      %v975 = vlaneseq
      %v976 = vshrl.u32 %v975, 7
      %v977 = vsub.s32 0, %v976
      %v978 = vrot.slane %v973, %v977
      %v984 = vunpack.c.l.b16 %v969
      %v985 = vunpack.c.l.b16 %v970
      %v986 = vunpack.c.l.b16 %v971
      %v987 = vunpack.c.l.b16 %v972
      %v988 = vpack.c.b16 %v985, %v984
      %v989 = vpack.c.b16 %v987, %v986
      %v993 = vsel %vm398, %v968, 0
      %995 = vmatprep.subr.bf16.mxu0 0
      %996 = vmatpush1.bf16.msra.mxu0 %v988
      %997 = vmatprep.subr.bf16.mxu0 0
      %998 = vmatpush1.bf16.msra.mxu0 %v989
      %999 = vmatprep.subr.bf16.mxu0 0
      %1000 = vmatpush1.bf16.msra.mxu0 0
      %1001 = vmatprep.subr.bf16.mxu0 0
      %1002 = vmatpush1.bf16.msra.mxu0 0
      %1003 = vmatprep.subr.bf16.mxu0 0
      %1004 = vmatpush1.bf16.msra.mxu0 0
      %1005 = vmatprep.subr.bf16.mxu0 0
      %1006 = vmatpush1.bf16.msra.mxu0 0
      %1007 = vmatprep.subr.bf16.mxu0 0
      %1008 = vmatpush1.bf16.msra.mxu0 0
      %1009 = vmatprep.subr.bf16.mxu0 0
      %1010 = vmatpush1.bf16.msra.mxu0 0
      %1011 = vmatprep.subr.bf16.mxu0 0
      %1012 = vmatpush1.bf16.msra.mxu0 0
      %1013 = vmatprep.subr.bf16.mxu0 0
      %1014 = vmatpush1.bf16.msra.mxu0 0
      %1015 = vmatprep.subr.bf16.mxu0 0
      %1016 = vmatpush1.bf16.msra.mxu0 0
      %1017 = vmatprep.subr.bf16.mxu0 0
      %1018 = vmatpush1.bf16.msra.mxu0 0
      %1019 = vmatprep.subr.bf16.mxu0 0
      %1020 = vmatpush1.bf16.msra.mxu0 0
      %1021 = vmatprep.subr.bf16.mxu0 0
      %1022 = vmatpush1.bf16.msra.mxu0 0
      %1023 = vmatprep.subr.bf16.mxu0 0
      %1024 = vmatpush1.bf16.msra.mxu0 0
      %1025 = vmatprep.subr.bf16.mxu0 0
      %1026 = vmatpush1.bf16.msra.mxu0 0
      %1027 = vmatprep.mubr.bf16.mxu0 0
      %1028 = vmatmul.mubr.bf16.gmra.mrb[0].mxu0 %v993
      %v1029 = vpop.f32.mrb[0].mxu0
      %v1030 = vadd.f32 %v978, %v1029
      %v1031 = vpop.f32.mrb[0].mxu0
      %v1032 = vpop.f32.mrb[0].mxu0
      %v1033 = vpop.f32.mrb[0].mxu0
      %1034 = vdwg.mxu0
      %v1035 = vunpack.c.l.bf16 %v373
      %v1036 = vadd.f32 %v1030, %v1035
      %v1037 = vld [vmem:[%s8] sm:$0x1]
      %v1038 = vld [vmem:[%s9] sm:$0x1]
      %v1039 = vsel %vm398, %v1036, 0.0
      %1040 = vadd.xlane.f32.xlu0 %v1039
      %v1041 = vpop.xlane.xlu0 %1040
      %v1042 = vrcp.pop 32.0
      %v1043 = vmul.f32 %v1041, %v1042
      %v1044 = vmul.f32 %v1036, %v1036
      %v1045 = vsel %vm398, %v1044, 0.0
      %1046 = vadd.xlane.f32.xlu0 %v1045
      %v1047 = vpop.xlane.xlu0 %1046
      %v1048 = vmul.f32 %v1047, %v1042
      %v1049 = vmul.f32 %v1043, %v1043
      %v1050 = vsub.f32 %v1048, %v1049
      %v1051 = vsub.f32 %v1036, %v1043
      %v1052 = vadd.f32 %v1050, 1e-05
      %v1053 = vrsqrt.pop %v1052
      %v1054 = vmul.f32 %v1051, %v1053
      %v1056 = vlaneseq
      %v1057 = vshrl.u32 %v1056, 7
      %v1058 = vsub.s32 0, %v1057
      %v1059 = vrot.slane %v1037, %v1058
      %v1061 = vmul.f32 %v1054, %v1059
      %v1063 = vlaneseq
      %v1064 = vshrl.u32 %v1063, 7
      %v1065 = vsub.s32 0, %v1064
      %v1066 = vrot.slane %v1038, %v1065
      %v1068 = vadd.f32 %v1061, %v1066
      %v1069 = vpack.c.bf16 %v1068, %v1068
      %vm1070 = vcmask 257024
      %1071 = vst.msk [vmem:[%s371] sm:$0xf] %vm1070, %v1069
      %p1072 = scmp.lt.s32.totalorder %s21, 1
      %s1073 = scalar_select %p1072, %s21, 1
      %s1074 = smul.addr %s1073, 4
      %s1075 = scalar_lea.vmem %s10, %s1074
      // Predicated region
      $region61: #{decoder_layer.4} parent=59 // pred_check
        %p1076 = pneg %p259
      $region62: #{decoder_layer.4} parent=59 // pred_check_branch
        %1078 = sbr.rel (%p1076) target = $region64
      $region63: #{decoder_layer.4} parent=59 // pred_region
        _
      $region64: #{decoder_layer.4} parent=59 // pred_fallthru
        _
    $region60: #{decoder_layer.4} parent=5 // pred_fallthru
      _
    %p1079 = scmp.le.s32.totalorder 2, %s16
    // Predicated region
    $region65: #{decoder_layer.4} parent=5 // pred_check
      %p1080 = pneg %p1079
    $region66: #{decoder_layer.4} parent=5 // pred_check_branch
      %1082 = sbr.rel (%p1080) target = $region68
    $region67: #{decoder_layer.4} parent=5 // pred_region
      %s1083 = ssub.s32 %s16, 2
      // Predicated region
      $region69: #{decoder_layer.4} parent=67 // pred_check
        %p1084 = pneg %p265
      $region70: #{decoder_layer.4} parent=67 // pred_check_branch
        %1086 = sbr.rel (%p1084) target = $region72
      $region71: #{decoder_layer.4} parent=67 // pred_region
        %p1087 = scmp.lt.s32.totalorder %s22, 1
        %s1088 = scalar_select %p1087, %s22, 1
        %s1089 = smul.addr %s1088, 4
        %s1090 = scalar_lea.vmem %s10, %s1089
      $region72: #{decoder_layer.4} parent=67 // pred_fallthru
        _
    $region68: #{decoder_layer.4} parent=5 // pred_fallthru
      _
  $region6: #{decoder_layer.4} parent=0 // loop_footer
    %s20 = sadd.s32 1, %s16
  $region7: #{decoder_layer.4} parent=0 // loop_footer_branch
    %15 = sbr.rel target = $region3
  $region8: #{decoder_layer.4} parent=0 // loop_exit
    _

</llo_original>
